<compile_context>
chip_gen: v5e
topology: v5e:2x2
jax: 0.10.0
libtpu: 0.0.40
codegen_flags: <defaults>
</compile_context>

<pallas_src>
import functools

import jax
import jax.numpy as jnp
from jax.experimental import pallas as pl
from jax.experimental.pallas import tpu as pltpu


# ----------------------------------------------------------------------------
# Fused kernel: 3 x (conv3x3 [BN-scale folded] + shift + ReLU)
#               -> 1x1 conv + bias + ReLU -> 1x1 conv + bias
# All matmuls are (Cout, K) @ (K, LANE) so the fused-batch spatial axis sits on
# the 128-wide lane dimension.
# ----------------------------------------------------------------------------
def _initial_stage_kernel(H, W, x_ref, m_ref, tw_ref, tsh_ref,
                          w4_ref, b4_ref, w5_ref, b5_ref, o_ref, patches_ref):
    C = x_ref.shape[1]
    LANE = x_ref.shape[2]            # (#images fused into this grid step) * H * W
    act = x_ref[0]                   # (C, LANE) f32 activation

    # Hoisted once and reused by all 3 trunk layers: the (1, LANE) boundary-mask
    # rows of the taps.  (Full (C, LANE) mask broadcasts are deliberately NOT
    # materialized -- that would exceed the 64-vreg file.)
    offsets = [(dy, dx) for dy in (-1, 0, 1) for dx in (-1, 0, 1)]
    mask_rows = [m_ref[k:k + 1, :] for k in range(9)]

    def build_patches(a):
        # Write each of the 9 shifted taps straight into the shared bf16 VMEM
        # scratch -> bounded live vregs, no concat copy, halved store volume.
        for k, (dy, dx) in enumerate(offsets):
            s = dy * W + dx                                   # flat-index tap shift
            t = a if s == 0 else pltpu.roll(a, (-s) % LANE, 1)
            if not (dy == 0 and dx == 0):
                t = t * mask_rows[k]                          # zero out-of-bounds taps
            patches_ref[k * C:(k + 1) * C, :] = t.astype(patches_ref.dtype)

    # trunk: three 3x3 convs, all C -> C (BN scale pre-folded into bf16 weights)
    for i in range(3):
        build_patches(act)
        y = jnp.dot(tw_ref[i], patches_ref[...],
                    preferred_element_type=jnp.float32)
        act = jnp.maximum(y + tsh_ref[i], 0.0)                # folded-BN shift + ReLU

    # heatmaps head: 1x1 conv (C -> 512) + bias + ReLU, then 1x1 conv (512 -> Hm) + bias
    h = jnp.dot(w4_ref[...], act.astype(w4_ref.dtype),
                preferred_element_type=jnp.float32) + b4_ref[...]
    h = jnp.maximum(h, 0.0)
    out = jnp.dot(w5_ref[...], h.astype(w5_ref.dtype),
                  preferred_element_type=jnp.float32) + b5_ref[...]
    o_ref[0] = out.astype(o_ref.dtype)


# ----------------------------------------------------------------------------
# Batch-fusion policy: single-TC chips fuse the whole batch into the lane axis
# (grid of 1); 2-TC chips keep >= 2 "parallel" grid steps.
# ----------------------------------------------------------------------------
def _default_batch_per_step(n):
    try:
        kind = jax.devices()[0].device_kind.lower()
    except Exception:
        kind = ""
    two_tc = any(t in kind for t in ("v7", "7x", "v4", "v5p"))
    if two_tc:
        return n // 2 if (n >= 2 and n % 2 == 0) else 1
    return max(n, 1)


# ----------------------------------------------------------------------------
# Wrapper: layout prep (weight folding / reshapes, all outside the kernel) +
# a single pallas_call over groups of fused batch elements.
# ----------------------------------------------------------------------------
def initial_stage_forward(x_nchw, params, batch_per_step=None):
    N, C, H, W = x_nchw.shape
    HW = H * W
    Hm = params["hm_w2"].shape[0]

    B = _default_batch_per_step(N) if batch_per_step is None else batch_per_step
    assert N % B == 0, (N, B)
    G = N // B
    LANE = B * HW
    # NOTE: here LANE = 2*256 or 256, both multiples of 128 (lane-dense stores).
    # If H*W were not a multiple of 128, pad the lane axis (and the mask) up to
    # the next multiple of 128 here and slice the pad off after the call.

    # (N,C,H,W) -> (G, C, B*HW): the B images of a group are laid out
    # contiguously along the lane axis of every channel row.
    x = (x_nchw.reshape(G, B, C, HW)
               .transpose(0, 2, 1, 3)
               .reshape(G, C, LANE))

    # Trunk weights: fold the eval-BN scale into the conv weight (exact), then
    # OIHW -> (Cout, 9*Cin) with row order (dy, dx, ci) matching the in-kernel
    # tap order, prepacked as bf16 MXU operands.
    tw = jnp.stack([
        (w * s[:, None, None, None]).transpose(0, 2, 3, 1).reshape(C, 9 * C)
        for w, s in zip(params["trunk_w"], params["trunk_scale"])
    ]).astype(jnp.bfloat16)                                    # (3, C, 9C)
    tsh = params["trunk_shift"].reshape(3, C, 1)               # f32 folded shift
    w4 = params["hm_w1"].astype(jnp.bfloat16)                  # (512, C)
    b4 = params["hm_b1"].reshape(-1, 1)                        # (512, 1) f32
    w5 = params["hm_w2"].astype(jnp.bfloat16)                  # (Hm, 512)
    b5 = params["hm_b2"].reshape(-1, 1)                        # (Hm, 1) f32

    # Boundary mask for the 9 taps of a 3x3 / pad=1 conv, tiled over the B
    # images fused into the lane axis (this also zeroes roll wrap between
    # neighbouring images / around the full lane).
    yy, xx = jnp.meshgrid(jnp.arange(H), jnp.arange(W), indexing="ij")
    rows = []
    for dy in (-1, 0, 1):
        for dx in (-1, 0, 1):
            valid = ((yy + dy >= 0) & (yy + dy < H) &
                     (xx + dx >= 0) & (xx + dx < W))
            rows.append(valid.reshape(HW))
    mask = jnp.tile(jnp.stack(rows).astype(jnp.float32), (1, B))   # (9, LANE)

    kernel = functools.partial(_initial_stage_kernel, H, W)
    out = pl.pallas_call(
        kernel,
        out_shape=jax.ShapeDtypeStruct((G, Hm, LANE), jnp.float32),
        grid=(G,),
        in_specs=[
            pl.BlockSpec((1, C, LANE), lambda g: (g, 0, 0)),       # activations
            pl.BlockSpec((9, LANE), lambda g: (0, 0)),             # tap masks (resident)
            pl.BlockSpec((3, C, 9 * C), lambda g: (0, 0, 0)),      # trunk weights (bf16)
            pl.BlockSpec((3, C, 1), lambda g: (0, 0, 0)),          # folded BN shift
            pl.BlockSpec(w4.shape, lambda g: (0, 0)),              # head conv1 weight
            pl.BlockSpec(b4.shape, lambda g: (0, 0)),              # head conv1 bias
            pl.BlockSpec(w5.shape, lambda g: (0, 0)),              # head conv2 weight
            pl.BlockSpec(b5.shape, lambda g: (0, 0)),              # head conv2 bias
        ],
        out_specs=pl.BlockSpec((1, Hm, LANE), lambda g: (g, 0, 0)),
        scratch_shapes=[pltpu.VMEM((9 * C, LANE), jnp.bfloat16)],  # im2col patches (reused)
        compiler_params=pltpu.CompilerParams(
            dimension_semantics=("parallel",)),                    # v7x: 2 TCs share the grid
    )(x, mask, tw, tsh, w4, b4, w5, b5)

    out = (out.reshape(G, Hm, B, HW)
              .transpose(0, 2, 1, 3)
              .reshape(N, Hm, H, W))
    # Module returns a list with one tensor.
    return [out]


# ----------------------------------------------------------------------------
# Deterministic synthetic parameters; eval-mode BN folded into (scale, shift).
# ----------------------------------------------------------------------------
def init_params(key, num_channels, num_heatmaps):
    C = num_channels
    eps = 1e-5
    ks = jax.random.split(key, 5)

    def folded_bn_conv3x3(k, cin, cout):
        kw, kb, kg, kbt, km, kv = jax.random.split(k, 6)
        w = jax.random.normal(kw, (cout, cin, 3, 3), jnp.float32) / jnp.sqrt(9.0 * cin)
        b = 0.1 * jax.random.normal(kb, (cout,), jnp.float32)
        gamma = 1.0 + 0.1 * jax.random.normal(kg, (cout,), jnp.float32)
        beta = 0.1 * jax.random.normal(kbt, (cout,), jnp.float32)
        mean = 0.1 * jax.random.normal(km, (cout,), jnp.float32)
        var = 0.5 + 0.5 * jnp.abs(jax.random.normal(kv, (cout,), jnp.float32))
        scale = gamma / jnp.sqrt(var + eps)
        shift = beta + (b - mean) * scale
        return w, scale, shift

    trunk_w, trunk_scale, trunk_shift = [], [], []
    for i in range(3):
        w, s, sh = folded_bn_conv3x3(ks[i], C, C)
        trunk_w.append(w)
        trunk_scale.append(s)
        trunk_shift.append(sh)

    k4w, k4b = jax.random.split(ks[3])
    k5w, k5b = jax.random.split(ks[4])
    hm_w1 = jax.random.normal(k4w, (512, C), jnp.float32) / jnp.sqrt(float(C))
    hm_b1 = 0.1 * jax.random.normal(k4b, (512,), jnp.float32)
    hm_w2 = jax.random.normal(k5w, (num_heatmaps, 512), jnp.float32) / jnp.sqrt(512.0)
    hm_b2 = 0.1 * jax.random.normal(k5b, (num_heatmaps,), jnp.float32)

    return dict(trunk_w=trunk_w,
                trunk_scale=jnp.stack(trunk_scale),
                trunk_shift=jnp.stack(trunk_shift),
                hm_w1=hm_w1, hm_b1=hm_b1, hm_w2=hm_w2, hm_b2=hm_b2)


# Pure-JAX f32 reference (XLA conv) — module semantics.
def ref_forward(x, params):
    t = x
    for i in range(3):
        y = jax.lax.conv_general_dilated(
            t, params["trunk_w"][i], (1, 1), ((1, 1), (1, 1)),
            dimension_numbers=("NCHW", "OIHW", "NCHW"))
        t = jnp.maximum(y * params["trunk_scale"][i][None, :, None, None]
                        + params["trunk_shift"][i][None, :, None, None], 0.0)
    h = (jnp.einsum("oc,nchw->nohw", params["hm_w1"], t)
         + params["hm_b1"][None, :, None, None])
    h = jnp.maximum(h, 0.0)
    out = (jnp.einsum("oc,nchw->nohw", params["hm_w2"], h)
           + params["hm_b2"][None, :, None, None])
    return [out]


# Reference that quantizes MXU operands exactly like the kernel (bf16 inputs,
# f32 accumulation, scale folded before the cast) — structural cross-check.
def ref_forward_bf16(x, params):
    t = x
    for i in range(3):
        wq = (params["trunk_w"][i]
              * params["trunk_scale"][i][:, None, None, None]).astype(jnp.bfloat16)
        y = jax.lax.conv_general_dilated(
            t.astype(jnp.bfloat16), wq, (1, 1), ((1, 1), (1, 1)),
            dimension_numbers=("NCHW", "OIHW", "NCHW"),
            preferred_element_type=jnp.float32)
        t = jnp.maximum(y + params["trunk_shift"][i][None, :, None, None], 0.0)
    h = (jnp.einsum("oc,nchw->nohw", params["hm_w1"].astype(jnp.bfloat16),
                    t.astype(jnp.bfloat16), preferred_element_type=jnp.float32)
         + params["hm_b1"][None, :, None, None])
    h = jnp.maximum(h, 0.0)
    out = (jnp.einsum("oc,nchw->nohw", params["hm_w2"].astype(jnp.bfloat16),
                      h.astype(jnp.bfloat16), preferred_element_type=jnp.float32)
           + params["hm_b2"][None, :, None, None])
    return [out]


if __name__ == "__main__":
    key = jax.random.PRNGKey(0)
    # Small shapes consistent with the module: NCHW input, trunk width 32,
    # 16x16 feature map, 8 heatmaps (the 512-wide head is hardcoded in the spec).
    N, C, H, W = 2, 32, 16, 16
    NUM_HEATMAPS = 8

    kx, kp = jax.random.split(key)
    x = jax.random.normal(kx, (N, C, H, W), jnp.float32)   # PyTorch-style NCHW input
    params = init_params(kp, C, NUM_HEATMAPS)

    fwd = jax.jit(lambda xx: initial_stage_forward(xx, params))
    out = fwd(x)
    out = [jax.block_until_ready(o) for o in out]
    assert out[0].shape == (N, NUM_HEATMAPS, H, W), out[0].shape

    # Structural check: vs a reference with identical bf16 operand quantization
    # (only accumulation order differs -> should match very tightly).
    ref_q = ref_forward_bf16(x, params)
    err_q = float(jnp.max(jnp.abs(out[0] - ref_q[0])))
    assert err_q < 2e-3, f"mismatch vs bf16-operand reference: {err_q}"

    # Semantic-fidelity check: vs the full-f32 reference; tolerance reflects
    # bf16 MXU inputs through 5 stacked layers on O(1) activations.
    ref = ref_forward(x, params)
    err = float(jnp.max(jnp.abs(out[0] - ref[0])))
    assert err < 1e-1, f"mismatch vs f32 reference: {err}"

    print("KERNEL_OK")
</pallas_src>

<mosaic_0001>
module attributes {stable_mosaic.version = 11 : i64} {
  func.func @_initial_stage_kernel(%arg0: i32, %arg1: memref<1x32x512xf32, #tpu.memory_space<vmem>>, %arg2: memref<9x512xf32, #tpu.memory_space<vmem>>, %arg3: memref<3x32x288xbf16, #tpu.memory_space<vmem>>, %arg4: memref<3x32x1xf32, #tpu.memory_space<vmem>>, %arg5: memref<512x32xbf16, #tpu.memory_space<vmem>>, %arg6: memref<512x1xf32, #tpu.memory_space<vmem>>, %arg7: memref<8x512xbf16, #tpu.memory_space<vmem>>, %arg8: memref<8x1xf32, #tpu.memory_space<vmem>>, %arg9: memref<1x8x512xf32, #tpu.memory_space<vmem>>, %arg10: memref<288x512xbf16, #tpu.memory_space<vmem>>) attributes {dimension_semantics = [#tpu.dimension_semantics<parallel>], iteration_bounds = array<i64: 1>, scalar_prefetch = 0 : i64, scratch_operands = 1 : i64, tpu.core_type = #tpu.core_type<tc>, window_params = [{transform_indices = @transform_0, window_bounds = array<i64: 1, 32, 512>}, {pipeline_mode = #tpu.pipeline_mode<synchronous>, transform_indices = @transform_1, window_bounds = array<i64: 9, 512>}, {pipeline_mode = #tpu.pipeline_mode<synchronous>, transform_indices = @transform_2, window_bounds = array<i64: 3, 32, 288>}, {pipeline_mode = #tpu.pipeline_mode<synchronous>, transform_indices = @transform_3, window_bounds = array<i64: 3, 32, 1>}, {pipeline_mode = #tpu.pipeline_mode<synchronous>, transform_indices = @transform_4, window_bounds = array<i64: 512, 32>}, {pipeline_mode = #tpu.pipeline_mode<synchronous>, transform_indices = @transform_5, window_bounds = array<i64: 512, 1>}, {pipeline_mode = #tpu.pipeline_mode<synchronous>, transform_indices = @transform_6, window_bounds = array<i64: 8, 512>}, {pipeline_mode = #tpu.pipeline_mode<synchronous>, transform_indices = @transform_7, window_bounds = array<i64: 8, 1>}, {transform_indices = @transform_8, window_bounds = array<i64: 1, 8, 512>}]} {
    %c0 = arith.constant 0 : index
    %c0_0 = arith.constant 0 : index
    %c0_1 = arith.constant 0 : index
    %0 = vector.load %arg1[%c0, %c0_0, %c0_1] : memref<1x32x512xf32, #tpu.memory_space<vmem>>, vector<1x32x512xf32>
    %1 = vector.shape_cast %0 : vector<1x32x512xf32> to vector<32x512xf32>
    %c0_2 = arith.constant 0 : index
    %c0_3 = arith.constant 0 : index
    %2 = vector.load %arg2[%c0_2, %c0_3] : memref<9x512xf32, #tpu.memory_space<vmem>>, vector<1x512xf32>
    %c1 = arith.constant 1 : index
    %c0_4 = arith.constant 0 : index
    %3 = vector.load %arg2[%c1, %c0_4] : memref<9x512xf32, #tpu.memory_space<vmem>>, vector<1x512xf32>
    %c2 = arith.constant 2 : index
    %c0_5 = arith.constant 0 : index
    %4 = vector.load %arg2[%c2, %c0_5] : memref<9x512xf32, #tpu.memory_space<vmem>>, vector<1x512xf32>
    %c3 = arith.constant 3 : index
    %c0_6 = arith.constant 0 : index
    %5 = vector.load %arg2[%c3, %c0_6] : memref<9x512xf32, #tpu.memory_space<vmem>>, vector<1x512xf32>
    %c5 = arith.constant 5 : index
    %c0_7 = arith.constant 0 : index
    %6 = vector.load %arg2[%c5, %c0_7] : memref<9x512xf32, #tpu.memory_space<vmem>>, vector<1x512xf32>
    %c6 = arith.constant 6 : index
    %c0_8 = arith.constant 0 : index
    %7 = vector.load %arg2[%c6, %c0_8] : memref<9x512xf32, #tpu.memory_space<vmem>>, vector<1x512xf32>
    %c7 = arith.constant 7 : index
    %c0_9 = arith.constant 0 : index
    %8 = vector.load %arg2[%c7, %c0_9] : memref<9x512xf32, #tpu.memory_space<vmem>>, vector<1x512xf32>
    %c8 = arith.constant 8 : index
    %c0_10 = arith.constant 0 : index
    %9 = vector.load %arg2[%c8, %c0_10] : memref<9x512xf32, #tpu.memory_space<vmem>>, vector<1x512xf32>
    %c17_i32 = arith.constant 17 : i32
    %10 = tpu.dynamic_rotate %1 by %c17_i32 dim 1 : vector<32x512xf32>, i32 -> vector<32x512xf32>
    %11 = vector.broadcast %2 : vector<1x512xf32> to vector<32x512xf32>
    %12 = arith.mulf %10, %11 : vector<32x512xf32>
    %13 = arith.truncf %12 : vector<32x512xf32> to vector<32x512xbf16>
    %c0_11 = arith.constant 0 : index
    %c0_12 = arith.constant 0 : index
    %14 = vector.load %arg10[%c0_11, %c0_12] : memref<288x512xbf16, #tpu.memory_space<vmem>>, vector<32x512xbf16>
    tpu.vector_store %arg10[%c0_11, %c0_12], %13 {strides = array<i32>} : memref<288x512xbf16, #tpu.memory_space<vmem>>, vector<32x512xbf16>,
    %c16_i32 = arith.constant 16 : i32
    %15 = tpu.dynamic_rotate %1 by %c16_i32 dim 1 : vector<32x512xf32>, i32 -> vector<32x512xf32>
    %16 = vector.broadcast %3 : vector<1x512xf32> to vector<32x512xf32>
    %17 = arith.mulf %15, %16 : vector<32x512xf32>
    %18 = arith.truncf %17 : vector<32x512xf32> to vector<32x512xbf16>
    %c32 = arith.constant 32 : index
    %c0_13 = arith.constant 0 : index
    %19 = vector.load %arg10[%c32, %c0_13] : memref<288x512xbf16, #tpu.memory_space<vmem>>, vector<32x512xbf16>
    tpu.vector_store %arg10[%c32, %c0_13], %18 {strides = array<i32>} : memref<288x512xbf16, #tpu.memory_space<vmem>>, vector<32x512xbf16>,
    %c15_i32 = arith.constant 15 : i32
    %20 = tpu.dynamic_rotate %1 by %c15_i32 dim 1 : vector<32x512xf32>, i32 -> vector<32x512xf32>
    %21 = vector.broadcast %4 : vector<1x512xf32> to vector<32x512xf32>
    %22 = arith.mulf %20, %21 : vector<32x512xf32>
    %23 = arith.truncf %22 : vector<32x512xf32> to vector<32x512xbf16>
    %c64 = arith.constant 64 : index
    %c0_14 = arith.constant 0 : index
    %24 = vector.load %arg10[%c64, %c0_14] : memref<288x512xbf16, #tpu.memory_space<vmem>>, vector<32x512xbf16>
    tpu.vector_store %arg10[%c64, %c0_14], %23 {strides = array<i32>} : memref<288x512xbf16, #tpu.memory_space<vmem>>, vector<32x512xbf16>,
    %c1_i32 = arith.constant 1 : i32
    %25 = tpu.dynamic_rotate %1 by %c1_i32 dim 1 : vector<32x512xf32>, i32 -> vector<32x512xf32>
    %26 = vector.broadcast %5 : vector<1x512xf32> to vector<32x512xf32>
    %27 = arith.mulf %25, %26 : vector<32x512xf32>
    %28 = arith.truncf %27 : vector<32x512xf32> to vector<32x512xbf16>
    %c96 = arith.constant 96 : index
    %c0_15 = arith.constant 0 : index
    %29 = vector.load %arg10[%c96, %c0_15] : memref<288x512xbf16, #tpu.memory_space<vmem>>, vector<32x512xbf16>
    tpu.vector_store %arg10[%c96, %c0_15], %28 {strides = array<i32>} : memref<288x512xbf16, #tpu.memory_space<vmem>>, vector<32x512xbf16>,
    %30 = arith.truncf %1 : vector<32x512xf32> to vector<32x512xbf16>
    %c128 = arith.constant 128 : index
    %c0_16 = arith.constant 0 : index
    %31 = vector.load %arg10[%c128, %c0_16] : memref<288x512xbf16, #tpu.memory_space<vmem>>, vector<32x512xbf16>
    tpu.vector_store %arg10[%c128, %c0_16], %30 {strides = array<i32>} : memref<288x512xbf16, #tpu.memory_space<vmem>>, vector<32x512xbf16>,
    %c511_i32 = arith.constant 511 : i32
    %32 = tpu.dynamic_rotate %1 by %c511_i32 dim 1 : vector<32x512xf32>, i32 -> vector<32x512xf32>
    %33 = vector.broadcast %6 : vector<1x512xf32> to vector<32x512xf32>
    %34 = arith.mulf %32, %33 : vector<32x512xf32>
    %35 = arith.truncf %34 : vector<32x512xf32> to vector<32x512xbf16>
    %c160 = arith.constant 160 : index
    %c0_17 = arith.constant 0 : index
    %36 = vector.load %arg10[%c160, %c0_17] : memref<288x512xbf16, #tpu.memory_space<vmem>>, vector<32x512xbf16>
    tpu.vector_store %arg10[%c160, %c0_17], %35 {strides = array<i32>} : memref<288x512xbf16, #tpu.memory_space<vmem>>, vector<32x512xbf16>,
    %c497_i32 = arith.constant 497 : i32
    %37 = tpu.dynamic_rotate %1 by %c497_i32 dim 1 : vector<32x512xf32>, i32 -> vector<32x512xf32>
    %38 = vector.broadcast %7 : vector<1x512xf32> to vector<32x512xf32>
    %39 = arith.mulf %37, %38 : vector<32x512xf32>
    %40 = arith.truncf %39 : vector<32x512xf32> to vector<32x512xbf16>
    %c192 = arith.constant 192 : index
    %c0_18 = arith.constant 0 : index
    %41 = vector.load %arg10[%c192, %c0_18] : memref<288x512xbf16, #tpu.memory_space<vmem>>, vector<32x512xbf16>
    tpu.vector_store %arg10[%c192, %c0_18], %40 {strides = array<i32>} : memref<288x512xbf16, #tpu.memory_space<vmem>>, vector<32x512xbf16>,
    %c496_i32 = arith.constant 496 : i32
    %42 = tpu.dynamic_rotate %1 by %c496_i32 dim 1 : vector<32x512xf32>, i32 -> vector<32x512xf32>
    %43 = vector.broadcast %8 : vector<1x512xf32> to vector<32x512xf32>
    %44 = arith.mulf %42, %43 : vector<32x512xf32>
    %45 = arith.truncf %44 : vector<32x512xf32> to vector<32x512xbf16>
    %c224 = arith.constant 224 : index
    %c0_19 = arith.constant 0 : index
    %46 = vector.load %arg10[%c224, %c0_19] : memref<288x512xbf16, #tpu.memory_space<vmem>>, vector<32x512xbf16>
    tpu.vector_store %arg10[%c224, %c0_19], %45 {strides = array<i32>} : memref<288x512xbf16, #tpu.memory_space<vmem>>, vector<32x512xbf16>,
    %c495_i32 = arith.constant 495 : i32
    %47 = tpu.dynamic_rotate %1 by %c495_i32 dim 1 : vector<32x512xf32>, i32 -> vector<32x512xf32>
    %48 = vector.broadcast %9 : vector<1x512xf32> to vector<32x512xf32>
    %49 = arith.mulf %47, %48 : vector<32x512xf32>
    %50 = arith.truncf %49 : vector<32x512xf32> to vector<32x512xbf16>
    %c256 = arith.constant 256 : index
    %c0_20 = arith.constant 0 : index
    %51 = vector.load %arg10[%c256, %c0_20] : memref<288x512xbf16, #tpu.memory_space<vmem>>, vector<32x512xbf16>
    tpu.vector_store %arg10[%c256, %c0_20], %50 {strides = array<i32>} : memref<288x512xbf16, #tpu.memory_space<vmem>>, vector<32x512xbf16>,
    %c0_21 = arith.constant 0 : index
    %c0_22 = arith.constant 0 : index
    %c0_23 = arith.constant 0 : index
    %52 = vector.load %arg3[%c0_21, %c0_22, %c0_23] : memref<3x32x288xbf16, #tpu.memory_space<vmem>>, vector<1x32x288xbf16>
    %53 = vector.shape_cast %52 : vector<1x32x288xbf16> to vector<32x288xbf16>
    %c0_24 = arith.constant 0 : index
    %c0_25 = arith.constant 0 : index
    %54 = vector.load %arg10[%c0_24, %c0_25] : memref<288x512xbf16, #tpu.memory_space<vmem>>, vector<288x512xbf16>
    %cst = arith.constant dense<0.000000e+00> : vector<32x512xf32>
    %55 = tpu.matmul %53, %54, %cst {dimension_numbers = #tpu.dot_dimension_numbers<[1], [0], [0], [1], [0, 0, 1, 1], [], []>} : vector<32x288xbf16>, vector<288x512xbf16>, vector<32x512xf32> -> vector<32x512xf32>
    %c0_26 = arith.constant 0 : index
    %c0_27 = arith.constant 0 : index
    %c0_28 = arith.constant 0 : index
    %56 = vector.load %arg4[%c0_26, %c0_27, %c0_28] : memref<3x32x1xf32, #tpu.memory_space<vmem>>, vector<1x32x1xf32>
    %57 = vector.shape_cast %56 : vector<1x32x1xf32> to vector<32x1xf32>
    %58 = vector.broadcast %57 : vector<32x1xf32> to vector<32x512xf32>
    %59 = arith.addf %55, %58 : vector<32x512xf32>
    %cst_29 = arith.constant 0.000000e+00 : f32
    %60 = vector.broadcast %cst_29 : f32 to vector<32x512xf32>
    %61 = arith.maximumf %59, %60 : vector<32x512xf32>
    %c17_i32_30 = arith.constant 17 : i32
    %62 = tpu.dynamic_rotate %61 by %c17_i32_30 dim 1 : vector<32x512xf32>, i32 -> vector<32x512xf32>
    %63 = vector.broadcast %2 : vector<1x512xf32> to vector<32x512xf32>
    %64 = arith.mulf %62, %63 : vector<32x512xf32>
    %65 = arith.truncf %64 : vector<32x512xf32> to vector<32x512xbf16>
    %c0_31 = arith.constant 0 : index
    %c0_32 = arith.constant 0 : index
    %66 = vector.load %arg10[%c0_31, %c0_32] : memref<288x512xbf16, #tpu.memory_space<vmem>>, vector<32x512xbf16>
    tpu.vector_store %arg10[%c0_31, %c0_32], %65 {strides = array<i32>} : memref<288x512xbf16, #tpu.memory_space<vmem>>, vector<32x512xbf16>,
    %c16_i32_33 = arith.constant 16 : i32
    %67 = tpu.dynamic_rotate %61 by %c16_i32_33 dim 1 : vector<32x512xf32>, i32 -> vector<32x512xf32>
    %68 = vector.broadcast %3 : vector<1x512xf32> to vector<32x512xf32>
    %69 = arith.mulf %67, %68 : vector<32x512xf32>
    %70 = arith.truncf %69 : vector<32x512xf32> to vector<32x512xbf16>
    %c32_34 = arith.constant 32 : index
    %c0_35 = arith.constant 0 : index
    %71 = vector.load %arg10[%c32_34, %c0_35] : memref<288x512xbf16, #tpu.memory_space<vmem>>, vector<32x512xbf16>
    tpu.vector_store %arg10[%c32_34, %c0_35], %70 {strides = array<i32>} : memref<288x512xbf16, #tpu.memory_space<vmem>>, vector<32x512xbf16>,
    %c15_i32_36 = arith.constant 15 : i32
    %72 = tpu.dynamic_rotate %61 by %c15_i32_36 dim 1 : vector<32x512xf32>, i32 -> vector<32x512xf32>
    %73 = vector.broadcast %4 : vector<1x512xf32> to vector<32x512xf32>
    %74 = arith.mulf %72, %73 : vector<32x512xf32>
    %75 = arith.truncf %74 : vector<32x512xf32> to vector<32x512xbf16>
    %c64_37 = arith.constant 64 : index
    %c0_38 = arith.constant 0 : index
    %76 = vector.load %arg10[%c64_37, %c0_38] : memref<288x512xbf16, #tpu.memory_space<vmem>>, vector<32x512xbf16>
    tpu.vector_store %arg10[%c64_37, %c0_38], %75 {strides = array<i32>} : memref<288x512xbf16, #tpu.memory_space<vmem>>, vector<32x512xbf16>,
    %c1_i32_39 = arith.constant 1 : i32
    %77 = tpu.dynamic_rotate %61 by %c1_i32_39 dim 1 : vector<32x512xf32>, i32 -> vector<32x512xf32>
    %78 = vector.broadcast %5 : vector<1x512xf32> to vector<32x512xf32>
    %79 = arith.mulf %77, %78 : vector<32x512xf32>
    %80 = arith.truncf %79 : vector<32x512xf32> to vector<32x512xbf16>
    %c96_40 = arith.constant 96 : index
    %c0_41 = arith.constant 0 : index
    %81 = vector.load %arg10[%c96_40, %c0_41] : memref<288x512xbf16, #tpu.memory_space<vmem>>, vector<32x512xbf16>
    tpu.vector_store %arg10[%c96_40, %c0_41], %80 {strides = array<i32>} : memref<288x512xbf16, #tpu.memory_space<vmem>>, vector<32x512xbf16>,
    %82 = arith.truncf %61 : vector<32x512xf32> to vector<32x512xbf16>
    %c128_42 = arith.constant 128 : index
    %c0_43 = arith.constant 0 : index
    %83 = vector.load %arg10[%c128_42, %c0_43] : memref<288x512xbf16, #tpu.memory_space<vmem>>, vector<32x512xbf16>
    tpu.vector_store %arg10[%c128_42, %c0_43], %82 {strides = array<i32>} : memref<288x512xbf16, #tpu.memory_space<vmem>>, vector<32x512xbf16>,
    %c511_i32_44 = arith.constant 511 : i32
    %84 = tpu.dynamic_rotate %61 by %c511_i32_44 dim 1 : vector<32x512xf32>, i32 -> vector<32x512xf32>
    %85 = vector.broadcast %6 : vector<1x512xf32> to vector<32x512xf32>
    %86 = arith.mulf %84, %85 : vector<32x512xf32>
    %87 = arith.truncf %86 : vector<32x512xf32> to vector<32x512xbf16>
    %c160_45 = arith.constant 160 : index
    %c0_46 = arith.constant 0 : index
    %88 = vector.load %arg10[%c160_45, %c0_46] : memref<288x512xbf16, #tpu.memory_space<vmem>>, vector<32x512xbf16>
    tpu.vector_store %arg10[%c160_45, %c0_46], %87 {strides = array<i32>} : memref<288x512xbf16, #tpu.memory_space<vmem>>, vector<32x512xbf16>,
    %c497_i32_47 = arith.constant 497 : i32
    %89 = tpu.dynamic_rotate %61 by %c497_i32_47 dim 1 : vector<32x512xf32>, i32 -> vector<32x512xf32>
    %90 = vector.broadcast %7 : vector<1x512xf32> to vector<32x512xf32>
    %91 = arith.mulf %89, %90 : vector<32x512xf32>
    %92 = arith.truncf %91 : vector<32x512xf32> to vector<32x512xbf16>
    %c192_48 = arith.constant 192 : index
    %c0_49 = arith.constant 0 : index
    %93 = vector.load %arg10[%c192_48, %c0_49] : memref<288x512xbf16, #tpu.memory_space<vmem>>, vector<32x512xbf16>
    tpu.vector_store %arg10[%c192_48, %c0_49], %92 {strides = array<i32>} : memref<288x512xbf16, #tpu.memory_space<vmem>>, vector<32x512xbf16>,
    %c496_i32_50 = arith.constant 496 : i32
    %94 = tpu.dynamic_rotate %61 by %c496_i32_50 dim 1 : vector<32x512xf32>, i32 -> vector<32x512xf32>
    %95 = vector.broadcast %8 : vector<1x512xf32> to vector<32x512xf32>
    %96 = arith.mulf %94, %95 : vector<32x512xf32>
    %97 = arith.truncf %96 : vector<32x512xf32> to vector<32x512xbf16>
    %c224_51 = arith.constant 224 : index
    %c0_52 = arith.constant 0 : index
    %98 = vector.load %arg10[%c224_51, %c0_52] : memref<288x512xbf16, #tpu.memory_space<vmem>>, vector<32x512xbf16>
    tpu.vector_store %arg10[%c224_51, %c0_52], %97 {strides = array<i32>} : memref<288x512xbf16, #tpu.memory_space<vmem>>, vector<32x512xbf16>,
    %c495_i32_53 = arith.constant 495 : i32
    %99 = tpu.dynamic_rotate %61 by %c495_i32_53 dim 1 : vector<32x512xf32>, i32 -> vector<32x512xf32>
    %100 = vector.broadcast %9 : vector<1x512xf32> to vector<32x512xf32>
    %101 = arith.mulf %99, %100 : vector<32x512xf32>
    %102 = arith.truncf %101 : vector<32x512xf32> to vector<32x512xbf16>
    %c256_54 = arith.constant 256 : index
    %c0_55 = arith.constant 0 : index
    %103 = vector.load %arg10[%c256_54, %c0_55] : memref<288x512xbf16, #tpu.memory_space<vmem>>, vector<32x512xbf16>
    tpu.vector_store %arg10[%c256_54, %c0_55], %102 {strides = array<i32>} : memref<288x512xbf16, #tpu.memory_space<vmem>>, vector<32x512xbf16>,
    %c1_56 = arith.constant 1 : index
    %c0_57 = arith.constant 0 : index
    %c0_58 = arith.constant 0 : index
    %104 = vector.load %arg3[%c1_56, %c0_57, %c0_58] : memref<3x32x288xbf16, #tpu.memory_space<vmem>>, vector<1x32x288xbf16>
    %105 = vector.shape_cast %104 : vector<1x32x288xbf16> to vector<32x288xbf16>
    %c0_59 = arith.constant 0 : index
    %c0_60 = arith.constant 0 : index
    %106 = vector.load %arg10[%c0_59, %c0_60] : memref<288x512xbf16, #tpu.memory_space<vmem>>, vector<288x512xbf16>
    %cst_61 = arith.constant dense<0.000000e+00> : vector<32x512xf32>
    %107 = tpu.matmul %105, %106, %cst_61 {dimension_numbers = #tpu.dot_dimension_numbers<[1], [0], [0], [1], [0, 0, 1, 1], [], []>} : vector<32x288xbf16>, vector<288x512xbf16>, vector<32x512xf32> -> vector<32x512xf32>
    %c1_62 = arith.constant 1 : index
    %c0_63 = arith.constant 0 : index
    %c0_64 = arith.constant 0 : index
    %108 = vector.load %arg4[%c1_62, %c0_63, %c0_64] : memref<3x32x1xf32, #tpu.memory_space<vmem>>, vector<1x32x1xf32>
    %109 = vector.shape_cast %108 : vector<1x32x1xf32> to vector<32x1xf32>
    %110 = vector.broadcast %109 : vector<32x1xf32> to vector<32x512xf32>
    %111 = arith.addf %107, %110 : vector<32x512xf32>
    %cst_65 = arith.constant 0.000000e+00 : f32
    %112 = vector.broadcast %cst_65 : f32 to vector<32x512xf32>
    %113 = arith.maximumf %111, %112 : vector<32x512xf32>
    %c17_i32_66 = arith.constant 17 : i32
    %114 = tpu.dynamic_rotate %113 by %c17_i32_66 dim 1 : vector<32x512xf32>, i32 -> vector<32x512xf32>
    %115 = vector.broadcast %2 : vector<1x512xf32> to vector<32x512xf32>
    %116 = arith.mulf %114, %115 : vector<32x512xf32>
    %117 = arith.truncf %116 : vector<32x512xf32> to vector<32x512xbf16>
    %c0_67 = arith.constant 0 : index
    %c0_68 = arith.constant 0 : index
    %118 = vector.load %arg10[%c0_67, %c0_68] : memref<288x512xbf16, #tpu.memory_space<vmem>>, vector<32x512xbf16>
    tpu.vector_store %arg10[%c0_67, %c0_68], %117 {strides = array<i32>} : memref<288x512xbf16, #tpu.memory_space<vmem>>, vector<32x512xbf16>,
    %c16_i32_69 = arith.constant 16 : i32
    %119 = tpu.dynamic_rotate %113 by %c16_i32_69 dim 1 : vector<32x512xf32>, i32 -> vector<32x512xf32>
    %120 = vector.broadcast %3 : vector<1x512xf32> to vector<32x512xf32>
    %121 = arith.mulf %119, %120 : vector<32x512xf32>
    %122 = arith.truncf %121 : vector<32x512xf32> to vector<32x512xbf16>
    %c32_70 = arith.constant 32 : index
    %c0_71 = arith.constant 0 : index
    %123 = vector.load %arg10[%c32_70, %c0_71] : memref<288x512xbf16, #tpu.memory_space<vmem>>, vector<32x512xbf16>
    tpu.vector_store %arg10[%c32_70, %c0_71], %122 {strides = array<i32>} : memref<288x512xbf16, #tpu.memory_space<vmem>>, vector<32x512xbf16>,
    %c15_i32_72 = arith.constant 15 : i32
    %124 = tpu.dynamic_rotate %113 by %c15_i32_72 dim 1 : vector<32x512xf32>, i32 -> vector<32x512xf32>
    %125 = vector.broadcast %4 : vector<1x512xf32> to vector<32x512xf32>
    %126 = arith.mulf %124, %125 : vector<32x512xf32>
    %127 = arith.truncf %126 : vector<32x512xf32> to vector<32x512xbf16>
    %c64_73 = arith.constant 64 : index
    %c0_74 = arith.constant 0 : index
    %128 = vector.load %arg10[%c64_73, %c0_74] : memref<288x512xbf16, #tpu.memory_space<vmem>>, vector<32x512xbf16>
    tpu.vector_store %arg10[%c64_73, %c0_74], %127 {strides = array<i32>} : memref<288x512xbf16, #tpu.memory_space<vmem>>, vector<32x512xbf16>,
    %c1_i32_75 = arith.constant 1 : i32
    %129 = tpu.dynamic_rotate %113 by %c1_i32_75 dim 1 : vector<32x512xf32>, i32 -> vector<32x512xf32>
    %130 = vector.broadcast %5 : vector<1x512xf32> to vector<32x512xf32>
    %131 = arith.mulf %129, %130 : vector<32x512xf32>
    %132 = arith.truncf %131 : vector<32x512xf32> to vector<32x512xbf16>
    %c96_76 = arith.constant 96 : index
    %c0_77 = arith.constant 0 : index
    %133 = vector.load %arg10[%c96_76, %c0_77] : memref<288x512xbf16, #tpu.memory_space<vmem>>, vector<32x512xbf16>
    tpu.vector_store %arg10[%c96_76, %c0_77], %132 {strides = array<i32>} : memref<288x512xbf16, #tpu.memory_space<vmem>>, vector<32x512xbf16>,
    %134 = arith.truncf %113 : vector<32x512xf32> to vector<32x512xbf16>
    %c128_78 = arith.constant 128 : index
    %c0_79 = arith.constant 0 : index
    %135 = vector.load %arg10[%c128_78, %c0_79] : memref<288x512xbf16, #tpu.memory_space<vmem>>, vector<32x512xbf16>
    tpu.vector_store %arg10[%c128_78, %c0_79], %134 {strides = array<i32>} : memref<288x512xbf16, #tpu.memory_space<vmem>>, vector<32x512xbf16>,
    %c511_i32_80 = arith.constant 511 : i32
    %136 = tpu.dynamic_rotate %113 by %c511_i32_80 dim 1 : vector<32x512xf32>, i32 -> vector<32x512xf32>
    %137 = vector.broadcast %6 : vector<1x512xf32> to vector<32x512xf32>
    %138 = arith.mulf %136, %137 : vector<32x512xf32>
    %139 = arith.truncf %138 : vector<32x512xf32> to vector<32x512xbf16>
    %c160_81 = arith.constant 160 : index
    %c0_82 = arith.constant 0 : index
    %140 = vector.load %arg10[%c160_81, %c0_82] : memref<288x512xbf16, #tpu.memory_space<vmem>>, vector<32x512xbf16>
    tpu.vector_store %arg10[%c160_81, %c0_82], %139 {strides = array<i32>} : memref<288x512xbf16, #tpu.memory_space<vmem>>, vector<32x512xbf16>,
    %c497_i32_83 = arith.constant 497 : i32
    %141 = tpu.dynamic_rotate %113 by %c497_i32_83 dim 1 : vector<32x512xf32>, i32 -> vector<32x512xf32>
    %142 = vector.broadcast %7 : vector<1x512xf32> to vector<32x512xf32>
    %143 = arith.mulf %141, %142 : vector<32x512xf32>
    %144 = arith.truncf %143 : vector<32x512xf32> to vector<32x512xbf16>
    %c192_84 = arith.constant 192 : index
    %c0_85 = arith.constant 0 : index
    %145 = vector.load %arg10[%c192_84, %c0_85] : memref<288x512xbf16, #tpu.memory_space<vmem>>, vector<32x512xbf16>
    tpu.vector_store %arg10[%c192_84, %c0_85], %144 {strides = array<i32>} : memref<288x512xbf16, #tpu.memory_space<vmem>>, vector<32x512xbf16>,
    %c496_i32_86 = arith.constant 496 : i32
    %146 = tpu.dynamic_rotate %113 by %c496_i32_86 dim 1 : vector<32x512xf32>, i32 -> vector<32x512xf32>
    %147 = vector.broadcast %8 : vector<1x512xf32> to vector<32x512xf32>
    %148 = arith.mulf %146, %147 : vector<32x512xf32>
    %149 = arith.truncf %148 : vector<32x512xf32> to vector<32x512xbf16>
    %c224_87 = arith.constant 224 : index
    %c0_88 = arith.constant 0 : index
    %150 = vector.load %arg10[%c224_87, %c0_88] : memref<288x512xbf16, #tpu.memory_space<vmem>>, vector<32x512xbf16>
    tpu.vector_store %arg10[%c224_87, %c0_88], %149 {strides = array<i32>} : memref<288x512xbf16, #tpu.memory_space<vmem>>, vector<32x512xbf16>,
    %c495_i32_89 = arith.constant 495 : i32
    %151 = tpu.dynamic_rotate %113 by %c495_i32_89 dim 1 : vector<32x512xf32>, i32 -> vector<32x512xf32>
    %152 = vector.broadcast %9 : vector<1x512xf32> to vector<32x512xf32>
    %153 = arith.mulf %151, %152 : vector<32x512xf32>
    %154 = arith.truncf %153 : vector<32x512xf32> to vector<32x512xbf16>
    %c256_90 = arith.constant 256 : index
    %c0_91 = arith.constant 0 : index
    %155 = vector.load %arg10[%c256_90, %c0_91] : memref<288x512xbf16, #tpu.memory_space<vmem>>, vector<32x512xbf16>
    tpu.vector_store %arg10[%c256_90, %c0_91], %154 {strides = array<i32>} : memref<288x512xbf16, #tpu.memory_space<vmem>>, vector<32x512xbf16>,
    %c2_92 = arith.constant 2 : index
    %c0_93 = arith.constant 0 : index
    %c0_94 = arith.constant 0 : index
    %156 = vector.load %arg3[%c2_92, %c0_93, %c0_94] : memref<3x32x288xbf16, #tpu.memory_space<vmem>>, vector<1x32x288xbf16>
    %157 = vector.shape_cast %156 : vector<1x32x288xbf16> to vector<32x288xbf16>
    %c0_95 = arith.constant 0 : index
    %c0_96 = arith.constant 0 : index
    %158 = vector.load %arg10[%c0_95, %c0_96] : memref<288x512xbf16, #tpu.memory_space<vmem>>, vector<288x512xbf16>
    %cst_97 = arith.constant dense<0.000000e+00> : vector<32x512xf32>
    %159 = tpu.matmul %157, %158, %cst_97 {dimension_numbers = #tpu.dot_dimension_numbers<[1], [0], [0], [1], [0, 0, 1, 1], [], []>} : vector<32x288xbf16>, vector<288x512xbf16>, vector<32x512xf32> -> vector<32x512xf32>
    %c2_98 = arith.constant 2 : index
    %c0_99 = arith.constant 0 : index
    %c0_100 = arith.constant 0 : index
    %160 = vector.load %arg4[%c2_98, %c0_99, %c0_100] : memref<3x32x1xf32, #tpu.memory_space<vmem>>, vector<1x32x1xf32>
    %161 = vector.shape_cast %160 : vector<1x32x1xf32> to vector<32x1xf32>
    %162 = vector.broadcast %161 : vector<32x1xf32> to vector<32x512xf32>
    %163 = arith.addf %159, %162 : vector<32x512xf32>
    %cst_101 = arith.constant 0.000000e+00 : f32
    %164 = vector.broadcast %cst_101 : f32 to vector<32x512xf32>
    %165 = arith.maximumf %163, %164 : vector<32x512xf32>
    %c0_102 = arith.constant 0 : index
    %c0_103 = arith.constant 0 : index
    %166 = vector.load %arg5[%c0_102, %c0_103] : memref<512x32xbf16, #tpu.memory_space<vmem>>, vector<512x32xbf16>
    %167 = arith.truncf %165 : vector<32x512xf32> to vector<32x512xbf16>
    %cst_104 = arith.constant dense<0.000000e+00> : vector<512x512xf32>
    %168 = tpu.matmul %166, %167, %cst_104 {dimension_numbers = #tpu.dot_dimension_numbers<[1], [0], [0], [1], [0, 0, 1, 1], [], []>} : vector<512x32xbf16>, vector<32x512xbf16>, vector<512x512xf32> -> vector<512x512xf32>
    %c0_105 = arith.constant 0 : index
    %c0_106 = arith.constant 0 : index
    %169 = vector.load %arg6[%c0_105, %c0_106] : memref<512x1xf32, #tpu.memory_space<vmem>>, vector<512x1xf32>
    %170 = vector.broadcast %169 : vector<512x1xf32> to vector<512x512xf32>
    %171 = arith.addf %168, %170 : vector<512x512xf32>
    %cst_107 = arith.constant 0.000000e+00 : f32
    %172 = vector.broadcast %cst_107 : f32 to vector<512x512xf32>
    %173 = arith.maximumf %171, %172 : vector<512x512xf32>
    %c0_108 = arith.constant 0 : index
    %c0_109 = arith.constant 0 : index
    %174 = vector.load %arg7[%c0_108, %c0_109] : memref<8x512xbf16, #tpu.memory_space<vmem>>, vector<8x512xbf16>
    %175 = arith.truncf %173 : vector<512x512xf32> to vector<512x512xbf16>
    %cst_110 = arith.constant dense<0.000000e+00> : vector<8x512xf32>
    %176 = tpu.matmul %174, %175, %cst_110 {dimension_numbers = #tpu.dot_dimension_numbers<[1], [0], [0], [1], [0, 0, 1, 1], [], []>} : vector<8x512xbf16>, vector<512x512xbf16>, vector<8x512xf32> -> vector<8x512xf32>
    %c0_111 = arith.constant 0 : index
    %c0_112 = arith.constant 0 : index
    %177 = vector.load %arg8[%c0_111, %c0_112] : memref<8x1xf32, #tpu.memory_space<vmem>>, vector<8x1xf32>
    %178 = vector.broadcast %177 : vector<8x1xf32> to vector<8x512xf32>
    %179 = arith.addf %176, %178 : vector<8x512xf32>
    %c0_113 = arith.constant 0 : index
    %c0_114 = arith.constant 0 : index
    %c0_115 = arith.constant 0 : index
    %180 = vector.load %arg9[%c0_113, %c0_114, %c0_115] : memref<1x8x512xf32, #tpu.memory_space<vmem>>, vector<1x8x512xf32>
    %181 = vector.shape_cast %180 : vector<1x8x512xf32> to vector<8x512xf32>
    %182 = vector.shape_cast %179 : vector<8x512xf32> to vector<1x8x512xf32>
    tpu.vector_store %arg9[%c0_113, %c0_114, %c0_115], %182 {strides = array<i32>} : memref<1x8x512xf32, #tpu.memory_space<vmem>>, vector<1x8x512xf32>,
    return
  }
  func.func @transform_0(%arg0: i32) -> (i32, i32, i32) {
    %c0_i32 = arith.constant 0 : i32
    %c0_i32_0 = arith.constant 0 : i32
    %c0_i32_1 = arith.constant 0 : i32
    return %arg0, %c0_i32, %c0_i32_0 : i32, i32, i32
  }
  func.func @transform_1(%arg0: i32) -> (i32, i32) {
    %c0_i32 = arith.constant 0 : i32
    %c0_i32_0 = arith.constant 0 : i32
    %c0_i32_1 = arith.constant 0 : i32
    return %c0_i32, %c0_i32_0 : i32, i32
  }
  func.func @transform_2(%arg0: i32) -> (i32, i32, i32) {
    %c0_i32 = arith.constant 0 : i32
    %c0_i32_0 = arith.constant 0 : i32
    %c0_i32_1 = arith.constant 0 : i32
    %c0_i32_2 = arith.constant 0 : i32
    return %c0_i32, %c0_i32_0, %c0_i32_1 : i32, i32, i32
  }
  func.func @transform_3(%arg0: i32) -> (i32, i32, i32) {
    %c0_i32 = arith.constant 0 : i32
    %c0_i32_0 = arith.constant 0 : i32
    %c0_i32_1 = arith.constant 0 : i32
    %c0_i32_2 = arith.constant 0 : i32
    return %c0_i32, %c0_i32_0, %c0_i32_1 : i32, i32, i32
  }
  func.func @transform_4(%arg0: i32) -> (i32, i32) {
    %c0_i32 = arith.constant 0 : i32
    %c0_i32_0 = arith.constant 0 : i32
    %c0_i32_1 = arith.constant 0 : i32
    return %c0_i32, %c0_i32_0 : i32, i32
  }
  func.func @transform_5(%arg0: i32) -> (i32, i32) {
    %c0_i32 = arith.constant 0 : i32
    %c0_i32_0 = arith.constant 0 : i32
    %c0_i32_1 = arith.constant 0 : i32
    return %c0_i32, %c0_i32_0 : i32, i32
  }
  func.func @transform_6(%arg0: i32) -> (i32, i32) {
    %c0_i32 = arith.constant 0 : i32
    %c0_i32_0 = arith.constant 0 : i32
    %c0_i32_1 = arith.constant 0 : i32
    return %c0_i32, %c0_i32_0 : i32, i32
  }
  func.func @transform_7(%arg0: i32) -> (i32, i32) {
    %c0_i32 = arith.constant 0 : i32
    %c0_i32_0 = arith.constant 0 : i32
    %c0_i32_1 = arith.constant 0 : i32
    return %c0_i32, %c0_i32_0 : i32, i32
  }
  func.func @transform_8(%arg0: i32) -> (i32, i32, i32) {
    %c0_i32 = arith.constant 0 : i32
    %c0_i32_0 = arith.constant 0 : i32
    %c0_i32_1 = arith.constant 0 : i32
    return %arg0, %c0_i32, %c0_i32_0 : i32, i32, i32
  }
}

</mosaic_0001>

<llo_original>
// kernel: _lambda_.1
$region0: #{_lambda_.1}
  #allocation0 [shape = 'u32[]', space=smem, size = 0x4, offset = 0x4, fixed_abs, tag = 'smem constant byte address 0x4 - core index']
  #allocation1 [shape = 'u32[72,128]{1,0:T(1,128)}', space=vmem, size = 0x9000, scoped, tag = 'internal scratch']
  #allocation2 [shape = 'bf16[288,512]{1,0:T(8,128)(2,1)}', space=vmem, size = 0x48000, scoped, tag = 'scratch operand']
  %s0 = inlined_call_operand.vmem [shape: f32[1,32,512], index: 0, kind: input, shape index: {}]
  %s1 = inlined_call_operand.vmem [shape: f32[9,512], index: 1, kind: input, shape index: {}]
  %s2 = inlined_call_operand.vmem [shape: bf16[3,32,288], index: 2, kind: input, shape index: {}]
  %s3 = inlined_call_operand.vmem [shape: f32[3,32,1], index: 3, kind: input, shape index: {}]
  %s4 = inlined_call_operand.vmem [shape: bf16[512,32], index: 4, kind: input, shape index: {}]
  %s5 = inlined_call_operand.vmem [shape: f32[512,1], index: 5, kind: input, shape index: {}]
  %s6 = inlined_call_operand.vmem [shape: bf16[8,512], index: 6, kind: input, shape index: {}]
  %s7 = inlined_call_operand.vmem [shape: f32[8,1], index: 7, kind: input, shape index: {}]
  %s8 = inlined_call_operand.vmem [shape: f32[1,8,512], index: 8, kind: output, shape index: {}]
  %s9 = sld [smem:[#allocation0]]
  $region42: #{_lambda_.1} parent=0
    _
  %s11 = ssub.s32 1, %s9
  %s12 = scalar_select 0, %s11, %s9
  // Predicated region
  $region2: #{_lambda_.1} parent=0 // pred_check
    _
  $region3: #{_lambda_.1} parent=0 // pred_check_branch
    %14 = sbr.rel (0) target = $region5
  $region4: #{_lambda_.1} parent=0 // pred_region
    _
  $region5: #{_lambda_.1} parent=0 // pred_fallthru
    _
  // Predicated region
  $region6: #{_lambda_.1} parent=0 // pred_check
    _
  $region7: #{_lambda_.1} parent=0 // pred_check_branch
    %16 = sbr.rel (0) target = $region9
  $region8: #{_lambda_.1} parent=0 // pred_region
    _
  $region9: #{_lambda_.1} parent=0 // pred_fallthru
    _
  // Predicated region
  $region10: #{_lambda_.1} parent=0 // pred_check
    _
  $region11: #{_lambda_.1} parent=0 // pred_check_branch
    %18 = sbr.rel (0) target = $region13
  $region12: #{_lambda_.1} parent=0 // pred_region
    _
  $region13: #{_lambda_.1} parent=0 // pred_fallthru
    _
  // Predicated region
  $region14: #{_lambda_.1} parent=0 // pred_check
    _
  $region15: #{_lambda_.1} parent=0 // pred_check_branch
    %20 = sbr.rel (0) target = $region17
  $region16: #{_lambda_.1} parent=0 // pred_region
    _
  $region17: #{_lambda_.1} parent=0 // pred_fallthru
    _
  // Predicated region
  $region18: #{_lambda_.1} parent=0 // pred_check
    _
  $region19: #{_lambda_.1} parent=0 // pred_check_branch
    %22 = sbr.rel (0) target = $region21
  $region20: #{_lambda_.1} parent=0 // pred_region
    _
  $region21: #{_lambda_.1} parent=0 // pred_fallthru
    _
  // Predicated region
  $region22: #{_lambda_.1} parent=0 // pred_check
    _
  $region23: #{_lambda_.1} parent=0 // pred_check_branch
    %24 = sbr.rel (0) target = $region25
  $region24: #{_lambda_.1} parent=0 // pred_region
    _
  $region25: #{_lambda_.1} parent=0 // pred_fallthru
    _
  // Predicated region
  $region26: #{_lambda_.1} parent=0 // pred_check
    _
  $region27: #{_lambda_.1} parent=0 // pred_check_branch
    %26 = sbr.rel (0) target = $region29
  $region28: #{_lambda_.1} parent=0 // pred_region
    _
  $region29: #{_lambda_.1} parent=0 // pred_fallthru
    _
  // Predicated region
  $region30: #{_lambda_.1} parent=0 // pred_check
    _
  $region31: #{_lambda_.1} parent=0 // pred_check_branch
    %28 = sbr.rel (0) target = $region33
  $region32: #{_lambda_.1} parent=0 // pred_region
    _
  $region33: #{_lambda_.1} parent=0 // pred_fallthru
    _
  %v30 = vld [vmem:[%s0] sm:$0xff]
  %v31 = vld [vmem:[%s0 + $0x8] sm:$0xff]
  %v32 = vld [vmem:[%s0 + $0x10] sm:$0xff]
  %v33 = vld [vmem:[%s0 + $0x18] sm:$0xff]
  %v34 = vld [vmem:[%s0 + $0x20] sm:$0xff]
  %v35 = vld [vmem:[%s0 + $0x28] sm:$0xff]
  %v36 = vld [vmem:[%s0 + $0x30] sm:$0xff]
  %v37 = vld [vmem:[%s0 + $0x38] sm:$0xff]
  %v38 = vld [vmem:[%s0 + $0x40] sm:$0xff]
  %v39 = vld [vmem:[%s0 + $0x48] sm:$0xff]
  %v40 = vld [vmem:[%s0 + $0x50] sm:$0xff]
  %v41 = vld [vmem:[%s0 + $0x58] sm:$0xff]
  %v42 = vld [vmem:[%s0 + $0x60] sm:$0xff]
  %v43 = vld [vmem:[%s0 + $0x68] sm:$0xff]
  %v44 = vld [vmem:[%s0 + $0x70] sm:$0xff]
  %v45 = vld [vmem:[%s0 + $0x78] sm:$0xff]
  %v46 = vld [vmem:[%s1] ss:$8 sm:$0xf]
  %s47 = scalar_lea.vmem %s1, 1
  %v48 = vld [vmem:[%s47] ss:$8 sm:$0xf]
  %s49 = scalar_lea.vmem %s1, 2
  %v50 = vld [vmem:[%s49] ss:$8 sm:$0xf]
  %s51 = scalar_lea.vmem %s1, 3
  %v52 = vld [vmem:[%s51] ss:$8 sm:$0xf]
  %s53 = scalar_lea.vmem %s1, 5
  %v54 = vld [vmem:[%s53] ss:$8 sm:$0xf]
  %s55 = scalar_lea.vmem %s1, 6
  %v56 = vld [vmem:[%s55] ss:$8 sm:$0xf]
  %s57 = scalar_lea.vmem %s1, 7
  %v58 = vld [vmem:[%s57] ss:$8 sm:$0xf]
  %s59 = scalar_lea.vmem %s1, 32
  %v60 = vld [vmem:[%s59] ss:$8 sm:$0xf]
  %61 = vrot.lane.b32.xlu0 %v30, 17
  %v62 = vpop.permute.xlu0 %61
  %63 = vrot.lane.b32.xlu0 %v34, 17
  %v64 = vpop.permute.xlu0 %63
  %65 = vrot.lane.b32.xlu0 %v38, 17
  %v66 = vpop.permute.xlu0 %65
  %67 = vrot.lane.b32.xlu0 %v42, 17
  %v68 = vpop.permute.xlu0 %67
  %69 = vrot.lane.b32.xlu0 %v31, 17
  %v70 = vpop.permute.xlu0 %69
  %71 = vrot.lane.b32.xlu0 %v35, 17
  %v72 = vpop.permute.xlu0 %71
  %73 = vrot.lane.b32.xlu0 %v39, 17
  %v74 = vpop.permute.xlu0 %73
  %75 = vrot.lane.b32.xlu0 %v43, 17
  %v76 = vpop.permute.xlu0 %75
  %77 = vrot.lane.b32.xlu0 %v32, 17
  %v78 = vpop.permute.xlu0 %77
  %79 = vrot.lane.b32.xlu0 %v36, 17
  %v80 = vpop.permute.xlu0 %79
  %81 = vrot.lane.b32.xlu0 %v40, 17
  %v82 = vpop.permute.xlu0 %81
  %83 = vrot.lane.b32.xlu0 %v44, 17
  %v84 = vpop.permute.xlu0 %83
  %85 = vrot.lane.b32.xlu0 %v33, 17
  %v86 = vpop.permute.xlu0 %85
  %87 = vrot.lane.b32.xlu0 %v37, 17
  %v88 = vpop.permute.xlu0 %87
  %89 = vrot.lane.b32.xlu0 %v41, 17
  %v90 = vpop.permute.xlu0 %89
  %91 = vrot.lane.b32.xlu0 %v45, 17
  %v92 = vpop.permute.xlu0 %91
  %v93 = vlaneseq
  %v94 = vand.u32 %v93, 127
  %vm95 = vcmp.lt.s32.totalorder %v94, 17
  %v96 = vsel %vm95, %v78, %v86
  %v97 = vsel %vm95, %v80, %v88
  %v98 = vsel %vm95, %v82, %v90
  %v99 = vsel %vm95, %v84, %v92
  %v100 = vsel %vm95, %v70, %v78
  %v101 = vsel %vm95, %v72, %v80
  %v102 = vsel %vm95, %v74, %v82
  %v103 = vsel %vm95, %v76, %v84
  %v104 = vsel %vm95, %v62, %v70
  %v105 = vsel %vm95, %v64, %v72
  %v106 = vsel %vm95, %v66, %v74
  %v107 = vsel %vm95, %v68, %v76
  %v108 = vsel %vm95, %v86, %v62
  %v109 = vsel %vm95, %v88, %v64
  %v110 = vsel %vm95, %v90, %v66
  %v111 = vsel %vm95, %v92, %v68
  %v113 = vperm.slane %v46, 0
  %v114 = vperm.slane %v46, 1
  %v115 = vperm.slane %v46, 2
  %v116 = vperm.slane %v46, 3
  %v121 = vmul.f32 %v108, %v113
  %v122 = vmul.f32 %v104, %v114
  %v123 = vmul.f32 %v100, %v115
  %v124 = vmul.f32 %v96, %v116
  %v125 = vmul.f32 %v109, %v113
  %v126 = vmul.f32 %v105, %v114
  %v127 = vmul.f32 %v101, %v115
  %v128 = vmul.f32 %v97, %v116
  %v129 = vmul.f32 %v110, %v113
  %v130 = vmul.f32 %v106, %v114
  %v131 = vmul.f32 %v102, %v115
  %v132 = vmul.f32 %v98, %v116
  %v133 = vmul.f32 %v111, %v113
  %v134 = vmul.f32 %v107, %v114
  %v135 = vmul.f32 %v103, %v115
  %v136 = vmul.f32 %v99, %v116
  %v137 = vpack.c.bf16 %v122, %v121
  %v138 = vpack.c.bf16 %v124, %v123
  %v139 = vpack.c.bf16 %v126, %v125
  %v140 = vpack.c.bf16 %v128, %v127
  %v141 = vpack.c.bf16 %v130, %v129
  %v142 = vpack.c.bf16 %v132, %v131
  %v143 = vpack.c.bf16 %v134, %v133
  %v144 = vpack.c.bf16 %v136, %v135
  %145 = vst [vmem:[#allocation2] sm:$0xff] %v137
  %146 = vst [vmem:[#allocation2 + $0x8] sm:$0xff] %v138
  %147 = vst [vmem:[#allocation2 + $0x10] sm:$0xff] %v139
  %148 = vst [vmem:[#allocation2 + $0x18] sm:$0xff] %v140
  %149 = vst [vmem:[#allocation2 + $0x20] sm:$0xff] %v141
  %150 = vst [vmem:[#allocation2 + $0x28] sm:$0xff] %v142
  %151 = vst [vmem:[#allocation2 + $0x30] sm:$0xff] %v143
  %152 = vst [vmem:[#allocation2 + $0x38] sm:$0xff] %v144
  %153 = vrot.lane.b32.xlu0 %v30, 16
  %v154 = vpop.permute.xlu0 %153
  %155 = vrot.lane.b32.xlu0 %v34, 16
  %v156 = vpop.permute.xlu0 %155
  %157 = vrot.lane.b32.xlu0 %v38, 16
  %v158 = vpop.permute.xlu0 %157
  %159 = vrot.lane.b32.xlu0 %v42, 16
  %v160 = vpop.permute.xlu0 %159
  %161 = vrot.lane.b32.xlu0 %v31, 16
  %v162 = vpop.permute.xlu0 %161
  %163 = vrot.lane.b32.xlu0 %v35, 16
  %v164 = vpop.permute.xlu0 %163
  %165 = vrot.lane.b32.xlu0 %v39, 16
  %v166 = vpop.permute.xlu0 %165
  %167 = vrot.lane.b32.xlu0 %v43, 16
  %v168 = vpop.permute.xlu0 %167
  %169 = vrot.lane.b32.xlu0 %v32, 16
  %v170 = vpop.permute.xlu0 %169
  %171 = vrot.lane.b32.xlu0 %v36, 16
  %v172 = vpop.permute.xlu0 %171
  %173 = vrot.lane.b32.xlu0 %v40, 16
  %v174 = vpop.permute.xlu0 %173
  %175 = vrot.lane.b32.xlu0 %v44, 16
  %v176 = vpop.permute.xlu0 %175
  %177 = vrot.lane.b32.xlu0 %v33, 16
  %v178 = vpop.permute.xlu0 %177
  %179 = vrot.lane.b32.xlu0 %v37, 16
  %v180 = vpop.permute.xlu0 %179
  %181 = vrot.lane.b32.xlu0 %v41, 16
  %v182 = vpop.permute.xlu0 %181
  %183 = vrot.lane.b32.xlu0 %v45, 16
  %v184 = vpop.permute.xlu0 %183
  %vm185 = vcmp.lt.s32.totalorder %v94, 16
  %v186 = vsel %vm185, %v170, %v178
  %v187 = vsel %vm185, %v172, %v180
  %v188 = vsel %vm185, %v174, %v182
  %v189 = vsel %vm185, %v176, %v184
  %v190 = vsel %vm185, %v162, %v170
  %v191 = vsel %vm185, %v164, %v172
  %v192 = vsel %vm185, %v166, %v174
  %v193 = vsel %vm185, %v168, %v176
  %v194 = vsel %vm185, %v154, %v162
  %v195 = vsel %vm185, %v156, %v164
  %v196 = vsel %vm185, %v158, %v166
  %v197 = vsel %vm185, %v160, %v168
  %v198 = vsel %vm185, %v178, %v154
  %v199 = vsel %vm185, %v180, %v156
  %v200 = vsel %vm185, %v182, %v158
  %v201 = vsel %vm185, %v184, %v160
  %v203 = vperm.slane %v48, 0
  %v204 = vperm.slane %v48, 1
  %v205 = vperm.slane %v48, 2
  %v206 = vperm.slane %v48, 3
  %v211 = vmul.f32 %v198, %v203
  %v212 = vmul.f32 %v194, %v204
  %v213 = vmul.f32 %v190, %v205
  %v214 = vmul.f32 %v186, %v206
  %v215 = vmul.f32 %v199, %v203
  %v216 = vmul.f32 %v195, %v204
  %v217 = vmul.f32 %v191, %v205
  %v218 = vmul.f32 %v187, %v206
  %v219 = vmul.f32 %v200, %v203
  %v220 = vmul.f32 %v196, %v204
  %v221 = vmul.f32 %v192, %v205
  %v222 = vmul.f32 %v188, %v206
  %v223 = vmul.f32 %v201, %v203
  %v224 = vmul.f32 %v197, %v204
  %v225 = vmul.f32 %v193, %v205
  %v226 = vmul.f32 %v189, %v206
  %v227 = vpack.c.bf16 %v212, %v211
  %v228 = vpack.c.bf16 %v214, %v213
  %v229 = vpack.c.bf16 %v216, %v215
  %v230 = vpack.c.bf16 %v218, %v217
  %v231 = vpack.c.bf16 %v220, %v219
  %v232 = vpack.c.bf16 %v222, %v221
  %v233 = vpack.c.bf16 %v224, %v223
  %v234 = vpack.c.bf16 %v226, %v225
  %235 = vst [vmem:[#allocation2 + $0x40] sm:$0xff] %v227
  %236 = vst [vmem:[#allocation2 + $0x48] sm:$0xff] %v228
  %237 = vst [vmem:[#allocation2 + $0x50] sm:$0xff] %v229
  %238 = vst [vmem:[#allocation2 + $0x58] sm:$0xff] %v230
  %239 = vst [vmem:[#allocation2 + $0x60] sm:$0xff] %v231
  %240 = vst [vmem:[#allocation2 + $0x68] sm:$0xff] %v232
  %241 = vst [vmem:[#allocation2 + $0x70] sm:$0xff] %v233
  %242 = vst [vmem:[#allocation2 + $0x78] sm:$0xff] %v234
  %243 = vrot.lane.b32.xlu0 %v30, 15
  %v244 = vpop.permute.xlu0 %243
  %245 = vrot.lane.b32.xlu0 %v34, 15
  %v246 = vpop.permute.xlu0 %245
  %247 = vrot.lane.b32.xlu0 %v38, 15
  %v248 = vpop.permute.xlu0 %247
  %249 = vrot.lane.b32.xlu0 %v42, 15
  %v250 = vpop.permute.xlu0 %249
  %251 = vrot.lane.b32.xlu0 %v31, 15
  %v252 = vpop.permute.xlu0 %251
  %253 = vrot.lane.b32.xlu0 %v35, 15
  %v254 = vpop.permute.xlu0 %253
  %255 = vrot.lane.b32.xlu0 %v39, 15
  %v256 = vpop.permute.xlu0 %255
  %257 = vrot.lane.b32.xlu0 %v43, 15
  %v258 = vpop.permute.xlu0 %257
  %259 = vrot.lane.b32.xlu0 %v32, 15
  %v260 = vpop.permute.xlu0 %259
  %261 = vrot.lane.b32.xlu0 %v36, 15
  %v262 = vpop.permute.xlu0 %261
  %263 = vrot.lane.b32.xlu0 %v40, 15
  %v264 = vpop.permute.xlu0 %263
  %265 = vrot.lane.b32.xlu0 %v44, 15
  %v266 = vpop.permute.xlu0 %265
  %267 = vrot.lane.b32.xlu0 %v33, 15
  %v268 = vpop.permute.xlu0 %267
  %269 = vrot.lane.b32.xlu0 %v37, 15
  %v270 = vpop.permute.xlu0 %269
  %271 = vrot.lane.b32.xlu0 %v41, 15
  %v272 = vpop.permute.xlu0 %271
  %273 = vrot.lane.b32.xlu0 %v45, 15
  %v274 = vpop.permute.xlu0 %273
  %vm275 = vcmp.lt.s32.totalorder %v94, 15
  %v276 = vsel %vm275, %v260, %v268
  %v277 = vsel %vm275, %v262, %v270
  %v278 = vsel %vm275, %v264, %v272
  %v279 = vsel %vm275, %v266, %v274
  %v280 = vsel %vm275, %v252, %v260
  %v281 = vsel %vm275, %v254, %v262
  %v282 = vsel %vm275, %v256, %v264
  %v283 = vsel %vm275, %v258, %v266
  %v284 = vsel %vm275, %v244, %v252
  %v285 = vsel %vm275, %v246, %v254
  %v286 = vsel %vm275, %v248, %v256
  %v287 = vsel %vm275, %v250, %v258
  %v288 = vsel %vm275, %v268, %v244
  %v289 = vsel %vm275, %v270, %v246
  %v290 = vsel %vm275, %v272, %v248
  %v291 = vsel %vm275, %v274, %v250
  %v293 = vperm.slane %v50, 0
  %v294 = vperm.slane %v50, 1
  %v295 = vperm.slane %v50, 2
  %v296 = vperm.slane %v50, 3
  %v301 = vmul.f32 %v288, %v293
  %v302 = vmul.f32 %v284, %v294
  %v303 = vmul.f32 %v280, %v295
  %v304 = vmul.f32 %v276, %v296
  %v305 = vmul.f32 %v289, %v293
  %v306 = vmul.f32 %v285, %v294
  %v307 = vmul.f32 %v281, %v295
  %v308 = vmul.f32 %v277, %v296
  %v309 = vmul.f32 %v290, %v293
  %v310 = vmul.f32 %v286, %v294
  %v311 = vmul.f32 %v282, %v295
  %v312 = vmul.f32 %v278, %v296
  %v313 = vmul.f32 %v291, %v293
  %v314 = vmul.f32 %v287, %v294
  %v315 = vmul.f32 %v283, %v295
  %v316 = vmul.f32 %v279, %v296
  %v317 = vpack.c.bf16 %v302, %v301
  %v318 = vpack.c.bf16 %v304, %v303
  %v319 = vpack.c.bf16 %v306, %v305
  %v320 = vpack.c.bf16 %v308, %v307
  %v321 = vpack.c.bf16 %v310, %v309
  %v322 = vpack.c.bf16 %v312, %v311
  %v323 = vpack.c.bf16 %v314, %v313
  %v324 = vpack.c.bf16 %v316, %v315
  %325 = vst [vmem:[#allocation2 + $0x80] sm:$0xff] %v317
  %326 = vst [vmem:[#allocation2 + $0x88] sm:$0xff] %v318
  %327 = vst [vmem:[#allocation2 + $0x90] sm:$0xff] %v319
  %328 = vst [vmem:[#allocation2 + $0x98] sm:$0xff] %v320
  %329 = vst [vmem:[#allocation2 + $0xa0] sm:$0xff] %v321
  %330 = vst [vmem:[#allocation2 + $0xa8] sm:$0xff] %v322
  %331 = vst [vmem:[#allocation2 + $0xb0] sm:$0xff] %v323
  %332 = vst [vmem:[#allocation2 + $0xb8] sm:$0xff] %v324
  %333 = vrot.lane.b32.xlu0 %v30, 1
  %v334 = vpop.permute.xlu0 %333
  %335 = vrot.lane.b32.xlu0 %v34, 1
  %v336 = vpop.permute.xlu0 %335
  %337 = vrot.lane.b32.xlu0 %v38, 1
  %v338 = vpop.permute.xlu0 %337
  %339 = vrot.lane.b32.xlu0 %v42, 1
  %v340 = vpop.permute.xlu0 %339
  %341 = vrot.lane.b32.xlu0 %v31, 1
  %v342 = vpop.permute.xlu0 %341
  %343 = vrot.lane.b32.xlu0 %v35, 1
  %v344 = vpop.permute.xlu0 %343
  %345 = vrot.lane.b32.xlu0 %v39, 1
  %v346 = vpop.permute.xlu0 %345
  %347 = vrot.lane.b32.xlu0 %v43, 1
  %v348 = vpop.permute.xlu0 %347
  %349 = vrot.lane.b32.xlu0 %v32, 1
  %v350 = vpop.permute.xlu0 %349
  %351 = vrot.lane.b32.xlu0 %v36, 1
  %v352 = vpop.permute.xlu0 %351
  %353 = vrot.lane.b32.xlu0 %v40, 1
  %v354 = vpop.permute.xlu0 %353
  %355 = vrot.lane.b32.xlu0 %v44, 1
  %v356 = vpop.permute.xlu0 %355
  %357 = vrot.lane.b32.xlu0 %v33, 1
  %v358 = vpop.permute.xlu0 %357
  %359 = vrot.lane.b32.xlu0 %v37, 1
  %v360 = vpop.permute.xlu0 %359
  %361 = vrot.lane.b32.xlu0 %v41, 1
  %v362 = vpop.permute.xlu0 %361
  %363 = vrot.lane.b32.xlu0 %v45, 1
  %v364 = vpop.permute.xlu0 %363
  %vm365 = vcmp.lt.s32.totalorder %v94, 1
  %v366 = vsel %vm365, %v350, %v358
  %v367 = vsel %vm365, %v352, %v360
  %v368 = vsel %vm365, %v354, %v362
  %v369 = vsel %vm365, %v356, %v364
  %v370 = vsel %vm365, %v342, %v350
  %v371 = vsel %vm365, %v344, %v352
  %v372 = vsel %vm365, %v346, %v354
  %v373 = vsel %vm365, %v348, %v356
  %v374 = vsel %vm365, %v334, %v342
  %v375 = vsel %vm365, %v336, %v344
  %v376 = vsel %vm365, %v338, %v346
  %v377 = vsel %vm365, %v340, %v348
  %v378 = vsel %vm365, %v358, %v334
  %v379 = vsel %vm365, %v360, %v336
  %v380 = vsel %vm365, %v362, %v338
  %v381 = vsel %vm365, %v364, %v340
  %v383 = vperm.slane %v52, 0
  %v384 = vperm.slane %v52, 1
  %v385 = vperm.slane %v52, 2
  %v386 = vperm.slane %v52, 3
  %v391 = vmul.f32 %v378, %v383
  %v392 = vmul.f32 %v374, %v384
  %v393 = vmul.f32 %v370, %v385
  %v394 = vmul.f32 %v366, %v386
  %v395 = vmul.f32 %v379, %v383
  %v396 = vmul.f32 %v375, %v384
  %v397 = vmul.f32 %v371, %v385
  %v398 = vmul.f32 %v367, %v386
  %v399 = vmul.f32 %v380, %v383
  %v400 = vmul.f32 %v376, %v384
  %v401 = vmul.f32 %v372, %v385
  %v402 = vmul.f32 %v368, %v386
  %v403 = vmul.f32 %v381, %v383
  %v404 = vmul.f32 %v377, %v384
  %v405 = vmul.f32 %v373, %v385
  %v406 = vmul.f32 %v369, %v386
  %v407 = vpack.c.bf16 %v392, %v391
  %v408 = vpack.c.bf16 %v394, %v393
  %v409 = vpack.c.bf16 %v396, %v395
  %v410 = vpack.c.bf16 %v398, %v397
  %v411 = vpack.c.bf16 %v400, %v399
  %v412 = vpack.c.bf16 %v402, %v401
  %v413 = vpack.c.bf16 %v404, %v403
  %v414 = vpack.c.bf16 %v406, %v405
  %415 = vst [vmem:[#allocation2 + $0xc0] sm:$0xff] %v407
  %416 = vst [vmem:[#allocation2 + $0xc8] sm:$0xff] %v408
  %417 = vst [vmem:[#allocation2 + $0xd0] sm:$0xff] %v409
  %418 = vst [vmem:[#allocation2 + $0xd8] sm:$0xff] %v410
  %419 = vst [vmem:[#allocation2 + $0xe0] sm:$0xff] %v411
  %420 = vst [vmem:[#allocation2 + $0xe8] sm:$0xff] %v412
  %421 = vst [vmem:[#allocation2 + $0xf0] sm:$0xff] %v413
  %422 = vst [vmem:[#allocation2 + $0xf8] sm:$0xff] %v414
  %v423 = vpack.c.bf16 %v31, %v30
  %v424 = vpack.c.bf16 %v33, %v32
  %v425 = vpack.c.bf16 %v35, %v34
  %v426 = vpack.c.bf16 %v37, %v36
  %v427 = vpack.c.bf16 %v39, %v38
  %v428 = vpack.c.bf16 %v41, %v40
  %v429 = vpack.c.bf16 %v43, %v42
  %v430 = vpack.c.bf16 %v45, %v44
  %431 = vst [vmem:[#allocation2 + $0x100] sm:$0xff] %v423
  %432 = vst [vmem:[#allocation2 + $0x108] sm:$0xff] %v424
  %433 = vst [vmem:[#allocation2 + $0x110] sm:$0xff] %v425
  %434 = vst [vmem:[#allocation2 + $0x118] sm:$0xff] %v426
  %435 = vst [vmem:[#allocation2 + $0x120] sm:$0xff] %v427
  %436 = vst [vmem:[#allocation2 + $0x128] sm:$0xff] %v428
  %437 = vst [vmem:[#allocation2 + $0x130] sm:$0xff] %v429
  %438 = vst [vmem:[#allocation2 + $0x138] sm:$0xff] %v430
  %439 = vrot.lane.b32.xlu0 %v30, 127
  %v440 = vpop.permute.xlu0 %439
  %441 = vrot.lane.b32.xlu0 %v34, 127
  %v442 = vpop.permute.xlu0 %441
  %443 = vrot.lane.b32.xlu0 %v38, 127
  %v444 = vpop.permute.xlu0 %443
  %445 = vrot.lane.b32.xlu0 %v42, 127
  %v446 = vpop.permute.xlu0 %445
  %447 = vrot.lane.b32.xlu0 %v31, 127
  %v448 = vpop.permute.xlu0 %447
  %449 = vrot.lane.b32.xlu0 %v35, 127
  %v450 = vpop.permute.xlu0 %449
  %451 = vrot.lane.b32.xlu0 %v39, 127
  %v452 = vpop.permute.xlu0 %451
  %453 = vrot.lane.b32.xlu0 %v43, 127
  %v454 = vpop.permute.xlu0 %453
  %455 = vrot.lane.b32.xlu0 %v32, 127
  %v456 = vpop.permute.xlu0 %455
  %457 = vrot.lane.b32.xlu0 %v36, 127
  %v458 = vpop.permute.xlu0 %457
  %459 = vrot.lane.b32.xlu0 %v40, 127
  %v460 = vpop.permute.xlu0 %459
  %461 = vrot.lane.b32.xlu0 %v44, 127
  %v462 = vpop.permute.xlu0 %461
  %463 = vrot.lane.b32.xlu0 %v33, 127
  %v464 = vpop.permute.xlu0 %463
  %465 = vrot.lane.b32.xlu0 %v37, 127
  %v466 = vpop.permute.xlu0 %465
  %467 = vrot.lane.b32.xlu0 %v41, 127
  %v468 = vpop.permute.xlu0 %467
  %469 = vrot.lane.b32.xlu0 %v45, 127
  %v470 = vpop.permute.xlu0 %469
  %vm471 = vcmp.lt.s32.totalorder %v94, 127
  %v472 = vsel %vm471, %v456, %v464
  %v473 = vsel %vm471, %v458, %v466
  %v474 = vsel %vm471, %v460, %v468
  %v475 = vsel %vm471, %v462, %v470
  %v476 = vsel %vm471, %v448, %v456
  %v477 = vsel %vm471, %v450, %v458
  %v478 = vsel %vm471, %v452, %v460
  %v479 = vsel %vm471, %v454, %v462
  %v480 = vsel %vm471, %v440, %v448
  %v481 = vsel %vm471, %v442, %v450
  %v482 = vsel %vm471, %v444, %v452
  %v483 = vsel %vm471, %v446, %v454
  %v484 = vsel %vm471, %v464, %v440
  %v485 = vsel %vm471, %v466, %v442
  %v486 = vsel %vm471, %v468, %v444
  %v487 = vsel %vm471, %v470, %v446
  %v489 = vperm.slane %v54, 0
  %v490 = vperm.slane %v54, 1
  %v491 = vperm.slane %v54, 2
  %v492 = vperm.slane %v54, 3
  %v497 = vmul.f32 %v480, %v489
  %v498 = vmul.f32 %v476, %v490
  %v499 = vmul.f32 %v472, %v491
  %v500 = vmul.f32 %v484, %v492
  %v501 = vmul.f32 %v481, %v489
  %v502 = vmul.f32 %v477, %v490
  %v503 = vmul.f32 %v473, %v491
  %v504 = vmul.f32 %v485, %v492
  %v505 = vmul.f32 %v482, %v489
  %v506 = vmul.f32 %v478, %v490
  %v507 = vmul.f32 %v474, %v491
  %v508 = vmul.f32 %v486, %v492
  %v509 = vmul.f32 %v483, %v489
  %v510 = vmul.f32 %v479, %v490
  %v511 = vmul.f32 %v475, %v491
  %v512 = vmul.f32 %v487, %v492
  %v513 = vpack.c.bf16 %v498, %v497
  %v514 = vpack.c.bf16 %v500, %v499
  %v515 = vpack.c.bf16 %v502, %v501
  %v516 = vpack.c.bf16 %v504, %v503
  %v517 = vpack.c.bf16 %v506, %v505
  %v518 = vpack.c.bf16 %v508, %v507
  %v519 = vpack.c.bf16 %v510, %v509
  %v520 = vpack.c.bf16 %v512, %v511
  %521 = vst [vmem:[#allocation2 + $0x140] sm:$0xff] %v513
  %522 = vst [vmem:[#allocation2 + $0x148] sm:$0xff] %v514
  %523 = vst [vmem:[#allocation2 + $0x150] sm:$0xff] %v515
  %524 = vst [vmem:[#allocation2 + $0x158] sm:$0xff] %v516
  %525 = vst [vmem:[#allocation2 + $0x160] sm:$0xff] %v517
  %526 = vst [vmem:[#allocation2 + $0x168] sm:$0xff] %v518
  %527 = vst [vmem:[#allocation2 + $0x170] sm:$0xff] %v519
  %528 = vst [vmem:[#allocation2 + $0x178] sm:$0xff] %v520
  %529 = vrot.lane.b32.xlu0 %v30, 113
  %v530 = vpop.permute.xlu0 %529
  %531 = vrot.lane.b32.xlu0 %v34, 113
  %v532 = vpop.permute.xlu0 %531
  %533 = vrot.lane.b32.xlu0 %v38, 113
  %v534 = vpop.permute.xlu0 %533
  %535 = vrot.lane.b32.xlu0 %v42, 113
  %v536 = vpop.permute.xlu0 %535
  %537 = vrot.lane.b32.xlu0 %v31, 113
  %v538 = vpop.permute.xlu0 %537
  %539 = vrot.lane.b32.xlu0 %v35, 113
  %v540 = vpop.permute.xlu0 %539
  %541 = vrot.lane.b32.xlu0 %v39, 113
  %v542 = vpop.permute.xlu0 %541
  %543 = vrot.lane.b32.xlu0 %v43, 113
  %v544 = vpop.permute.xlu0 %543
  %545 = vrot.lane.b32.xlu0 %v32, 113
  %v546 = vpop.permute.xlu0 %545
  %547 = vrot.lane.b32.xlu0 %v36, 113
  %v548 = vpop.permute.xlu0 %547
  %549 = vrot.lane.b32.xlu0 %v40, 113
  %v550 = vpop.permute.xlu0 %549
  %551 = vrot.lane.b32.xlu0 %v44, 113
  %v552 = vpop.permute.xlu0 %551
  %553 = vrot.lane.b32.xlu0 %v33, 113
  %v554 = vpop.permute.xlu0 %553
  %555 = vrot.lane.b32.xlu0 %v37, 113
  %v556 = vpop.permute.xlu0 %555
  %557 = vrot.lane.b32.xlu0 %v41, 113
  %v558 = vpop.permute.xlu0 %557
  %559 = vrot.lane.b32.xlu0 %v45, 113
  %v560 = vpop.permute.xlu0 %559
  %vm561 = vcmp.lt.s32.totalorder %v94, 113
  %v562 = vsel %vm561, %v546, %v554
  %v563 = vsel %vm561, %v548, %v556
  %v564 = vsel %vm561, %v550, %v558
  %v565 = vsel %vm561, %v552, %v560
  %v566 = vsel %vm561, %v538, %v546
  %v567 = vsel %vm561, %v540, %v548
  %v568 = vsel %vm561, %v542, %v550
  %v569 = vsel %vm561, %v544, %v552
  %v570 = vsel %vm561, %v530, %v538
  %v571 = vsel %vm561, %v532, %v540
  %v572 = vsel %vm561, %v534, %v542
  %v573 = vsel %vm561, %v536, %v544
  %v574 = vsel %vm561, %v554, %v530
  %v575 = vsel %vm561, %v556, %v532
  %v576 = vsel %vm561, %v558, %v534
  %v577 = vsel %vm561, %v560, %v536
  %v579 = vperm.slane %v56, 0
  %v580 = vperm.slane %v56, 1
  %v581 = vperm.slane %v56, 2
  %v582 = vperm.slane %v56, 3
  %v587 = vmul.f32 %v570, %v579
  %v588 = vmul.f32 %v566, %v580
  %v589 = vmul.f32 %v562, %v581
  %v590 = vmul.f32 %v574, %v582
  %v591 = vmul.f32 %v571, %v579
  %v592 = vmul.f32 %v567, %v580
  %v593 = vmul.f32 %v563, %v581
  %v594 = vmul.f32 %v575, %v582
  %v595 = vmul.f32 %v572, %v579
  %v596 = vmul.f32 %v568, %v580
  %v597 = vmul.f32 %v564, %v581
  %v598 = vmul.f32 %v576, %v582
  %v599 = vmul.f32 %v573, %v579
  %v600 = vmul.f32 %v569, %v580
  %v601 = vmul.f32 %v565, %v581
  %v602 = vmul.f32 %v577, %v582
  %v603 = vpack.c.bf16 %v588, %v587
  %v604 = vpack.c.bf16 %v590, %v589
  %v605 = vpack.c.bf16 %v592, %v591
  %v606 = vpack.c.bf16 %v594, %v593
  %v607 = vpack.c.bf16 %v596, %v595
  %v608 = vpack.c.bf16 %v598, %v597
  %v609 = vpack.c.bf16 %v600, %v599
  %v610 = vpack.c.bf16 %v602, %v601
  %611 = vst [vmem:[#allocation2 + $0x180] sm:$0xff] %v603
  %612 = vst [vmem:[#allocation2 + $0x188] sm:$0xff] %v604
  %613 = vst [vmem:[#allocation2 + $0x190] sm:$0xff] %v605
  %614 = vst [vmem:[#allocation2 + $0x198] sm:$0xff] %v606
  %615 = vst [vmem:[#allocation2 + $0x1a0] sm:$0xff] %v607
  %616 = vst [vmem:[#allocation2 + $0x1a8] sm:$0xff] %v608
  %617 = vst [vmem:[#allocation2 + $0x1b0] sm:$0xff] %v609
  %618 = vst [vmem:[#allocation2 + $0x1b8] sm:$0xff] %v610
  %619 = vrot.lane.b32.xlu0 %v30, 112
  %v620 = vpop.permute.xlu0 %619
  %621 = vrot.lane.b32.xlu0 %v34, 112
  %v622 = vpop.permute.xlu0 %621
  %623 = vrot.lane.b32.xlu0 %v38, 112
  %v624 = vpop.permute.xlu0 %623
  %625 = vrot.lane.b32.xlu0 %v42, 112
  %v626 = vpop.permute.xlu0 %625
  %627 = vrot.lane.b32.xlu0 %v31, 112
  %v628 = vpop.permute.xlu0 %627
  %629 = vrot.lane.b32.xlu0 %v35, 112
  %v630 = vpop.permute.xlu0 %629
  %631 = vrot.lane.b32.xlu0 %v39, 112
  %v632 = vpop.permute.xlu0 %631
  %633 = vrot.lane.b32.xlu0 %v43, 112
  %v634 = vpop.permute.xlu0 %633
  %635 = vrot.lane.b32.xlu0 %v32, 112
  %v636 = vpop.permute.xlu0 %635
  %637 = vrot.lane.b32.xlu0 %v36, 112
  %v638 = vpop.permute.xlu0 %637
  %639 = vrot.lane.b32.xlu0 %v40, 112
  %v640 = vpop.permute.xlu0 %639
  %641 = vrot.lane.b32.xlu0 %v44, 112
  %v642 = vpop.permute.xlu0 %641
  %643 = vrot.lane.b32.xlu0 %v33, 112
  %v644 = vpop.permute.xlu0 %643
  %645 = vrot.lane.b32.xlu0 %v37, 112
  %v646 = vpop.permute.xlu0 %645
  %647 = vrot.lane.b32.xlu0 %v41, 112
  %v648 = vpop.permute.xlu0 %647
  %649 = vrot.lane.b32.xlu0 %v45, 112
  %v650 = vpop.permute.xlu0 %649
  %vm651 = vcmp.lt.s32.totalorder %v94, 112
  %v652 = vsel %vm651, %v636, %v644
  %v653 = vsel %vm651, %v638, %v646
  %v654 = vsel %vm651, %v640, %v648
  %v655 = vsel %vm651, %v642, %v650
  %v656 = vsel %vm651, %v628, %v636
  %v657 = vsel %vm651, %v630, %v638
  %v658 = vsel %vm651, %v632, %v640
  %v659 = vsel %vm651, %v634, %v642
  %v660 = vsel %vm651, %v620, %v628
  %v661 = vsel %vm651, %v622, %v630
  %v662 = vsel %vm651, %v624, %v632
  %v663 = vsel %vm651, %v626, %v634
  %v664 = vsel %vm651, %v644, %v620
  %v665 = vsel %vm651, %v646, %v622
  %v666 = vsel %vm651, %v648, %v624
  %v667 = vsel %vm651, %v650, %v626
  %v669 = vperm.slane %v58, 0
  %v670 = vperm.slane %v58, 1
  %v671 = vperm.slane %v58, 2
  %v672 = vperm.slane %v58, 3
  %v677 = vmul.f32 %v660, %v669
  %v678 = vmul.f32 %v656, %v670
  %v679 = vmul.f32 %v652, %v671
  %v680 = vmul.f32 %v664, %v672
  %v681 = vmul.f32 %v661, %v669
  %v682 = vmul.f32 %v657, %v670
  %v683 = vmul.f32 %v653, %v671
  %v684 = vmul.f32 %v665, %v672
  %v685 = vmul.f32 %v662, %v669
  %v686 = vmul.f32 %v658, %v670
  %v687 = vmul.f32 %v654, %v671
  %v688 = vmul.f32 %v666, %v672
  %v689 = vmul.f32 %v663, %v669
  %v690 = vmul.f32 %v659, %v670
  %v691 = vmul.f32 %v655, %v671
  %v692 = vmul.f32 %v667, %v672
  %v693 = vpack.c.bf16 %v678, %v677
  %v694 = vpack.c.bf16 %v680, %v679
  %v695 = vpack.c.bf16 %v682, %v681
  %v696 = vpack.c.bf16 %v684, %v683
  %v697 = vpack.c.bf16 %v686, %v685
  %v698 = vpack.c.bf16 %v688, %v687
  %v699 = vpack.c.bf16 %v690, %v689
  %v700 = vpack.c.bf16 %v692, %v691
  %701 = vst [vmem:[#allocation2 + $0x1c0] sm:$0xff] %v693
  %702 = vst [vmem:[#allocation2 + $0x1c8] sm:$0xff] %v694
  %703 = vst [vmem:[#allocation2 + $0x1d0] sm:$0xff] %v695
  %704 = vst [vmem:[#allocation2 + $0x1d8] sm:$0xff] %v696
  %705 = vst [vmem:[#allocation2 + $0x1e0] sm:$0xff] %v697
  %706 = vst [vmem:[#allocation2 + $0x1e8] sm:$0xff] %v698
  %707 = vst [vmem:[#allocation2 + $0x1f0] sm:$0xff] %v699
  %708 = vst [vmem:[#allocation2 + $0x1f8] sm:$0xff] %v700
  %709 = vrot.lane.b32.xlu0 %v30, 111
  %v710 = vpop.permute.xlu0 %709
  %711 = vrot.lane.b32.xlu0 %v34, 111
  %v712 = vpop.permute.xlu0 %711
  %713 = vrot.lane.b32.xlu0 %v38, 111
  %v714 = vpop.permute.xlu0 %713
  %715 = vrot.lane.b32.xlu0 %v42, 111
  %v716 = vpop.permute.xlu0 %715
  %717 = vrot.lane.b32.xlu0 %v31, 111
  %v718 = vpop.permute.xlu0 %717
  %719 = vrot.lane.b32.xlu0 %v35, 111
  %v720 = vpop.permute.xlu0 %719
  %721 = vrot.lane.b32.xlu0 %v39, 111
  %v722 = vpop.permute.xlu0 %721
  %723 = vrot.lane.b32.xlu0 %v43, 111
  %v724 = vpop.permute.xlu0 %723
  %725 = vrot.lane.b32.xlu0 %v32, 111
  %v726 = vpop.permute.xlu0 %725
  %727 = vrot.lane.b32.xlu0 %v36, 111
  %v728 = vpop.permute.xlu0 %727
  %729 = vrot.lane.b32.xlu0 %v40, 111
  %v730 = vpop.permute.xlu0 %729
  %731 = vrot.lane.b32.xlu0 %v44, 111
  %v732 = vpop.permute.xlu0 %731
  %733 = vrot.lane.b32.xlu0 %v33, 111
  %v734 = vpop.permute.xlu0 %733
  %735 = vrot.lane.b32.xlu0 %v37, 111
  %v736 = vpop.permute.xlu0 %735
  %737 = vrot.lane.b32.xlu0 %v41, 111
  %v738 = vpop.permute.xlu0 %737
  %739 = vrot.lane.b32.xlu0 %v45, 111
  %v740 = vpop.permute.xlu0 %739
  %vm741 = vcmp.lt.s32.totalorder %v94, 111
  %v742 = vsel %vm741, %v726, %v734
  %v743 = vsel %vm741, %v728, %v736
  %v744 = vsel %vm741, %v730, %v738
  %v745 = vsel %vm741, %v732, %v740
  %v746 = vsel %vm741, %v718, %v726
  %v747 = vsel %vm741, %v720, %v728
  %v748 = vsel %vm741, %v722, %v730
  %v749 = vsel %vm741, %v724, %v732
  %v750 = vsel %vm741, %v710, %v718
  %v751 = vsel %vm741, %v712, %v720
  %v752 = vsel %vm741, %v714, %v722
  %v753 = vsel %vm741, %v716, %v724
  %v754 = vsel %vm741, %v734, %v710
  %v755 = vsel %vm741, %v736, %v712
  %v756 = vsel %vm741, %v738, %v714
  %v757 = vsel %vm741, %v740, %v716
  %v759 = vperm.slane %v60, 0
  %v760 = vperm.slane %v60, 1
  %v761 = vperm.slane %v60, 2
  %v762 = vperm.slane %v60, 3
  %v767 = vmul.f32 %v750, %v759
  %v768 = vmul.f32 %v746, %v760
  %v769 = vmul.f32 %v742, %v761
  %v770 = vmul.f32 %v754, %v762
  %v771 = vmul.f32 %v751, %v759
  %v772 = vmul.f32 %v747, %v760
  %v773 = vmul.f32 %v743, %v761
  %v774 = vmul.f32 %v755, %v762
  %v775 = vmul.f32 %v752, %v759
  %v776 = vmul.f32 %v748, %v760
  %v777 = vmul.f32 %v744, %v761
  %v778 = vmul.f32 %v756, %v762
  %v779 = vmul.f32 %v753, %v759
  %v780 = vmul.f32 %v749, %v760
  %v781 = vmul.f32 %v745, %v761
  %v782 = vmul.f32 %v757, %v762
  %v783 = vpack.c.bf16 %v768, %v767
  %v784 = vpack.c.bf16 %v770, %v769
  %v785 = vpack.c.bf16 %v772, %v771
  %v786 = vpack.c.bf16 %v774, %v773
  %v787 = vpack.c.bf16 %v776, %v775
  %v788 = vpack.c.bf16 %v778, %v777
  %v789 = vpack.c.bf16 %v780, %v779
  %v790 = vpack.c.bf16 %v782, %v781
  %791 = vst [vmem:[#allocation2 + $0x200] sm:$0xff] %v783
  %792 = vst [vmem:[#allocation2 + $0x208] sm:$0xff] %v784
  %793 = vst [vmem:[#allocation2 + $0x210] sm:$0xff] %v785
  %794 = vst [vmem:[#allocation2 + $0x218] sm:$0xff] %v786
  %795 = vst [vmem:[#allocation2 + $0x220] sm:$0xff] %v787
  %796 = vst [vmem:[#allocation2 + $0x228] sm:$0xff] %v788
  %797 = vst [vmem:[#allocation2 + $0x230] sm:$0xff] %v789
  %798 = vst [vmem:[#allocation2 + $0x238] sm:$0xff] %v790
  %v799 = vld [vmem:[%s2] sm:$0xff]
  %v800 = vld [vmem:[%s2 + $0x8] sm:$0xf]
  %v801 = vld [vmem:[%s2 + $0xc] sm:$0xff]
  %v802 = vld [vmem:[%s2 + $0x14] sm:$0xf]
  %v803 = vld [vmem:[%s2 + $0x18] sm:$0xff]
  %v804 = vld [vmem:[%s2 + $0x20] sm:$0xf]
  %v805 = vld [vmem:[%s2 + $0x24] sm:$0xff]
  %v806 = vld [vmem:[%s2 + $0x2c] sm:$0xf]
  %v807 = vld [vmem:[#allocation2] sm:$0xff]
  %v808 = vld [vmem:[#allocation2 + $0x8] sm:$0xff]
  %v809 = vld [vmem:[#allocation2 + $0x10] sm:$0xff]
  %v810 = vld [vmem:[#allocation2 + $0x18] sm:$0xff]
  %v811 = vld [vmem:[#allocation2 + $0x20] sm:$0xff]
  %v812 = vld [vmem:[#allocation2 + $0x28] sm:$0xff]
  %v813 = vld [vmem:[#allocation2 + $0x30] sm:$0xff]
  %v814 = vld [vmem:[#allocation2 + $0x38] sm:$0xff]
  %v815 = vld [vmem:[#allocation2 + $0x40] sm:$0xff]
  %v816 = vld [vmem:[#allocation2 + $0x48] sm:$0xff]
  %v817 = vld [vmem:[#allocation2 + $0x50] sm:$0xff]
  %v818 = vld [vmem:[#allocation2 + $0x58] sm:$0xff]
  %v819 = vld [vmem:[#allocation2 + $0x60] sm:$0xff]
  %v820 = vld [vmem:[#allocation2 + $0x68] sm:$0xff]
  %v821 = vld [vmem:[#allocation2 + $0x70] sm:$0xff]
  %v822 = vld [vmem:[#allocation2 + $0x78] sm:$0xff]
  %v823 = vld [vmem:[#allocation2 + $0x80] sm:$0xff]
  %v824 = vld [vmem:[#allocation2 + $0x88] sm:$0xff]
  %v825 = vld [vmem:[#allocation2 + $0x90] sm:$0xff]
  %v826 = vld [vmem:[#allocation2 + $0x98] sm:$0xff]
  %v827 = vld [vmem:[#allocation2 + $0xa0] sm:$0xff]
  %v828 = vld [vmem:[#allocation2 + $0xa8] sm:$0xff]
  %v829 = vld [vmem:[#allocation2 + $0xb0] sm:$0xff]
  %v830 = vld [vmem:[#allocation2 + $0xb8] sm:$0xff]
  %v831 = vld [vmem:[#allocation2 + $0xc0] sm:$0xff]
  %v832 = vld [vmem:[#allocation2 + $0xc8] sm:$0xff]
  %v833 = vld [vmem:[#allocation2 + $0xd0] sm:$0xff]
  %v834 = vld [vmem:[#allocation2 + $0xd8] sm:$0xff]
  %v835 = vld [vmem:[#allocation2 + $0xe0] sm:$0xff]
  %v836 = vld [vmem:[#allocation2 + $0xe8] sm:$0xff]
  %v837 = vld [vmem:[#allocation2 + $0xf0] sm:$0xff]
  %v838 = vld [vmem:[#allocation2 + $0xf8] sm:$0xff]
  %v839 = vld [vmem:[#allocation2 + $0x100] sm:$0xff]
  %v840 = vld [vmem:[#allocation2 + $0x108] sm:$0xff]
  %v841 = vld [vmem:[#allocation2 + $0x110] sm:$0xff]
  %v842 = vld [vmem:[#allocation2 + $0x118] sm:$0xff]
  %v843 = vld [vmem:[#allocation2 + $0x120] sm:$0xff]
  %v844 = vld [vmem:[#allocation2 + $0x128] sm:$0xff]
  %v845 = vld [vmem:[#allocation2 + $0x130] sm:$0xff]
  %v846 = vld [vmem:[#allocation2 + $0x138] sm:$0xff]
  %v847 = vld [vmem:[#allocation2 + $0x140] sm:$0xff]
  %v848 = vld [vmem:[#allocation2 + $0x148] sm:$0xff]
  %v849 = vld [vmem:[#allocation2 + $0x150] sm:$0xff]
  %v850 = vld [vmem:[#allocation2 + $0x158] sm:$0xff]
  %v851 = vld [vmem:[#allocation2 + $0x160] sm:$0xff]
  %v852 = vld [vmem:[#allocation2 + $0x168] sm:$0xff]
  %v853 = vld [vmem:[#allocation2 + $0x170] sm:$0xff]
  %v854 = vld [vmem:[#allocation2 + $0x178] sm:$0xff]
  %v855 = vld [vmem:[#allocation2 + $0x180] sm:$0xff]
  %v856 = vld [vmem:[#allocation2 + $0x188] sm:$0xff]
  %v857 = vld [vmem:[#allocation2 + $0x190] sm:$0xff]
  %v858 = vld [vmem:[#allocation2 + $0x198] sm:$0xff]
  %v859 = vld [vmem:[#allocation2 + $0x1a0] sm:$0xff]
  %v860 = vld [vmem:[#allocation2 + $0x1a8] sm:$0xff]
  %v861 = vld [vmem:[#allocation2 + $0x1b0] sm:$0xff]
  %v862 = vld [vmem:[#allocation2 + $0x1b8] sm:$0xff]
  %v863 = vld [vmem:[#allocation2 + $0x1c0] sm:$0xff]
  %v864 = vld [vmem:[#allocation2 + $0x1c8] sm:$0xff]
  %v865 = vld [vmem:[#allocation2 + $0x1d0] sm:$0xff]
  %v866 = vld [vmem:[#allocation2 + $0x1d8] sm:$0xff]
  %v867 = vld [vmem:[#allocation2 + $0x1e0] sm:$0xff]
  %v868 = vld [vmem:[#allocation2 + $0x1e8] sm:$0xff]
  %v869 = vld [vmem:[#allocation2 + $0x1f0] sm:$0xff]
  %v870 = vld [vmem:[#allocation2 + $0x1f8] sm:$0xff]
  %v871 = vld [vmem:[#allocation2 + $0x200] sm:$0xff]
  %v872 = vld [vmem:[#allocation2 + $0x208] sm:$0xff]
  %v873 = vld [vmem:[#allocation2 + $0x210] sm:$0xff]
  %v874 = vld [vmem:[#allocation2 + $0x218] sm:$0xff]
  %v875 = vld [vmem:[#allocation2 + $0x220] sm:$0xff]
  %v876 = vld [vmem:[#allocation2 + $0x228] sm:$0xff]
  %v877 = vld [vmem:[#allocation2 + $0x230] sm:$0xff]
  %v878 = vld [vmem:[#allocation2 + $0x238] sm:$0xff]
  %v879 = vld [vmem:[%s3] sm:$0xff]
  %v880 = vld [vmem:[%s3 + $0x8] sm:$0xff]
  %v881 = vld [vmem:[%s3 + $0x10] sm:$0xff]
  %v882 = vld [vmem:[%s3 + $0x18] sm:$0xff]
  %884 = vset.pattern.permute.xlu0 0
  %885 = vperm.xlu0 %884, %v879
  %v886 = vpop.permute.xlu0 %885
  %889 = vset.pattern.permute.xlu0 0
  %890 = vperm.xlu0 %889, %v880
  %v891 = vpop.permute.xlu0 %890
  %894 = vset.pattern.permute.xlu0 0
  %895 = vperm.xlu0 %894, %v881
  %v896 = vpop.permute.xlu0 %895
  %899 = vset.pattern.permute.xlu0 0
  %900 = vperm.xlu0 %899, %v882
  %v901 = vpop.permute.xlu0 %900
  %v911 = vunpack.c.l.b16 %v799
  %v912 = vunpack.c.h.b16 %v799
  %v913 = vunpack.c.l.b16 %v800
  %v914 = vunpack.c.l.b16 %v801
  %v915 = vunpack.c.h.b16 %v801
  %v916 = vunpack.c.l.b16 %v802
  %v917 = vunpack.c.l.b16 %v803
  %v918 = vunpack.c.h.b16 %v803
  %v919 = vunpack.c.l.b16 %v804
  %v920 = vunpack.c.l.b16 %v805
  %v921 = vunpack.c.h.b16 %v805
  %v922 = vunpack.c.l.b16 %v806
  %v923 = vpack.c.b16 %v914, %v911
  %v924 = vpack.c.b16 %v915, %v912
  %v925 = vpack.c.b16 %v916, %v913
  %v926 = vpack.c.b16 %v920, %v917
  %v927 = vpack.c.b16 %v921, %v918
  %v928 = vpack.c.b16 %v922, %v919
  %v1005 = vunpack.c.l.b16 %v807
  %v1006 = vunpack.c.h.b16 %v807
  %v1007 = vunpack.c.l.b16 %v808
  %v1008 = vunpack.c.h.b16 %v808
  %v1009 = vunpack.c.l.b16 %v809
  %v1010 = vunpack.c.h.b16 %v809
  %v1011 = vunpack.c.l.b16 %v810
  %v1012 = vunpack.c.h.b16 %v810
  %v1013 = vunpack.c.l.b16 %v811
  %v1014 = vunpack.c.h.b16 %v811
  %v1015 = vunpack.c.l.b16 %v812
  %v1016 = vunpack.c.h.b16 %v812
  %v1017 = vunpack.c.l.b16 %v813
  %v1018 = vunpack.c.h.b16 %v813
  %v1019 = vunpack.c.l.b16 %v814
  %v1020 = vunpack.c.h.b16 %v814
  %v1021 = vunpack.c.l.b16 %v815
  %v1022 = vunpack.c.h.b16 %v815
  %v1023 = vunpack.c.l.b16 %v816
  %v1024 = vunpack.c.h.b16 %v816
  %v1025 = vunpack.c.l.b16 %v817
  %v1026 = vunpack.c.h.b16 %v817
  %v1027 = vunpack.c.l.b16 %v818
  %v1028 = vunpack.c.h.b16 %v818
  %v1029 = vunpack.c.l.b16 %v819
  %v1030 = vunpack.c.h.b16 %v819
  %v1031 = vunpack.c.l.b16 %v820
  %v1032 = vunpack.c.h.b16 %v820
  %v1033 = vunpack.c.l.b16 %v821
  %v1034 = vunpack.c.h.b16 %v821
  %v1035 = vunpack.c.l.b16 %v822
  %v1036 = vunpack.c.h.b16 %v822
  %v1037 = vunpack.c.l.b16 %v823
  %v1038 = vunpack.c.h.b16 %v823
  %v1039 = vunpack.c.l.b16 %v824
  %v1040 = vunpack.c.h.b16 %v824
  %v1041 = vunpack.c.l.b16 %v825
  %v1042 = vunpack.c.h.b16 %v825
  %v1043 = vunpack.c.l.b16 %v826
  %v1044 = vunpack.c.h.b16 %v826
  %v1045 = vunpack.c.l.b16 %v827
  %v1046 = vunpack.c.h.b16 %v827
  %v1047 = vunpack.c.l.b16 %v828
  %v1048 = vunpack.c.h.b16 %v828
  %v1049 = vunpack.c.l.b16 %v829
  %v1050 = vunpack.c.h.b16 %v829
  %v1051 = vunpack.c.l.b16 %v830
  %v1052 = vunpack.c.h.b16 %v830
  %v1053 = vunpack.c.l.b16 %v831
  %v1054 = vunpack.c.h.b16 %v831
  %v1055 = vunpack.c.l.b16 %v832
  %v1056 = vunpack.c.h.b16 %v832
  %v1057 = vunpack.c.l.b16 %v833
  %v1058 = vunpack.c.h.b16 %v833
  %v1059 = vunpack.c.l.b16 %v834
  %v1060 = vunpack.c.h.b16 %v834
  %v1061 = vunpack.c.l.b16 %v835
  %v1062 = vunpack.c.h.b16 %v835
  %v1063 = vunpack.c.l.b16 %v836
  %v1064 = vunpack.c.h.b16 %v836
  %v1065 = vunpack.c.l.b16 %v837
  %v1066 = vunpack.c.h.b16 %v837
  %v1067 = vunpack.c.l.b16 %v838
  %v1068 = vunpack.c.h.b16 %v838
  %v1069 = vunpack.c.l.b16 %v839
  %v1070 = vunpack.c.h.b16 %v839
  %v1071 = vunpack.c.l.b16 %v840
  %v1072 = vunpack.c.h.b16 %v840
  %v1073 = vunpack.c.l.b16 %v841
  %v1074 = vunpack.c.h.b16 %v841
  %v1075 = vunpack.c.l.b16 %v842
  %v1076 = vunpack.c.h.b16 %v842
  %v1077 = vunpack.c.l.b16 %v843
  %v1078 = vunpack.c.h.b16 %v843
  %v1079 = vunpack.c.l.b16 %v844
  %v1080 = vunpack.c.h.b16 %v844
  %v1081 = vunpack.c.l.b16 %v845
  %v1082 = vunpack.c.h.b16 %v845
  %v1083 = vunpack.c.l.b16 %v846
  %v1084 = vunpack.c.h.b16 %v846
  %v1085 = vunpack.c.l.b16 %v847
  %v1086 = vunpack.c.h.b16 %v847
  %v1087 = vunpack.c.l.b16 %v848
  %v1088 = vunpack.c.h.b16 %v848
  %v1089 = vunpack.c.l.b16 %v849
  %v1090 = vunpack.c.h.b16 %v849
  %v1091 = vunpack.c.l.b16 %v850
  %v1092 = vunpack.c.h.b16 %v850
  %v1093 = vunpack.c.l.b16 %v851
  %v1094 = vunpack.c.h.b16 %v851
  %v1095 = vunpack.c.l.b16 %v852
  %v1096 = vunpack.c.h.b16 %v852
  %v1097 = vunpack.c.l.b16 %v853
  %v1098 = vunpack.c.h.b16 %v853
  %v1099 = vunpack.c.l.b16 %v854
  %v1100 = vunpack.c.h.b16 %v854
  %v1101 = vunpack.c.l.b16 %v855
  %v1102 = vunpack.c.h.b16 %v855
  %v1103 = vunpack.c.l.b16 %v856
  %v1104 = vunpack.c.h.b16 %v856
  %v1105 = vunpack.c.l.b16 %v857
  %v1106 = vunpack.c.h.b16 %v857
  %v1107 = vunpack.c.l.b16 %v858
  %v1108 = vunpack.c.h.b16 %v858
  %v1109 = vunpack.c.l.b16 %v859
  %v1110 = vunpack.c.h.b16 %v859
  %v1111 = vunpack.c.l.b16 %v860
  %v1112 = vunpack.c.h.b16 %v860
  %v1113 = vunpack.c.l.b16 %v861
  %v1114 = vunpack.c.h.b16 %v861
  %v1115 = vunpack.c.l.b16 %v862
  %v1116 = vunpack.c.h.b16 %v862
  %v1117 = vunpack.c.l.b16 %v863
  %v1118 = vunpack.c.h.b16 %v863
  %v1119 = vunpack.c.l.b16 %v864
  %v1120 = vunpack.c.h.b16 %v864
  %v1121 = vunpack.c.l.b16 %v865
  %v1122 = vunpack.c.h.b16 %v865
  %v1123 = vunpack.c.l.b16 %v866
  %v1124 = vunpack.c.h.b16 %v866
  %v1125 = vunpack.c.l.b16 %v867
  %v1126 = vunpack.c.h.b16 %v867
  %v1127 = vunpack.c.l.b16 %v868
  %v1128 = vunpack.c.h.b16 %v868
  %v1129 = vunpack.c.l.b16 %v869
  %v1130 = vunpack.c.h.b16 %v869
  %v1131 = vunpack.c.l.b16 %v870
  %v1132 = vunpack.c.h.b16 %v870
  %v1133 = vunpack.c.l.b16 %v871
  %v1134 = vunpack.c.h.b16 %v871
  %v1135 = vunpack.c.l.b16 %v872
  %v1136 = vunpack.c.h.b16 %v872
  %v1137 = vunpack.c.l.b16 %v873
  %v1138 = vunpack.c.h.b16 %v873
  %v1139 = vunpack.c.l.b16 %v874
  %v1140 = vunpack.c.h.b16 %v874
  %v1141 = vunpack.c.l.b16 %v875
  %v1142 = vunpack.c.h.b16 %v875
  %v1143 = vunpack.c.l.b16 %v876
  %v1144 = vunpack.c.h.b16 %v876
  %v1145 = vunpack.c.l.b16 %v877
  %v1146 = vunpack.c.h.b16 %v877
  %v1147 = vunpack.c.l.b16 %v878
  %v1148 = vunpack.c.h.b16 %v878
  %v1149 = vpack.c.b16 %v1009, %v1005
  %v1150 = vpack.c.b16 %v1010, %v1006
  %v1151 = vpack.c.b16 %v1011, %v1007
  %v1152 = vpack.c.b16 %v1012, %v1008
  %v1153 = vpack.c.b16 %v1017, %v1013
  %v1154 = vpack.c.b16 %v1018, %v1014
  %v1155 = vpack.c.b16 %v1019, %v1015
  %v1156 = vpack.c.b16 %v1020, %v1016
  %v1157 = vpack.c.b16 %v1025, %v1021
  %v1158 = vpack.c.b16 %v1026, %v1022
  %v1159 = vpack.c.b16 %v1027, %v1023
  %v1160 = vpack.c.b16 %v1028, %v1024
  %v1161 = vpack.c.b16 %v1033, %v1029
  %v1162 = vpack.c.b16 %v1034, %v1030
  %v1163 = vpack.c.b16 %v1035, %v1031
  %v1164 = vpack.c.b16 %v1036, %v1032
  %v1165 = vpack.c.b16 %v1041, %v1037
  %v1166 = vpack.c.b16 %v1042, %v1038
  %v1167 = vpack.c.b16 %v1043, %v1039
  %v1168 = vpack.c.b16 %v1044, %v1040
  %v1169 = vpack.c.b16 %v1049, %v1045
  %v1170 = vpack.c.b16 %v1050, %v1046
  %v1171 = vpack.c.b16 %v1051, %v1047
  %v1172 = vpack.c.b16 %v1052, %v1048
  %v1173 = vpack.c.b16 %v1057, %v1053
  %v1174 = vpack.c.b16 %v1058, %v1054
  %v1175 = vpack.c.b16 %v1059, %v1055
  %v1176 = vpack.c.b16 %v1060, %v1056
  %v1177 = vpack.c.b16 %v1065, %v1061
  %v1178 = vpack.c.b16 %v1066, %v1062
  %v1179 = vpack.c.b16 %v1067, %v1063
  %v1180 = vpack.c.b16 %v1068, %v1064
  %v1181 = vpack.c.b16 %v1073, %v1069
  %v1182 = vpack.c.b16 %v1074, %v1070
  %v1183 = vpack.c.b16 %v1075, %v1071
  %v1184 = vpack.c.b16 %v1076, %v1072
  %v1185 = vpack.c.b16 %v1081, %v1077
  %v1186 = vpack.c.b16 %v1082, %v1078
  %v1187 = vpack.c.b16 %v1083, %v1079
  %v1188 = vpack.c.b16 %v1084, %v1080
  %v1189 = vpack.c.b16 %v1089, %v1085
  %v1190 = vpack.c.b16 %v1090, %v1086
  %v1191 = vpack.c.b16 %v1091, %v1087
  %v1192 = vpack.c.b16 %v1092, %v1088
  %v1193 = vpack.c.b16 %v1097, %v1093
  %v1194 = vpack.c.b16 %v1098, %v1094
  %v1195 = vpack.c.b16 %v1099, %v1095
  %v1196 = vpack.c.b16 %v1100, %v1096
  %v1197 = vpack.c.b16 %v1105, %v1101
  %v1198 = vpack.c.b16 %v1106, %v1102
  %v1199 = vpack.c.b16 %v1107, %v1103
  %v1200 = vpack.c.b16 %v1108, %v1104
  %v1201 = vpack.c.b16 %v1113, %v1109
  %v1202 = vpack.c.b16 %v1114, %v1110
  %v1203 = vpack.c.b16 %v1115, %v1111
  %v1204 = vpack.c.b16 %v1116, %v1112
  %v1205 = vpack.c.b16 %v1121, %v1117
  %v1206 = vpack.c.b16 %v1122, %v1118
  %v1207 = vpack.c.b16 %v1123, %v1119
  %v1208 = vpack.c.b16 %v1124, %v1120
  %v1209 = vpack.c.b16 %v1129, %v1125
  %v1210 = vpack.c.b16 %v1130, %v1126
  %v1211 = vpack.c.b16 %v1131, %v1127
  %v1212 = vpack.c.b16 %v1132, %v1128
  %v1213 = vpack.c.b16 %v1137, %v1133
  %v1214 = vpack.c.b16 %v1138, %v1134
  %v1215 = vpack.c.b16 %v1139, %v1135
  %v1216 = vpack.c.b16 %v1140, %v1136
  %v1217 = vpack.c.b16 %v1145, %v1141
  %v1218 = vpack.c.b16 %v1146, %v1142
  %v1219 = vpack.c.b16 %v1147, %v1143
  %v1220 = vpack.c.b16 %v1148, %v1144
  %vm1293 = vcmask 261120
  %v1295 = vsel %vm1293, %v925, 0
  %v1298 = vsel %vm1293, %v928, 0
  %1300 = vmatpush.bf16.msra.mxu0 %v1177
  %1301 = vmatpush.bf16.msra.mxu0 %v1173
  %1302 = vmatpush.bf16.msra.mxu0 %v1169
  %1303 = vmatpush.bf16.msra.mxu0 %v1165
  %1304 = vmatpush.bf16.msra.mxu0 %v1161
  %1305 = vmatpush.bf16.msra.mxu0 %v1157
  %1306 = vmatpush.bf16.msra.mxu0 %v1153
  %1307 = vmatpush.bf16.msra.mxu0 %v1149
  %1308 = vmatmul.bf16.gmra.mxu0 %v923
  %v1309 = vpop.f32.mrf.mxu0
  %v1310 = vadd.f32 %v886, %v1309
  %v1311 = vpop.f32.mrf.mxu0
  %v1312 = vadd.f32 %v891, %v1311
  %1313 = vmatmul.bf16.gmra.mxu0 %v926
  %v1314 = vpop.f32.mrf.mxu0
  %v1315 = vadd.f32 %v896, %v1314
  %v1316 = vpop.f32.mrf.mxu0
  %v1317 = vadd.f32 %v901, %v1316
  %1318 = vdwg.mxu0
  %1319 = vmatpush.bf16.msra.mxu0 %v1209
  %1320 = vmatpush.bf16.msra.mxu0 %v1205
  %1321 = vmatpush.bf16.msra.mxu0 %v1201
  %1322 = vmatpush.bf16.msra.mxu0 %v1197
  %1323 = vmatpush.bf16.msra.mxu0 %v1193
  %1324 = vmatpush.bf16.msra.mxu0 %v1189
  %1325 = vmatpush.bf16.msra.mxu0 %v1185
  %1326 = vmatpush.bf16.msra.mxu0 %v1181
  %1327 = vmatmul.bf16.gmra.mxu0 %v924
  %v1328 = vpop.f32.mrf.mxu0
  %v1329 = vadd.f32 %v1310, %v1328
  %v1330 = vpop.f32.mrf.mxu0
  %v1331 = vadd.f32 %v1312, %v1330
  %1332 = vmatmul.bf16.gmra.mxu0 %v927
  %v1333 = vpop.f32.mrf.mxu0
  %v1334 = vadd.f32 %v1315, %v1333
  %v1335 = vpop.f32.mrf.mxu0
  %v1336 = vadd.f32 %v1317, %v1335
  %1337 = vdwg.mxu0
  %1338 = vmatpush.bf16.msra.mxu0 0
  %1339 = vmatpush.bf16.msra.mxu0 0
  %1340 = vmatpush.bf16.msra.mxu0 0
  %1341 = vmatpush.bf16.msra.mxu0 0
  %1342 = vmatpush.bf16.msra.mxu0 0
  %1343 = vmatpush.bf16.msra.mxu0 0
  %1344 = vmatpush.bf16.msra.mxu0 %v1217
  %1345 = vmatpush.bf16.msra.mxu0 %v1213
  %1346 = vmatmul.bf16.gmra.mxu0 %v1295
  %v1347 = vpop.f32.mrf.mxu0
  %v1348 = vadd.f32 %v1329, %v1347
  %v1349 = vpop.f32.mrf.mxu0
  %v1350 = vadd.f32 %v1331, %v1349
  %1351 = vmatmul.bf16.gmra.mxu0 %v1298
  %v1352 = vpop.f32.mrf.mxu0
  %v1353 = vadd.f32 %v1334, %v1352
  %v1354 = vpop.f32.mrf.mxu0
  %v1355 = vadd.f32 %v1336, %v1354
  %1356 = vdwg.mxu0
  %1357 = vmatpush.bf16.msra.mxu0 %v1178
  %1358 = vmatpush.bf16.msra.mxu0 %v1174
  %1359 = vmatpush.bf16.msra.mxu0 %v1170
  %1360 = vmatpush.bf16.msra.mxu0 %v1166
  %1361 = vmatpush.bf16.msra.mxu0 %v1162
  %1362 = vmatpush.bf16.msra.mxu0 %v1158
  %1363 = vmatpush.bf16.msra.mxu0 %v1154
  %1364 = vmatpush.bf16.msra.mxu0 %v1150
  %1365 = vmatmul.bf16.gmra.mxu0 %v923
  %v1366 = vpop.f32.mrf.mxu0
  %v1367 = vadd.f32 %v886, %v1366
  %v1368 = vpop.f32.mrf.mxu0
  %v1369 = vadd.f32 %v891, %v1368
  %1370 = vmatmul.bf16.gmra.mxu0 %v926
  %v1371 = vpop.f32.mrf.mxu0
  %v1372 = vadd.f32 %v896, %v1371
  %v1373 = vpop.f32.mrf.mxu0
  %v1374 = vadd.f32 %v901, %v1373
  %1375 = vdwg.mxu0
  %1376 = vmatpush.bf16.msra.mxu0 %v1210
  %1377 = vmatpush.bf16.msra.mxu0 %v1206
  %1378 = vmatpush.bf16.msra.mxu0 %v1202
  %1379 = vmatpush.bf16.msra.mxu0 %v1198
  %1380 = vmatpush.bf16.msra.mxu0 %v1194
  %1381 = vmatpush.bf16.msra.mxu0 %v1190
  %1382 = vmatpush.bf16.msra.mxu0 %v1186
  %1383 = vmatpush.bf16.msra.mxu0 %v1182
  %1384 = vmatmul.bf16.gmra.mxu0 %v924
  %v1385 = vpop.f32.mrf.mxu0
  %v1386 = vadd.f32 %v1367, %v1385
  %v1387 = vpop.f32.mrf.mxu0
  %v1388 = vadd.f32 %v1369, %v1387
  %1389 = vmatmul.bf16.gmra.mxu0 %v927
  %v1390 = vpop.f32.mrf.mxu0
  %v1391 = vadd.f32 %v1372, %v1390
  %v1392 = vpop.f32.mrf.mxu0
  %v1393 = vadd.f32 %v1374, %v1392
  %1394 = vdwg.mxu0
  %1395 = vmatpush.bf16.msra.mxu0 0
  %1396 = vmatpush.bf16.msra.mxu0 0
  %1397 = vmatpush.bf16.msra.mxu0 0
  %1398 = vmatpush.bf16.msra.mxu0 0
  %1399 = vmatpush.bf16.msra.mxu0 0
  %1400 = vmatpush.bf16.msra.mxu0 0
  %1401 = vmatpush.bf16.msra.mxu0 %v1218
  %1402 = vmatpush.bf16.msra.mxu0 %v1214
  %1403 = vmatmul.bf16.gmra.mxu0 %v1295
  %v1404 = vpop.f32.mrf.mxu0
  %v1405 = vadd.f32 %v1386, %v1404
  %v1406 = vpop.f32.mrf.mxu0
  %v1407 = vadd.f32 %v1388, %v1406
  %1408 = vmatmul.bf16.gmra.mxu0 %v1298
  %v1409 = vpop.f32.mrf.mxu0
  %v1410 = vadd.f32 %v1391, %v1409
  %v1411 = vpop.f32.mrf.mxu0
  %v1412 = vadd.f32 %v1393, %v1411
  %1413 = vdwg.mxu0
  %1414 = vmatpush.bf16.msra.mxu0 %v1179
  %1415 = vmatpush.bf16.msra.mxu0 %v1175
  %1416 = vmatpush.bf16.msra.mxu0 %v1171
  %1417 = vmatpush.bf16.msra.mxu0 %v1167
  %1418 = vmatpush.bf16.msra.mxu0 %v1163
  %1419 = vmatpush.bf16.msra.mxu0 %v1159
  %1420 = vmatpush.bf16.msra.mxu0 %v1155
  %1421 = vmatpush.bf16.msra.mxu0 %v1151
  %1422 = vmatmul.bf16.gmra.mxu0 %v923
  %v1423 = vpop.f32.mrf.mxu0
  %v1424 = vadd.f32 %v886, %v1423
  %v1425 = vpop.f32.mrf.mxu0
  %v1426 = vadd.f32 %v891, %v1425
  %1427 = vmatmul.bf16.gmra.mxu0 %v926
  %v1428 = vpop.f32.mrf.mxu0
  %v1429 = vadd.f32 %v896, %v1428
  %v1430 = vpop.f32.mrf.mxu0
  %v1431 = vadd.f32 %v901, %v1430
  %1432 = vdwg.mxu0
  %1433 = vmatpush.bf16.msra.mxu0 %v1211
  %1434 = vmatpush.bf16.msra.mxu0 %v1207
  %1435 = vmatpush.bf16.msra.mxu0 %v1203
  %1436 = vmatpush.bf16.msra.mxu0 %v1199
  %1437 = vmatpush.bf16.msra.mxu0 %v1195
  %1438 = vmatpush.bf16.msra.mxu0 %v1191
  %1439 = vmatpush.bf16.msra.mxu0 %v1187
  %1440 = vmatpush.bf16.msra.mxu0 %v1183
  %1441 = vmatmul.bf16.gmra.mxu0 %v924
  %v1442 = vpop.f32.mrf.mxu0
  %v1443 = vadd.f32 %v1424, %v1442
  %v1444 = vpop.f32.mrf.mxu0
  %v1445 = vadd.f32 %v1426, %v1444
  %1446 = vmatmul.bf16.gmra.mxu0 %v927
  %v1447 = vpop.f32.mrf.mxu0
  %v1448 = vadd.f32 %v1429, %v1447
  %v1449 = vpop.f32.mrf.mxu0
  %v1450 = vadd.f32 %v1431, %v1449
  %1451 = vdwg.mxu0
  %1452 = vmatpush.bf16.msra.mxu0 0
  %1453 = vmatpush.bf16.msra.mxu0 0
  %1454 = vmatpush.bf16.msra.mxu0 0
  %1455 = vmatpush.bf16.msra.mxu0 0
  %1456 = vmatpush.bf16.msra.mxu0 0
  %1457 = vmatpush.bf16.msra.mxu0 0
  %1458 = vmatpush.bf16.msra.mxu0 %v1219
  %1459 = vmatpush.bf16.msra.mxu0 %v1215
  %1460 = vmatmul.bf16.gmra.mxu0 %v1295
  %v1461 = vpop.f32.mrf.mxu0
  %v1462 = vadd.f32 %v1443, %v1461
  %v1463 = vpop.f32.mrf.mxu0
  %v1464 = vadd.f32 %v1445, %v1463
  %1465 = vmatmul.bf16.gmra.mxu0 %v1298
  %v1466 = vpop.f32.mrf.mxu0
  %v1467 = vadd.f32 %v1448, %v1466
  %v1468 = vpop.f32.mrf.mxu0
  %v1469 = vadd.f32 %v1450, %v1468
  %1470 = vdwg.mxu0
  %1471 = vmatpush.bf16.msra.mxu0 %v1180
  %1472 = vmatpush.bf16.msra.mxu0 %v1176
  %1473 = vmatpush.bf16.msra.mxu0 %v1172
  %1474 = vmatpush.bf16.msra.mxu0 %v1168
  %1475 = vmatpush.bf16.msra.mxu0 %v1164
  %1476 = vmatpush.bf16.msra.mxu0 %v1160
  %1477 = vmatpush.bf16.msra.mxu0 %v1156
  %1478 = vmatpush.bf16.msra.mxu0 %v1152
  %1479 = vmatmul.bf16.gmra.mxu0 %v923
  %v1480 = vpop.f32.mrf.mxu0
  %v1481 = vadd.f32 %v886, %v1480
  %v1482 = vpop.f32.mrf.mxu0
  %v1483 = vadd.f32 %v891, %v1482
  %1484 = vmatmul.bf16.gmra.mxu0 %v926
  %v1485 = vpop.f32.mrf.mxu0
  %v1486 = vadd.f32 %v896, %v1485
  %v1487 = vpop.f32.mrf.mxu0
  %v1488 = vadd.f32 %v901, %v1487
  %1489 = vdwg.mxu0
  %1490 = vmatpush.bf16.msra.mxu0 %v1212
  %1491 = vmatpush.bf16.msra.mxu0 %v1208
  %1492 = vmatpush.bf16.msra.mxu0 %v1204
  %1493 = vmatpush.bf16.msra.mxu0 %v1200
  %1494 = vmatpush.bf16.msra.mxu0 %v1196
  %1495 = vmatpush.bf16.msra.mxu0 %v1192
  %1496 = vmatpush.bf16.msra.mxu0 %v1188
  %1497 = vmatpush.bf16.msra.mxu0 %v1184
  %1498 = vmatmul.bf16.gmra.mxu0 %v924
  %v1499 = vpop.f32.mrf.mxu0
  %v1500 = vadd.f32 %v1481, %v1499
  %v1501 = vpop.f32.mrf.mxu0
  %v1502 = vadd.f32 %v1483, %v1501
  %1503 = vmatmul.bf16.gmra.mxu0 %v927
  %v1504 = vpop.f32.mrf.mxu0
  %v1505 = vadd.f32 %v1486, %v1504
  %v1506 = vpop.f32.mrf.mxu0
  %v1507 = vadd.f32 %v1488, %v1506
  %1508 = vdwg.mxu0
  %1509 = vmatpush.bf16.msra.mxu0 0
  %1510 = vmatpush.bf16.msra.mxu0 0
  %1511 = vmatpush.bf16.msra.mxu0 0
  %1512 = vmatpush.bf16.msra.mxu0 0
  %1513 = vmatpush.bf16.msra.mxu0 0
  %1514 = vmatpush.bf16.msra.mxu0 0
  %1515 = vmatpush.bf16.msra.mxu0 %v1220
  %1516 = vmatpush.bf16.msra.mxu0 %v1216
  %1517 = vmatmul.bf16.gmra.mxu0 %v1295
  %v1518 = vpop.f32.mrf.mxu0
  %v1519 = vadd.f32 %v1500, %v1518
  %v1520 = vpop.f32.mrf.mxu0
  %v1521 = vadd.f32 %v1502, %v1520
  %1522 = vmatmul.bf16.gmra.mxu0 %v1298
  %v1523 = vpop.f32.mrf.mxu0
  %v1524 = vadd.f32 %v1505, %v1523
  %v1525 = vpop.f32.mrf.mxu0
  %v1526 = vadd.f32 %v1507, %v1525
  %1527 = vdwg.mxu0
  %v1528 = vmax.f32 %v1348, 0.0
  %v1529 = vmax.f32 %v1405, 0.0
  %v1530 = vmax.f32 %v1462, 0.0
  %v1531 = vmax.f32 %v1519, 0.0
  %v1532 = vmax.f32 %v1350, 0.0
  %v1533 = vmax.f32 %v1407, 0.0
  %v1534 = vmax.f32 %v1464, 0.0
  %v1535 = vmax.f32 %v1521, 0.0
  %v1536 = vmax.f32 %v1353, 0.0
  %v1537 = vmax.f32 %v1410, 0.0
  %v1538 = vmax.f32 %v1467, 0.0
  %v1539 = vmax.f32 %v1524, 0.0
  %v1540 = vmax.f32 %v1355, 0.0
  %v1541 = vmax.f32 %v1412, 0.0
  %v1542 = vmax.f32 %v1469, 0.0
  %v1543 = vmax.f32 %v1526, 0.0
  %1544 = vrot.lane.b32.xlu0 %v1528, 17
  %v1545 = vpop.permute.xlu0 %1544
  %1546 = vrot.lane.b32.xlu0 %v1532, 17
  %v1547 = vpop.permute.xlu0 %1546
  %1548 = vrot.lane.b32.xlu0 %v1536, 17
  %v1549 = vpop.permute.xlu0 %1548
  %1550 = vrot.lane.b32.xlu0 %v1540, 17
  %v1551 = vpop.permute.xlu0 %1550
  %1552 = vrot.lane.b32.xlu0 %v1529, 17
  %v1553 = vpop.permute.xlu0 %1552
  %1554 = vrot.lane.b32.xlu0 %v1533, 17
  %v1555 = vpop.permute.xlu0 %1554
  %1556 = vrot.lane.b32.xlu0 %v1537, 17
  %v1557 = vpop.permute.xlu0 %1556
  %1558 = vrot.lane.b32.xlu0 %v1541, 17
  %v1559 = vpop.permute.xlu0 %1558
  %1560 = vrot.lane.b32.xlu0 %v1530, 17
  %v1561 = vpop.permute.xlu0 %1560
  %1562 = vrot.lane.b32.xlu0 %v1534, 17
  %v1563 = vpop.permute.xlu0 %1562
  %1564 = vrot.lane.b32.xlu0 %v1538, 17
  %v1565 = vpop.permute.xlu0 %1564
  %1566 = vrot.lane.b32.xlu0 %v1542, 17
  %v1567 = vpop.permute.xlu0 %1566
  %1568 = vrot.lane.b32.xlu0 %v1531, 17
  %v1569 = vpop.permute.xlu0 %1568
  %1570 = vrot.lane.b32.xlu0 %v1535, 17
  %v1571 = vpop.permute.xlu0 %1570
  %1572 = vrot.lane.b32.xlu0 %v1539, 17
  %v1573 = vpop.permute.xlu0 %1572
  %1574 = vrot.lane.b32.xlu0 %v1543, 17
  %v1575 = vpop.permute.xlu0 %1574
  %v1576 = vsel %vm95, %v1561, %v1569
  %v1577 = vsel %vm95, %v1563, %v1571
  %v1578 = vsel %vm95, %v1565, %v1573
  %v1579 = vsel %vm95, %v1567, %v1575
  %v1580 = vsel %vm95, %v1553, %v1561
  %v1581 = vsel %vm95, %v1555, %v1563
  %v1582 = vsel %vm95, %v1557, %v1565
  %v1583 = vsel %vm95, %v1559, %v1567
  %v1584 = vsel %vm95, %v1545, %v1553
  %v1585 = vsel %vm95, %v1547, %v1555
  %v1586 = vsel %vm95, %v1549, %v1557
  %v1587 = vsel %vm95, %v1551, %v1559
  %v1588 = vsel %vm95, %v1569, %v1545
  %v1589 = vsel %vm95, %v1571, %v1547
  %v1590 = vsel %vm95, %v1573, %v1549
  %v1591 = vsel %vm95, %v1575, %v1551
  %v1592 = vmul.f32 %v1588, %v113
  %v1593 = vmul.f32 %v1584, %v114
  %v1594 = vmul.f32 %v1580, %v115
  %v1595 = vmul.f32 %v1576, %v116
  %v1596 = vmul.f32 %v1589, %v113
  %v1597 = vmul.f32 %v1585, %v114
  %v1598 = vmul.f32 %v1581, %v115
  %v1599 = vmul.f32 %v1577, %v116
  %v1600 = vmul.f32 %v1590, %v113
  %v1601 = vmul.f32 %v1586, %v114
  %v1602 = vmul.f32 %v1582, %v115
  %v1603 = vmul.f32 %v1578, %v116
  %v1604 = vmul.f32 %v1591, %v113
  %v1605 = vmul.f32 %v1587, %v114
  %v1606 = vmul.f32 %v1583, %v115
  %v1607 = vmul.f32 %v1579, %v116
  %v1608 = vpack.c.bf16 %v1593, %v1592
  %v1609 = vpack.c.bf16 %v1595, %v1594
  %v1610 = vpack.c.bf16 %v1597, %v1596
  %v1611 = vpack.c.bf16 %v1599, %v1598
  %v1612 = vpack.c.bf16 %v1601, %v1600
  %v1613 = vpack.c.bf16 %v1603, %v1602
  %v1614 = vpack.c.bf16 %v1605, %v1604
  %v1615 = vpack.c.bf16 %v1607, %v1606
  %1616 = vst [vmem:[#allocation2] sm:$0xff] %v1608
  %1617 = vst [vmem:[#allocation2 + $0x8] sm:$0xff] %v1609
  %1618 = vst [vmem:[#allocation2 + $0x10] sm:$0xff] %v1610
  %1619 = vst [vmem:[#allocation2 + $0x18] sm:$0xff] %v1611
  %1620 = vst [vmem:[#allocation2 + $0x20] sm:$0xff] %v1612
  %1621 = vst [vmem:[#allocation2 + $0x28] sm:$0xff] %v1613
  %1622 = vst [vmem:[#allocation2 + $0x30] sm:$0xff] %v1614
  %1623 = vst [vmem:[#allocation2 + $0x38] sm:$0xff] %v1615
  %1624 = vrot.lane.b32.xlu0 %v1528, 16
  %v1625 = vpop.permute.xlu0 %1624
  %1626 = vrot.lane.b32.xlu0 %v1532, 16
  %v1627 = vpop.permute.xlu0 %1626
  %1628 = vrot.lane.b32.xlu0 %v1536, 16
  %v1629 = vpop.permute.xlu0 %1628
  %1630 = vrot.lane.b32.xlu0 %v1540, 16
  %v1631 = vpop.permute.xlu0 %1630
  %1632 = vrot.lane.b32.xlu0 %v1529, 16
  %v1633 = vpop.permute.xlu0 %1632
  %1634 = vrot.lane.b32.xlu0 %v1533, 16
  %v1635 = vpop.permute.xlu0 %1634
  %1636 = vrot.lane.b32.xlu0 %v1537, 16
  %v1637 = vpop.permute.xlu0 %1636
  %1638 = vrot.lane.b32.xlu0 %v1541, 16
  %v1639 = vpop.permute.xlu0 %1638
  %1640 = vrot.lane.b32.xlu0 %v1530, 16
  %v1641 = vpop.permute.xlu0 %1640
  %1642 = vrot.lane.b32.xlu0 %v1534, 16
  %v1643 = vpop.permute.xlu0 %1642
  %1644 = vrot.lane.b32.xlu0 %v1538, 16
  %v1645 = vpop.permute.xlu0 %1644
  %1646 = vrot.lane.b32.xlu0 %v1542, 16
  %v1647 = vpop.permute.xlu0 %1646
  %1648 = vrot.lane.b32.xlu0 %v1531, 16
  %v1649 = vpop.permute.xlu0 %1648
  %1650 = vrot.lane.b32.xlu0 %v1535, 16
  %v1651 = vpop.permute.xlu0 %1650
  %1652 = vrot.lane.b32.xlu0 %v1539, 16
  %v1653 = vpop.permute.xlu0 %1652
  %1654 = vrot.lane.b32.xlu0 %v1543, 16
  %v1655 = vpop.permute.xlu0 %1654
  %v1656 = vsel %vm185, %v1641, %v1649
  %v1657 = vsel %vm185, %v1643, %v1651
  %v1658 = vsel %vm185, %v1645, %v1653
  %v1659 = vsel %vm185, %v1647, %v1655
  %v1660 = vsel %vm185, %v1633, %v1641
  %v1661 = vsel %vm185, %v1635, %v1643
  %v1662 = vsel %vm185, %v1637, %v1645
  %v1663 = vsel %vm185, %v1639, %v1647
  %v1664 = vsel %vm185, %v1625, %v1633
  %v1665 = vsel %vm185, %v1627, %v1635
  %v1666 = vsel %vm185, %v1629, %v1637
  %v1667 = vsel %vm185, %v1631, %v1639
  %v1668 = vsel %vm185, %v1649, %v1625
  %v1669 = vsel %vm185, %v1651, %v1627
  %v1670 = vsel %vm185, %v1653, %v1629
  %v1671 = vsel %vm185, %v1655, %v1631
  %v1672 = vmul.f32 %v1668, %v203
  %v1673 = vmul.f32 %v1664, %v204
  %v1674 = vmul.f32 %v1660, %v205
  %v1675 = vmul.f32 %v1656, %v206
  %v1676 = vmul.f32 %v1669, %v203
  %v1677 = vmul.f32 %v1665, %v204
  %v1678 = vmul.f32 %v1661, %v205
  %v1679 = vmul.f32 %v1657, %v206
  %v1680 = vmul.f32 %v1670, %v203
  %v1681 = vmul.f32 %v1666, %v204
  %v1682 = vmul.f32 %v1662, %v205
  %v1683 = vmul.f32 %v1658, %v206
  %v1684 = vmul.f32 %v1671, %v203
  %v1685 = vmul.f32 %v1667, %v204
  %v1686 = vmul.f32 %v1663, %v205
  %v1687 = vmul.f32 %v1659, %v206
  %v1688 = vpack.c.bf16 %v1673, %v1672
  %v1689 = vpack.c.bf16 %v1675, %v1674
  %v1690 = vpack.c.bf16 %v1677, %v1676
  %v1691 = vpack.c.bf16 %v1679, %v1678
  %v1692 = vpack.c.bf16 %v1681, %v1680
  %v1693 = vpack.c.bf16 %v1683, %v1682
  %v1694 = vpack.c.bf16 %v1685, %v1684
  %v1695 = vpack.c.bf16 %v1687, %v1686
  %1696 = vst [vmem:[#allocation2 + $0x40] sm:$0xff] %v1688
  %1697 = vst [vmem:[#allocation2 + $0x48] sm:$0xff] %v1689
  %1698 = vst [vmem:[#allocation2 + $0x50] sm:$0xff] %v1690
  %1699 = vst [vmem:[#allocation2 + $0x58] sm:$0xff] %v1691
  %1700 = vst [vmem:[#allocation2 + $0x60] sm:$0xff] %v1692
  %1701 = vst [vmem:[#allocation2 + $0x68] sm:$0xff] %v1693
  %1702 = vst [vmem:[#allocation2 + $0x70] sm:$0xff] %v1694
  %1703 = vst [vmem:[#allocation2 + $0x78] sm:$0xff] %v1695
  %1704 = vrot.lane.b32.xlu0 %v1528, 15
  %v1705 = vpop.permute.xlu0 %1704
  %1706 = vrot.lane.b32.xlu0 %v1532, 15
  %v1707 = vpop.permute.xlu0 %1706
  %1708 = vrot.lane.b32.xlu0 %v1536, 15
  %v1709 = vpop.permute.xlu0 %1708
  %1710 = vrot.lane.b32.xlu0 %v1540, 15
  %v1711 = vpop.permute.xlu0 %1710
  %1712 = vrot.lane.b32.xlu0 %v1529, 15
  %v1713 = vpop.permute.xlu0 %1712
  %1714 = vrot.lane.b32.xlu0 %v1533, 15
  %v1715 = vpop.permute.xlu0 %1714
  %1716 = vrot.lane.b32.xlu0 %v1537, 15
  %v1717 = vpop.permute.xlu0 %1716
  %1718 = vrot.lane.b32.xlu0 %v1541, 15
  %v1719 = vpop.permute.xlu0 %1718
  %1720 = vrot.lane.b32.xlu0 %v1530, 15
  %v1721 = vpop.permute.xlu0 %1720
  %1722 = vrot.lane.b32.xlu0 %v1534, 15
  %v1723 = vpop.permute.xlu0 %1722
  %1724 = vrot.lane.b32.xlu0 %v1538, 15
  %v1725 = vpop.permute.xlu0 %1724
  %1726 = vrot.lane.b32.xlu0 %v1542, 15
  %v1727 = vpop.permute.xlu0 %1726
  %1728 = vrot.lane.b32.xlu0 %v1531, 15
  %v1729 = vpop.permute.xlu0 %1728
  %1730 = vrot.lane.b32.xlu0 %v1535, 15
  %v1731 = vpop.permute.xlu0 %1730
  %1732 = vrot.lane.b32.xlu0 %v1539, 15
  %v1733 = vpop.permute.xlu0 %1732
  %1734 = vrot.lane.b32.xlu0 %v1543, 15
  %v1735 = vpop.permute.xlu0 %1734
  %v1736 = vsel %vm275, %v1721, %v1729
  %v1737 = vsel %vm275, %v1723, %v1731
  %v1738 = vsel %vm275, %v1725, %v1733
  %v1739 = vsel %vm275, %v1727, %v1735
  %v1740 = vsel %vm275, %v1713, %v1721
  %v1741 = vsel %vm275, %v1715, %v1723
  %v1742 = vsel %vm275, %v1717, %v1725
  %v1743 = vsel %vm275, %v1719, %v1727
  %v1744 = vsel %vm275, %v1705, %v1713
  %v1745 = vsel %vm275, %v1707, %v1715
  %v1746 = vsel %vm275, %v1709, %v1717
  %v1747 = vsel %vm275, %v1711, %v1719
  %v1748 = vsel %vm275, %v1729, %v1705
  %v1749 = vsel %vm275, %v1731, %v1707
  %v1750 = vsel %vm275, %v1733, %v1709
  %v1751 = vsel %vm275, %v1735, %v1711
  %v1752 = vmul.f32 %v1748, %v293
  %v1753 = vmul.f32 %v1744, %v294
  %v1754 = vmul.f32 %v1740, %v295
  %v1755 = vmul.f32 %v1736, %v296
  %v1756 = vmul.f32 %v1749, %v293
  %v1757 = vmul.f32 %v1745, %v294
  %v1758 = vmul.f32 %v1741, %v295
  %v1759 = vmul.f32 %v1737, %v296
  %v1760 = vmul.f32 %v1750, %v293
  %v1761 = vmul.f32 %v1746, %v294
  %v1762 = vmul.f32 %v1742, %v295
  %v1763 = vmul.f32 %v1738, %v296
  %v1764 = vmul.f32 %v1751, %v293
  %v1765 = vmul.f32 %v1747, %v294
  %v1766 = vmul.f32 %v1743, %v295
  %v1767 = vmul.f32 %v1739, %v296
  %v1768 = vpack.c.bf16 %v1753, %v1752
  %v1769 = vpack.c.bf16 %v1755, %v1754
  %v1770 = vpack.c.bf16 %v1757, %v1756
  %v1771 = vpack.c.bf16 %v1759, %v1758
  %v1772 = vpack.c.bf16 %v1761, %v1760
  %v1773 = vpack.c.bf16 %v1763, %v1762
  %v1774 = vpack.c.bf16 %v1765, %v1764
  %v1775 = vpack.c.bf16 %v1767, %v1766
  %1776 = vst [vmem:[#allocation2 + $0x80] sm:$0xff] %v1768
  %1777 = vst [vmem:[#allocation2 + $0x88] sm:$0xff] %v1769
  %1778 = vst [vmem:[#allocation2 + $0x90] sm:$0xff] %v1770
  %1779 = vst [vmem:[#allocation2 + $0x98] sm:$0xff] %v1771
  %1780 = vst [vmem:[#allocation2 + $0xa0] sm:$0xff] %v1772
  %1781 = vst [vmem:[#allocation2 + $0xa8] sm:$0xff] %v1773
  %1782 = vst [vmem:[#allocation2 + $0xb0] sm:$0xff] %v1774
  %1783 = vst [vmem:[#allocation2 + $0xb8] sm:$0xff] %v1775
  %1784 = vrot.lane.b32.xlu0 %v1528, 1
  %v1785 = vpop.permute.xlu0 %1784
  %1786 = vrot.lane.b32.xlu0 %v1532, 1
  %v1787 = vpop.permute.xlu0 %1786
  %1788 = vrot.lane.b32.xlu0 %v1536, 1
  %v1789 = vpop.permute.xlu0 %1788
  %1790 = vrot.lane.b32.xlu0 %v1540, 1
  %v1791 = vpop.permute.xlu0 %1790
  %1792 = vrot.lane.b32.xlu0 %v1529, 1
  %v1793 = vpop.permute.xlu0 %1792
  %1794 = vrot.lane.b32.xlu0 %v1533, 1
  %v1795 = vpop.permute.xlu0 %1794
  %1796 = vrot.lane.b32.xlu0 %v1537, 1
  %v1797 = vpop.permute.xlu0 %1796
  %1798 = vrot.lane.b32.xlu0 %v1541, 1
  %v1799 = vpop.permute.xlu0 %1798
  %1800 = vrot.lane.b32.xlu0 %v1530, 1
  %v1801 = vpop.permute.xlu0 %1800
  %1802 = vrot.lane.b32.xlu0 %v1534, 1
  %v1803 = vpop.permute.xlu0 %1802
  %1804 = vrot.lane.b32.xlu0 %v1538, 1
  %v1805 = vpop.permute.xlu0 %1804
  %1806 = vrot.lane.b32.xlu0 %v1542, 1
  %v1807 = vpop.permute.xlu0 %1806
  %1808 = vrot.lane.b32.xlu0 %v1531, 1
  %v1809 = vpop.permute.xlu0 %1808
  %1810 = vrot.lane.b32.xlu0 %v1535, 1
  %v1811 = vpop.permute.xlu0 %1810
  %1812 = vrot.lane.b32.xlu0 %v1539, 1
  %v1813 = vpop.permute.xlu0 %1812
  %1814 = vrot.lane.b32.xlu0 %v1543, 1
  %v1815 = vpop.permute.xlu0 %1814
  %v1816 = vsel %vm365, %v1801, %v1809
  %v1817 = vsel %vm365, %v1803, %v1811
  %v1818 = vsel %vm365, %v1805, %v1813
  %v1819 = vsel %vm365, %v1807, %v1815
  %v1820 = vsel %vm365, %v1793, %v1801
  %v1821 = vsel %vm365, %v1795, %v1803
  %v1822 = vsel %vm365, %v1797, %v1805
  %v1823 = vsel %vm365, %v1799, %v1807
  %v1824 = vsel %vm365, %v1785, %v1793
  %v1825 = vsel %vm365, %v1787, %v1795
  %v1826 = vsel %vm365, %v1789, %v1797
  %v1827 = vsel %vm365, %v1791, %v1799
  %v1828 = vsel %vm365, %v1809, %v1785
  %v1829 = vsel %vm365, %v1811, %v1787
  %v1830 = vsel %vm365, %v1813, %v1789
  %v1831 = vsel %vm365, %v1815, %v1791
  %v1832 = vmul.f32 %v1828, %v383
  %v1833 = vmul.f32 %v1824, %v384
  %v1834 = vmul.f32 %v1820, %v385
  %v1835 = vmul.f32 %v1816, %v386
  %v1836 = vmul.f32 %v1829, %v383
  %v1837 = vmul.f32 %v1825, %v384
  %v1838 = vmul.f32 %v1821, %v385
  %v1839 = vmul.f32 %v1817, %v386
  %v1840 = vmul.f32 %v1830, %v383
  %v1841 = vmul.f32 %v1826, %v384
  %v1842 = vmul.f32 %v1822, %v385
  %v1843 = vmul.f32 %v1818, %v386
  %v1844 = vmul.f32 %v1831, %v383
  %v1845 = vmul.f32 %v1827, %v384
  %v1846 = vmul.f32 %v1823, %v385
  %v1847 = vmul.f32 %v1819, %v386
  %v1848 = vpack.c.bf16 %v1833, %v1832
  %v1849 = vpack.c.bf16 %v1835, %v1834
  %v1850 = vpack.c.bf16 %v1837, %v1836
  %v1851 = vpack.c.bf16 %v1839, %v1838
  %v1852 = vpack.c.bf16 %v1841, %v1840
  %v1853 = vpack.c.bf16 %v1843, %v1842
  %v1854 = vpack.c.bf16 %v1845, %v1844
  %v1855 = vpack.c.bf16 %v1847, %v1846
  %1856 = vst [vmem:[#allocation2 + $0xc0] sm:$0xff] %v1848
  %1857 = vst [vmem:[#allocation2 + $0xc8] sm:$0xff] %v1849
  %1858 = vst [vmem:[#allocation2 + $0xd0] sm:$0xff] %v1850
  %1859 = vst [vmem:[#allocation2 + $0xd8] sm:$0xff] %v1851
  %1860 = vst [vmem:[#allocation2 + $0xe0] sm:$0xff] %v1852
  %1861 = vst [vmem:[#allocation2 + $0xe8] sm:$0xff] %v1853
  %1862 = vst [vmem:[#allocation2 + $0xf0] sm:$0xff] %v1854
  %1863 = vst [vmem:[#allocation2 + $0xf8] sm:$0xff] %v1855
  %v1864 = vpack.c.bf16 %v1529, %v1528
  %v1865 = vpack.c.bf16 %v1531, %v1530
  %v1866 = vpack.c.bf16 %v1533, %v1532
  %v1867 = vpack.c.bf16 %v1535, %v1534
  %v1868 = vpack.c.bf16 %v1537, %v1536
  %v1869 = vpack.c.bf16 %v1539, %v1538
  %v1870 = vpack.c.bf16 %v1541, %v1540
  %v1871 = vpack.c.bf16 %v1543, %v1542
  %1872 = vst [vmem:[#allocation2 + $0x100] sm:$0xff] %v1864
  %1873 = vst [vmem:[#allocation2 + $0x108] sm:$0xff] %v1865
  %1874 = vst [vmem:[#allocation2 + $0x110] sm:$0xff] %v1866
  %1875 = vst [vmem:[#allocation2 + $0x118] sm:$0xff] %v1867
  %1876 = vst [vmem:[#allocation2 + $0x120] sm:$0xff] %v1868
  %1877 = vst [vmem:[#allocation2 + $0x128] sm:$0xff] %v1869
  %1878 = vst [vmem:[#allocation2 + $0x130] sm:$0xff] %v1870
  %1879 = vst [vmem:[#allocation2 + $0x138] sm:$0xff] %v1871
  %1880 = vrot.lane.b32.xlu0 %v1528, 127
  %v1881 = vpop.permute.xlu0 %1880
  %1882 = vrot.lane.b32.xlu0 %v1532, 127
  %v1883 = vpop.permute.xlu0 %1882
  %1884 = vrot.lane.b32.xlu0 %v1536, 127
  %v1885 = vpop.permute.xlu0 %1884
  %1886 = vrot.lane.b32.xlu0 %v1540, 127
  %v1887 = vpop.permute.xlu0 %1886
  %1888 = vrot.lane.b32.xlu0 %v1529, 127
  %v1889 = vpop.permute.xlu0 %1888
  %1890 = vrot.lane.b32.xlu0 %v1533, 127
  %v1891 = vpop.permute.xlu0 %1890
  %1892 = vrot.lane.b32.xlu0 %v1537, 127
  %v1893 = vpop.permute.xlu0 %1892
  %1894 = vrot.lane.b32.xlu0 %v1541, 127
  %v1895 = vpop.permute.xlu0 %1894
  %1896 = vrot.lane.b32.xlu0 %v1530, 127
  %v1897 = vpop.permute.xlu0 %1896
  %1898 = vrot.lane.b32.xlu0 %v1534, 127
  %v1899 = vpop.permute.xlu0 %1898
  %1900 = vrot.lane.b32.xlu0 %v1538, 127
  %v1901 = vpop.permute.xlu0 %1900
  %1902 = vrot.lane.b32.xlu0 %v1542, 127
  %v1903 = vpop.permute.xlu0 %1902
  %1904 = vrot.lane.b32.xlu0 %v1531, 127
  %v1905 = vpop.permute.xlu0 %1904
  %1906 = vrot.lane.b32.xlu0 %v1535, 127
  %v1907 = vpop.permute.xlu0 %1906
  %1908 = vrot.lane.b32.xlu0 %v1539, 127
  %v1909 = vpop.permute.xlu0 %1908
  %1910 = vrot.lane.b32.xlu0 %v1543, 127
  %v1911 = vpop.permute.xlu0 %1910
  %v1912 = vsel %vm471, %v1897, %v1905
  %v1913 = vsel %vm471, %v1899, %v1907
  %v1914 = vsel %vm471, %v1901, %v1909
  %v1915 = vsel %vm471, %v1903, %v1911
  %v1916 = vsel %vm471, %v1889, %v1897
  %v1917 = vsel %vm471, %v1891, %v1899
  %v1918 = vsel %vm471, %v1893, %v1901
  %v1919 = vsel %vm471, %v1895, %v1903
  %v1920 = vsel %vm471, %v1881, %v1889
  %v1921 = vsel %vm471, %v1883, %v1891
  %v1922 = vsel %vm471, %v1885, %v1893
  %v1923 = vsel %vm471, %v1887, %v1895
  %v1924 = vsel %vm471, %v1905, %v1881
  %v1925 = vsel %vm471, %v1907, %v1883
  %v1926 = vsel %vm471, %v1909, %v1885
  %v1927 = vsel %vm471, %v1911, %v1887
  %v1928 = vmul.f32 %v1920, %v489
  %v1929 = vmul.f32 %v1916, %v490
  %v1930 = vmul.f32 %v1912, %v491
  %v1931 = vmul.f32 %v1924, %v492
  %v1932 = vmul.f32 %v1921, %v489
  %v1933 = vmul.f32 %v1917, %v490
  %v1934 = vmul.f32 %v1913, %v491
  %v1935 = vmul.f32 %v1925, %v492
  %v1936 = vmul.f32 %v1922, %v489
  %v1937 = vmul.f32 %v1918, %v490
  %v1938 = vmul.f32 %v1914, %v491
  %v1939 = vmul.f32 %v1926, %v492
  %v1940 = vmul.f32 %v1923, %v489
  %v1941 = vmul.f32 %v1919, %v490
  %v1942 = vmul.f32 %v1915, %v491
  %v1943 = vmul.f32 %v1927, %v492
  %v1944 = vpack.c.bf16 %v1929, %v1928
  %v1945 = vpack.c.bf16 %v1931, %v1930
  %v1946 = vpack.c.bf16 %v1933, %v1932
  %v1947 = vpack.c.bf16 %v1935, %v1934
  %v1948 = vpack.c.bf16 %v1937, %v1936
  %v1949 = vpack.c.bf16 %v1939, %v1938
  %v1950 = vpack.c.bf16 %v1941, %v1940
  %v1951 = vpack.c.bf16 %v1943, %v1942
  %1952 = vst [vmem:[#allocation2 + $0x140] sm:$0xff] %v1944
  %1953 = vst [vmem:[#allocation2 + $0x148] sm:$0xff] %v1945
  %1954 = vst [vmem:[#allocation2 + $0x150] sm:$0xff] %v1946
  %1955 = vst [vmem:[#allocation2 + $0x158] sm:$0xff] %v1947
  %1956 = vst [vmem:[#allocation2 + $0x160] sm:$0xff] %v1948
  %1957 = vst [vmem:[#allocation2 + $0x168] sm:$0xff] %v1949
  %1958 = vst [vmem:[#allocation2 + $0x170] sm:$0xff] %v1950
  %1959 = vst [vmem:[#allocation2 + $0x178] sm:$0xff] %v1951
  %1960 = vrot.lane.b32.xlu0 %v1528, 113
  %v1961 = vpop.permute.xlu0 %1960
  %1962 = vrot.lane.b32.xlu0 %v1532, 113
  %v1963 = vpop.permute.xlu0 %1962
  %1964 = vrot.lane.b32.xlu0 %v1536, 113
  %v1965 = vpop.permute.xlu0 %1964
  %1966 = vrot.lane.b32.xlu0 %v1540, 113
  %v1967 = vpop.permute.xlu0 %1966
  %1968 = vrot.lane.b32.xlu0 %v1529, 113
  %v1969 = vpop.permute.xlu0 %1968
  %1970 = vrot.lane.b32.xlu0 %v1533, 113
  %v1971 = vpop.permute.xlu0 %1970
  %1972 = vrot.lane.b32.xlu0 %v1537, 113
  %v1973 = vpop.permute.xlu0 %1972
  %1974 = vrot.lane.b32.xlu0 %v1541, 113
  %v1975 = vpop.permute.xlu0 %1974
  %1976 = vrot.lane.b32.xlu0 %v1530, 113
  %v1977 = vpop.permute.xlu0 %1976
  %1978 = vrot.lane.b32.xlu0 %v1534, 113
  %v1979 = vpop.permute.xlu0 %1978
  %1980 = vrot.lane.b32.xlu0 %v1538, 113
  %v1981 = vpop.permute.xlu0 %1980
  %1982 = vrot.lane.b32.xlu0 %v1542, 113
  %v1983 = vpop.permute.xlu0 %1982
  %1984 = vrot.lane.b32.xlu0 %v1531, 113
  %v1985 = vpop.permute.xlu0 %1984
  %1986 = vrot.lane.b32.xlu0 %v1535, 113
  %v1987 = vpop.permute.xlu0 %1986
  %1988 = vrot.lane.b32.xlu0 %v1539, 113
  %v1989 = vpop.permute.xlu0 %1988
  %1990 = vrot.lane.b32.xlu0 %v1543, 113
  %v1991 = vpop.permute.xlu0 %1990
  %v1992 = vsel %vm561, %v1977, %v1985
  %v1993 = vsel %vm561, %v1979, %v1987
  %v1994 = vsel %vm561, %v1981, %v1989
  %v1995 = vsel %vm561, %v1983, %v1991
  %v1996 = vsel %vm561, %v1969, %v1977
  %v1997 = vsel %vm561, %v1971, %v1979
  %v1998 = vsel %vm561, %v1973, %v1981
  %v1999 = vsel %vm561, %v1975, %v1983
  %v2000 = vsel %vm561, %v1961, %v1969
  %v2001 = vsel %vm561, %v1963, %v1971
  %v2002 = vsel %vm561, %v1965, %v1973
  %v2003 = vsel %vm561, %v1967, %v1975
  %v2004 = vsel %vm561, %v1985, %v1961
  %v2005 = vsel %vm561, %v1987, %v1963
  %v2006 = vsel %vm561, %v1989, %v1965
  %v2007 = vsel %vm561, %v1991, %v1967
  %v2008 = vmul.f32 %v2000, %v579
  %v2009 = vmul.f32 %v1996, %v580
  %v2010 = vmul.f32 %v1992, %v581
  %v2011 = vmul.f32 %v2004, %v582
  %v2012 = vmul.f32 %v2001, %v579
  %v2013 = vmul.f32 %v1997, %v580
  %v2014 = vmul.f32 %v1993, %v581
  %v2015 = vmul.f32 %v2005, %v582
  %v2016 = vmul.f32 %v2002, %v579
  %v2017 = vmul.f32 %v1998, %v580
  %v2018 = vmul.f32 %v1994, %v581
  %v2019 = vmul.f32 %v2006, %v582
  %v2020 = vmul.f32 %v2003, %v579
  %v2021 = vmul.f32 %v1999, %v580
  %v2022 = vmul.f32 %v1995, %v581
  %v2023 = vmul.f32 %v2007, %v582
  %v2024 = vpack.c.bf16 %v2009, %v2008
  %v2025 = vpack.c.bf16 %v2011, %v2010
  %v2026 = vpack.c.bf16 %v2013, %v2012
  %v2027 = vpack.c.bf16 %v2015, %v2014
  %v2028 = vpack.c.bf16 %v2017, %v2016
  %v2029 = vpack.c.bf16 %v2019, %v2018
  %v2030 = vpack.c.bf16 %v2021, %v2020
  %v2031 = vpack.c.bf16 %v2023, %v2022
  %2032 = vst [vmem:[#allocation2 + $0x180] sm:$0xff] %v2024
  %2033 = vst [vmem:[#allocation2 + $0x188] sm:$0xff] %v2025
  %2034 = vst [vmem:[#allocation2 + $0x190] sm:$0xff] %v2026
  %2035 = vst [vmem:[#allocation2 + $0x198] sm:$0xff] %v2027
  %2036 = vst [vmem:[#allocation2 + $0x1a0] sm:$0xff] %v2028
  %2037 = vst [vmem:[#allocation2 + $0x1a8] sm:$0xff] %v2029
  %2038 = vst [vmem:[#allocation2 + $0x1b0] sm:$0xff] %v2030
  %2039 = vst [vmem:[#allocation2 + $0x1b8] sm:$0xff] %v2031
  %2040 = vrot.lane.b32.xlu0 %v1528, 112
  %v2041 = vpop.permute.xlu0 %2040
  %2042 = vrot.lane.b32.xlu0 %v1532, 112
  %v2043 = vpop.permute.xlu0 %2042
  %2044 = vrot.lane.b32.xlu0 %v1536, 112
  %v2045 = vpop.permute.xlu0 %2044
  %2046 = vrot.lane.b32.xlu0 %v1540, 112
  %v2047 = vpop.permute.xlu0 %2046
  %2048 = vrot.lane.b32.xlu0 %v1529, 112
  %v2049 = vpop.permute.xlu0 %2048
  %2050 = vrot.lane.b32.xlu0 %v1533, 112
  %v2051 = vpop.permute.xlu0 %2050
  %2052 = vrot.lane.b32.xlu0 %v1537, 112
  %v2053 = vpop.permute.xlu0 %2052
  %2054 = vrot.lane.b32.xlu0 %v1541, 112
  %v2055 = vpop.permute.xlu0 %2054
  %2056 = vrot.lane.b32.xlu0 %v1530, 112
  %v2057 = vpop.permute.xlu0 %2056
  %2058 = vrot.lane.b32.xlu0 %v1534, 112
  %v2059 = vpop.permute.xlu0 %2058
  %2060 = vrot.lane.b32.xlu0 %v1538, 112
  %v2061 = vpop.permute.xlu0 %2060
  %2062 = vrot.lane.b32.xlu0 %v1542, 112
  %v2063 = vpop.permute.xlu0 %2062
  %2064 = vrot.lane.b32.xlu0 %v1531, 112
  %v2065 = vpop.permute.xlu0 %2064
  %2066 = vrot.lane.b32.xlu0 %v1535, 112
  %v2067 = vpop.permute.xlu0 %2066
  %2068 = vrot.lane.b32.xlu0 %v1539, 112
  %v2069 = vpop.permute.xlu0 %2068
  %2070 = vrot.lane.b32.xlu0 %v1543, 112
  %v2071 = vpop.permute.xlu0 %2070
  %v2072 = vsel %vm651, %v2057, %v2065
  %v2073 = vsel %vm651, %v2059, %v2067
  %v2074 = vsel %vm651, %v2061, %v2069
  %v2075 = vsel %vm651, %v2063, %v2071
  %v2076 = vsel %vm651, %v2049, %v2057
  %v2077 = vsel %vm651, %v2051, %v2059
  %v2078 = vsel %vm651, %v2053, %v2061
  %v2079 = vsel %vm651, %v2055, %v2063
  %v2080 = vsel %vm651, %v2041, %v2049
  %v2081 = vsel %vm651, %v2043, %v2051
  %v2082 = vsel %vm651, %v2045, %v2053
  %v2083 = vsel %vm651, %v2047, %v2055
  %v2084 = vsel %vm651, %v2065, %v2041
  %v2085 = vsel %vm651, %v2067, %v2043
  %v2086 = vsel %vm651, %v2069, %v2045
  %v2087 = vsel %vm651, %v2071, %v2047
  %v2088 = vmul.f32 %v2080, %v669
  %v2089 = vmul.f32 %v2076, %v670
  %v2090 = vmul.f32 %v2072, %v671
  %v2091 = vmul.f32 %v2084, %v672
  %v2092 = vmul.f32 %v2081, %v669
  %v2093 = vmul.f32 %v2077, %v670
  %v2094 = vmul.f32 %v2073, %v671
  %v2095 = vmul.f32 %v2085, %v672
  %v2096 = vmul.f32 %v2082, %v669
  %v2097 = vmul.f32 %v2078, %v670
  %v2098 = vmul.f32 %v2074, %v671
  %v2099 = vmul.f32 %v2086, %v672
  %v2100 = vmul.f32 %v2083, %v669
  %v2101 = vmul.f32 %v2079, %v670
  %v2102 = vmul.f32 %v2075, %v671
  %v2103 = vmul.f32 %v2087, %v672
  %v2104 = vpack.c.bf16 %v2089, %v2088
  %v2105 = vpack.c.bf16 %v2091, %v2090
  %v2106 = vpack.c.bf16 %v2093, %v2092
  %v2107 = vpack.c.bf16 %v2095, %v2094
  %v2108 = vpack.c.bf16 %v2097, %v2096
  %v2109 = vpack.c.bf16 %v2099, %v2098
  %v2110 = vpack.c.bf16 %v2101, %v2100
  %v2111 = vpack.c.bf16 %v2103, %v2102
  %2112 = vst [vmem:[#allocation2 + $0x1c0] sm:$0xff] %v2104
  %2113 = vst [vmem:[#allocation2 + $0x1c8] sm:$0xff] %v2105
  %2114 = vst [vmem:[#allocation2 + $0x1d0] sm:$0xff] %v2106
  %2115 = vst [vmem:[#allocation2 + $0x1d8] sm:$0xff] %v2107
  %2116 = vst [vmem:[#allocation2 + $0x1e0] sm:$0xff] %v2108
  %2117 = vst [vmem:[#allocation2 + $0x1e8] sm:$0xff] %v2109
  %2118 = vst [vmem:[#allocation2 + $0x1f0] sm:$0xff] %v2110
  %2119 = vst [vmem:[#allocation2 + $0x1f8] sm:$0xff] %v2111
  %2120 = vrot.lane.b32.xlu0 %v1528, 111
  %v2121 = vpop.permute.xlu0 %2120
  %2122 = vrot.lane.b32.xlu0 %v1532, 111
  %v2123 = vpop.permute.xlu0 %2122
  %2124 = vrot.lane.b32.xlu0 %v1536, 111
  %v2125 = vpop.permute.xlu0 %2124
  %2126 = vrot.lane.b32.xlu0 %v1540, 111
  %v2127 = vpop.permute.xlu0 %2126
  %2128 = vrot.lane.b32.xlu0 %v1529, 111
  %v2129 = vpop.permute.xlu0 %2128
  %2130 = vrot.lane.b32.xlu0 %v1533, 111
  %v2131 = vpop.permute.xlu0 %2130
  %2132 = vrot.lane.b32.xlu0 %v1537, 111
  %v2133 = vpop.permute.xlu0 %2132
  %2134 = vrot.lane.b32.xlu0 %v1541, 111
  %v2135 = vpop.permute.xlu0 %2134
  %2136 = vrot.lane.b32.xlu0 %v1530, 111
  %v2137 = vpop.permute.xlu0 %2136
  %2138 = vrot.lane.b32.xlu0 %v1534, 111
  %v2139 = vpop.permute.xlu0 %2138
  %2140 = vrot.lane.b32.xlu0 %v1538, 111
  %v2141 = vpop.permute.xlu0 %2140
  %2142 = vrot.lane.b32.xlu0 %v1542, 111
  %v2143 = vpop.permute.xlu0 %2142
  %2144 = vrot.lane.b32.xlu0 %v1531, 111
  %v2145 = vpop.permute.xlu0 %2144
  %2146 = vrot.lane.b32.xlu0 %v1535, 111
  %v2147 = vpop.permute.xlu0 %2146
  %2148 = vrot.lane.b32.xlu0 %v1539, 111
  %v2149 = vpop.permute.xlu0 %2148
  %2150 = vrot.lane.b32.xlu0 %v1543, 111
  %v2151 = vpop.permute.xlu0 %2150
  %v2152 = vsel %vm741, %v2137, %v2145
  %v2153 = vsel %vm741, %v2139, %v2147
  %v2154 = vsel %vm741, %v2141, %v2149
  %v2155 = vsel %vm741, %v2143, %v2151
  %v2156 = vsel %vm741, %v2129, %v2137
  %v2157 = vsel %vm741, %v2131, %v2139
  %v2158 = vsel %vm741, %v2133, %v2141
  %v2159 = vsel %vm741, %v2135, %v2143
  %v2160 = vsel %vm741, %v2121, %v2129
  %v2161 = vsel %vm741, %v2123, %v2131
  %v2162 = vsel %vm741, %v2125, %v2133
  %v2163 = vsel %vm741, %v2127, %v2135
  %v2164 = vsel %vm741, %v2145, %v2121
  %v2165 = vsel %vm741, %v2147, %v2123
  %v2166 = vsel %vm741, %v2149, %v2125
  %v2167 = vsel %vm741, %v2151, %v2127
  %v2168 = vmul.f32 %v2160, %v759
  %v2169 = vmul.f32 %v2156, %v760
  %v2170 = vmul.f32 %v2152, %v761
  %v2171 = vmul.f32 %v2164, %v762
  %v2172 = vmul.f32 %v2161, %v759
  %v2173 = vmul.f32 %v2157, %v760
  %v2174 = vmul.f32 %v2153, %v761
  %v2175 = vmul.f32 %v2165, %v762
  %v2176 = vmul.f32 %v2162, %v759
  %v2177 = vmul.f32 %v2158, %v760
  %v2178 = vmul.f32 %v2154, %v761
  %v2179 = vmul.f32 %v2166, %v762
  %v2180 = vmul.f32 %v2163, %v759
  %v2181 = vmul.f32 %v2159, %v760
  %v2182 = vmul.f32 %v2155, %v761
  %v2183 = vmul.f32 %v2167, %v762
  %v2184 = vpack.c.bf16 %v2169, %v2168
  %v2185 = vpack.c.bf16 %v2171, %v2170
  %v2186 = vpack.c.bf16 %v2173, %v2172
  %v2187 = vpack.c.bf16 %v2175, %v2174
  %v2188 = vpack.c.bf16 %v2177, %v2176
  %v2189 = vpack.c.bf16 %v2179, %v2178
  %v2190 = vpack.c.bf16 %v2181, %v2180
  %v2191 = vpack.c.bf16 %v2183, %v2182
  %2192 = vst [vmem:[#allocation2 + $0x200] sm:$0xff] %v2184
  %2193 = vst [vmem:[#allocation2 + $0x208] sm:$0xff] %v2185
  %2194 = vst [vmem:[#allocation2 + $0x210] sm:$0xff] %v2186
  %2195 = vst [vmem:[#allocation2 + $0x218] sm:$0xff] %v2187
  %2196 = vst [vmem:[#allocation2 + $0x220] sm:$0xff] %v2188
  %2197 = vst [vmem:[#allocation2 + $0x228] sm:$0xff] %v2189
  %2198 = vst [vmem:[#allocation2 + $0x230] sm:$0xff] %v2190
  %2199 = vst [vmem:[#allocation2 + $0x238] sm:$0xff] %v2191
  %s2200 = scalar_lea.vmem %s2, 48
  %v2201 = vld [vmem:[%s2200] sm:$0xff]
  %v2202 = vld [vmem:[%s2200 + $0x8] sm:$0xf]
  %v2203 = vld [vmem:[%s2200 + $0xc] sm:$0xff]
  %v2204 = vld [vmem:[%s2200 + $0x14] sm:$0xf]
  %v2205 = vld [vmem:[%s2200 + $0x18] sm:$0xff]
  %v2206 = vld [vmem:[%s2200 + $0x20] sm:$0xf]
  %v2207 = vld [vmem:[%s2200 + $0x24] sm:$0xff]
  %v2208 = vld [vmem:[%s2200 + $0x2c] sm:$0xf]
  %v2209 = vld [vmem:[#allocation2] sm:$0xff]
  %v2210 = vld [vmem:[#allocation2 + $0x8] sm:$0xff]
  %v2211 = vld [vmem:[#allocation2 + $0x10] sm:$0xff]
  %v2212 = vld [vmem:[#allocation2 + $0x18] sm:$0xff]
  %v2213 = vld [vmem:[#allocation2 + $0x20] sm:$0xff]
  %v2214 = vld [vmem:[#allocation2 + $0x28] sm:$0xff]
  %v2215 = vld [vmem:[#allocation2 + $0x30] sm:$0xff]
  %v2216 = vld [vmem:[#allocation2 + $0x38] sm:$0xff]
  %v2217 = vld [vmem:[#allocation2 + $0x40] sm:$0xff]
  %v2218 = vld [vmem:[#allocation2 + $0x48] sm:$0xff]
  %v2219 = vld [vmem:[#allocation2 + $0x50] sm:$0xff]
  %v2220 = vld [vmem:[#allocation2 + $0x58] sm:$0xff]
  %v2221 = vld [vmem:[#allocation2 + $0x60] sm:$0xff]
  %v2222 = vld [vmem:[#allocation2 + $0x68] sm:$0xff]
  %v2223 = vld [vmem:[#allocation2 + $0x70] sm:$0xff]
  %v2224 = vld [vmem:[#allocation2 + $0x78] sm:$0xff]
  %v2225 = vld [vmem:[#allocation2 + $0x80] sm:$0xff]
  %v2226 = vld [vmem:[#allocation2 + $0x88] sm:$0xff]
  %v2227 = vld [vmem:[#allocation2 + $0x90] sm:$0xff]
  %v2228 = vld [vmem:[#allocation2 + $0x98] sm:$0xff]
  %v2229 = vld [vmem:[#allocation2 + $0xa0] sm:$0xff]
  %v2230 = vld [vmem:[#allocation2 + $0xa8] sm:$0xff]
  %v2231 = vld [vmem:[#allocation2 + $0xb0] sm:$0xff]
  %v2232 = vld [vmem:[#allocation2 + $0xb8] sm:$0xff]
  %v2233 = vld [vmem:[#allocation2 + $0xc0] sm:$0xff]
  %v2234 = vld [vmem:[#allocation2 + $0xc8] sm:$0xff]
  %v2235 = vld [vmem:[#allocation2 + $0xd0] sm:$0xff]
  %v2236 = vld [vmem:[#allocation2 + $0xd8] sm:$0xff]
  %v2237 = vld [vmem:[#allocation2 + $0xe0] sm:$0xff]
  %v2238 = vld [vmem:[#allocation2 + $0xe8] sm:$0xff]
  %v2239 = vld [vmem:[#allocation2 + $0xf0] sm:$0xff]
  %v2240 = vld [vmem:[#allocation2 + $0xf8] sm:$0xff]
  %v2241 = vld [vmem:[#allocation2 + $0x100] sm:$0xff]
  %v2242 = vld [vmem:[#allocation2 + $0x108] sm:$0xff]
  %v2243 = vld [vmem:[#allocation2 + $0x110] sm:$0xff]
  %v2244 = vld [vmem:[#allocation2 + $0x118] sm:$0xff]
  %v2245 = vld [vmem:[#allocation2 + $0x120] sm:$0xff]
  %v2246 = vld [vmem:[#allocation2 + $0x128] sm:$0xff]
  %v2247 = vld [vmem:[#allocation2 + $0x130] sm:$0xff]
  %v2248 = vld [vmem:[#allocation2 + $0x138] sm:$0xff]
  %v2249 = vld [vmem:[#allocation2 + $0x140] sm:$0xff]
  %v2250 = vld [vmem:[#allocation2 + $0x148] sm:$0xff]
  %v2251 = vld [vmem:[#allocation2 + $0x150] sm:$0xff]
  %v2252 = vld [vmem:[#allocation2 + $0x158] sm:$0xff]
  %v2253 = vld [vmem:[#allocation2 + $0x160] sm:$0xff]
  %v2254 = vld [vmem:[#allocation2 + $0x168] sm:$0xff]
  %v2255 = vld [vmem:[#allocation2 + $0x170] sm:$0xff]
  %v2256 = vld [vmem:[#allocation2 + $0x178] sm:$0xff]
  %v2257 = vld [vmem:[#allocation2 + $0x180] sm:$0xff]
  %v2258 = vld [vmem:[#allocation2 + $0x188] sm:$0xff]
  %v2259 = vld [vmem:[#allocation2 + $0x190] sm:$0xff]
  %v2260 = vld [vmem:[#allocation2 + $0x198] sm:$0xff]
  %v2261 = vld [vmem:[#allocation2 + $0x1a0] sm:$0xff]
  %v2262 = vld [vmem:[#allocation2 + $0x1a8] sm:$0xff]
  %v2263 = vld [vmem:[#allocation2 + $0x1b0] sm:$0xff]
  %v2264 = vld [vmem:[#allocation2 + $0x1b8] sm:$0xff]
  %v2265 = vld [vmem:[#allocation2 + $0x1c0] sm:$0xff]
  %v2266 = vld [vmem:[#allocation2 + $0x1c8] sm:$0xff]
  %v2267 = vld [vmem:[#allocation2 + $0x1d0] sm:$0xff]
  %v2268 = vld [vmem:[#allocation2 + $0x1d8] sm:$0xff]
  %v2269 = vld [vmem:[#allocation2 + $0x1e0] sm:$0xff]
  %v2270 = vld [vmem:[#allocation2 + $0x1e8] sm:$0xff]
  %v2271 = vld [vmem:[#allocation2 + $0x1f0] sm:$0xff]
  %v2272 = vld [vmem:[#allocation2 + $0x1f8] sm:$0xff]
  %v2273 = vld [vmem:[#allocation2 + $0x200] sm:$0xff]
  %v2274 = vld [vmem:[#allocation2 + $0x208] sm:$0xff]
  %v2275 = vld [vmem:[#allocation2 + $0x210] sm:$0xff]
  %v2276 = vld [vmem:[#allocation2 + $0x218] sm:$0xff]
  %v2277 = vld [vmem:[#allocation2 + $0x220] sm:$0xff]
  %v2278 = vld [vmem:[#allocation2 + $0x228] sm:$0xff]
  %v2279 = vld [vmem:[#allocation2 + $0x230] sm:$0xff]
  %v2280 = vld [vmem:[#allocation2 + $0x238] sm:$0xff]
  %s2281 = scalar_lea.vmem %s3, 32
  %v2282 = vld [vmem:[%s2281] sm:$0xff]
  %v2283 = vld [vmem:[%s2281 + $0x8] sm:$0xff]
  %v2284 = vld [vmem:[%s2281 + $0x10] sm:$0xff]
  %v2285 = vld [vmem:[%s2281 + $0x18] sm:$0xff]
  %2287 = vset.pattern.permute.xlu0 0
  %2288 = vperm.xlu0 %2287, %v2282
  %v2289 = vpop.permute.xlu0 %2288
  %2292 = vset.pattern.permute.xlu0 0
  %2293 = vperm.xlu0 %2292, %v2283
  %v2294 = vpop.permute.xlu0 %2293
  %2297 = vset.pattern.permute.xlu0 0
  %2298 = vperm.xlu0 %2297, %v2284
  %v2299 = vpop.permute.xlu0 %2298
  %2302 = vset.pattern.permute.xlu0 0
  %2303 = vperm.xlu0 %2302, %v2285
  %v2304 = vpop.permute.xlu0 %2303
  %v2314 = vunpack.c.l.b16 %v2201
  %v2315 = vunpack.c.h.b16 %v2201
  %v2316 = vunpack.c.l.b16 %v2202
  %v2317 = vunpack.c.l.b16 %v2203
  %v2318 = vunpack.c.h.b16 %v2203
  %v2319 = vunpack.c.l.b16 %v2204
  %v2320 = vunpack.c.l.b16 %v2205
  %v2321 = vunpack.c.h.b16 %v2205
  %v2322 = vunpack.c.l.b16 %v2206
  %v2323 = vunpack.c.l.b16 %v2207
  %v2324 = vunpack.c.h.b16 %v2207
  %v2325 = vunpack.c.l.b16 %v2208
  %v2326 = vpack.c.b16 %v2317, %v2314
  %v2327 = vpack.c.b16 %v2318, %v2315
  %v2328 = vpack.c.b16 %v2319, %v2316
  %v2329 = vpack.c.b16 %v2323, %v2320
  %v2330 = vpack.c.b16 %v2324, %v2321
  %v2331 = vpack.c.b16 %v2325, %v2322
  %v2408 = vunpack.c.l.b16 %v2209
  %v2409 = vunpack.c.h.b16 %v2209
  %v2410 = vunpack.c.l.b16 %v2210
  %v2411 = vunpack.c.h.b16 %v2210
  %v2412 = vunpack.c.l.b16 %v2211
  %v2413 = vunpack.c.h.b16 %v2211
  %v2414 = vunpack.c.l.b16 %v2212
  %v2415 = vunpack.c.h.b16 %v2212
  %v2416 = vunpack.c.l.b16 %v2213
  %v2417 = vunpack.c.h.b16 %v2213
  %v2418 = vunpack.c.l.b16 %v2214
  %v2419 = vunpack.c.h.b16 %v2214
  %v2420 = vunpack.c.l.b16 %v2215
  %v2421 = vunpack.c.h.b16 %v2215
  %v2422 = vunpack.c.l.b16 %v2216
  %v2423 = vunpack.c.h.b16 %v2216
  %v2424 = vunpack.c.l.b16 %v2217
  %v2425 = vunpack.c.h.b16 %v2217
  %v2426 = vunpack.c.l.b16 %v2218
  %v2427 = vunpack.c.h.b16 %v2218
  %v2428 = vunpack.c.l.b16 %v2219
  %v2429 = vunpack.c.h.b16 %v2219
  %v2430 = vunpack.c.l.b16 %v2220
  %v2431 = vunpack.c.h.b16 %v2220
  %v2432 = vunpack.c.l.b16 %v2221
  %v2433 = vunpack.c.h.b16 %v2221
  %v2434 = vunpack.c.l.b16 %v2222
  %v2435 = vunpack.c.h.b16 %v2222
  %v2436 = vunpack.c.l.b16 %v2223
  %v2437 = vunpack.c.h.b16 %v2223
  %v2438 = vunpack.c.l.b16 %v2224
  %v2439 = vunpack.c.h.b16 %v2224
  %v2440 = vunpack.c.l.b16 %v2225
  %v2441 = vunpack.c.h.b16 %v2225
  %v2442 = vunpack.c.l.b16 %v2226
  %v2443 = vunpack.c.h.b16 %v2226
  %v2444 = vunpack.c.l.b16 %v2227
  %v2445 = vunpack.c.h.b16 %v2227
  %v2446 = vunpack.c.l.b16 %v2228
  %v2447 = vunpack.c.h.b16 %v2228
  %v2448 = vunpack.c.l.b16 %v2229
  %v2449 = vunpack.c.h.b16 %v2229
  %v2450 = vunpack.c.l.b16 %v2230
  %v2451 = vunpack.c.h.b16 %v2230
  %v2452 = vunpack.c.l.b16 %v2231
  %v2453 = vunpack.c.h.b16 %v2231
  %v2454 = vunpack.c.l.b16 %v2232
  %v2455 = vunpack.c.h.b16 %v2232
  %v2456 = vunpack.c.l.b16 %v2233
  %v2457 = vunpack.c.h.b16 %v2233
  %v2458 = vunpack.c.l.b16 %v2234
  %v2459 = vunpack.c.h.b16 %v2234
  %v2460 = vunpack.c.l.b16 %v2235
  %v2461 = vunpack.c.h.b16 %v2235
  %v2462 = vunpack.c.l.b16 %v2236
  %v2463 = vunpack.c.h.b16 %v2236
  %v2464 = vunpack.c.l.b16 %v2237
  %v2465 = vunpack.c.h.b16 %v2237
  %v2466 = vunpack.c.l.b16 %v2238
  %v2467 = vunpack.c.h.b16 %v2238
  %v2468 = vunpack.c.l.b16 %v2239
  %v2469 = vunpack.c.h.b16 %v2239
  %v2470 = vunpack.c.l.b16 %v2240
  %v2471 = vunpack.c.h.b16 %v2240
  %v2472 = vunpack.c.l.b16 %v2241
  %v2473 = vunpack.c.h.b16 %v2241
  %v2474 = vunpack.c.l.b16 %v2242
  %v2475 = vunpack.c.h.b16 %v2242
  %v2476 = vunpack.c.l.b16 %v2243
  %v2477 = vunpack.c.h.b16 %v2243
  %v2478 = vunpack.c.l.b16 %v2244
  %v2479 = vunpack.c.h.b16 %v2244
  %v2480 = vunpack.c.l.b16 %v2245
  %v2481 = vunpack.c.h.b16 %v2245
  %v2482 = vunpack.c.l.b16 %v2246
  %v2483 = vunpack.c.h.b16 %v2246
  %v2484 = vunpack.c.l.b16 %v2247
  %v2485 = vunpack.c.h.b16 %v2247
  %v2486 = vunpack.c.l.b16 %v2248
  %v2487 = vunpack.c.h.b16 %v2248
  %v2488 = vunpack.c.l.b16 %v2249
  %v2489 = vunpack.c.h.b16 %v2249
  %v2490 = vunpack.c.l.b16 %v2250
  %v2491 = vunpack.c.h.b16 %v2250
  %v2492 = vunpack.c.l.b16 %v2251
  %v2493 = vunpack.c.h.b16 %v2251
  %v2494 = vunpack.c.l.b16 %v2252
  %v2495 = vunpack.c.h.b16 %v2252
  %v2496 = vunpack.c.l.b16 %v2253
  %v2497 = vunpack.c.h.b16 %v2253
  %v2498 = vunpack.c.l.b16 %v2254
  %v2499 = vunpack.c.h.b16 %v2254
  %v2500 = vunpack.c.l.b16 %v2255
  %v2501 = vunpack.c.h.b16 %v2255
  %v2502 = vunpack.c.l.b16 %v2256
  %v2503 = vunpack.c.h.b16 %v2256
  %v2504 = vunpack.c.l.b16 %v2257
  %v2505 = vunpack.c.h.b16 %v2257
  %v2506 = vunpack.c.l.b16 %v2258
  %v2507 = vunpack.c.h.b16 %v2258
  %v2508 = vunpack.c.l.b16 %v2259
  %v2509 = vunpack.c.h.b16 %v2259
  %v2510 = vunpack.c.l.b16 %v2260
  %v2511 = vunpack.c.h.b16 %v2260
  %v2512 = vunpack.c.l.b16 %v2261
  %v2513 = vunpack.c.h.b16 %v2261
  %v2514 = vunpack.c.l.b16 %v2262
  %v2515 = vunpack.c.h.b16 %v2262
  %v2516 = vunpack.c.l.b16 %v2263
  %v2517 = vunpack.c.h.b16 %v2263
  %v2518 = vunpack.c.l.b16 %v2264
  %v2519 = vunpack.c.h.b16 %v2264
  %v2520 = vunpack.c.l.b16 %v2265
  %v2521 = vunpack.c.h.b16 %v2265
  %v2522 = vunpack.c.l.b16 %v2266
  %v2523 = vunpack.c.h.b16 %v2266
  %v2524 = vunpack.c.l.b16 %v2267
  %v2525 = vunpack.c.h.b16 %v2267
  %v2526 = vunpack.c.l.b16 %v2268
  %v2527 = vunpack.c.h.b16 %v2268
  %v2528 = vunpack.c.l.b16 %v2269
  %v2529 = vunpack.c.h.b16 %v2269
  %v2530 = vunpack.c.l.b16 %v2270
  %v2531 = vunpack.c.h.b16 %v2270
  %v2532 = vunpack.c.l.b16 %v2271
  %v2533 = vunpack.c.h.b16 %v2271
  %v2534 = vunpack.c.l.b16 %v2272
  %v2535 = vunpack.c.h.b16 %v2272
  %v2536 = vunpack.c.l.b16 %v2273
  %v2537 = vunpack.c.h.b16 %v2273
  %v2538 = vunpack.c.l.b16 %v2274
  %v2539 = vunpack.c.h.b16 %v2274
  %v2540 = vunpack.c.l.b16 %v2275
  %v2541 = vunpack.c.h.b16 %v2275
  %v2542 = vunpack.c.l.b16 %v2276
  %v2543 = vunpack.c.h.b16 %v2276
  %v2544 = vunpack.c.l.b16 %v2277
  %v2545 = vunpack.c.h.b16 %v2277
  %v2546 = vunpack.c.l.b16 %v2278
  %v2547 = vunpack.c.h.b16 %v2278
  %v2548 = vunpack.c.l.b16 %v2279
  %v2549 = vunpack.c.h.b16 %v2279
  %v2550 = vunpack.c.l.b16 %v2280
  %v2551 = vunpack.c.h.b16 %v2280
  %v2552 = vpack.c.b16 %v2412, %v2408
  %v2553 = vpack.c.b16 %v2413, %v2409
  %v2554 = vpack.c.b16 %v2414, %v2410
  %v2555 = vpack.c.b16 %v2415, %v2411
  %v2556 = vpack.c.b16 %v2420, %v2416
  %v2557 = vpack.c.b16 %v2421, %v2417
  %v2558 = vpack.c.b16 %v2422, %v2418
  %v2559 = vpack.c.b16 %v2423, %v2419
  %v2560 = vpack.c.b16 %v2428, %v2424
  %v2561 = vpack.c.b16 %v2429, %v2425
  %v2562 = vpack.c.b16 %v2430, %v2426
  %v2563 = vpack.c.b16 %v2431, %v2427
  %v2564 = vpack.c.b16 %v2436, %v2432
  %v2565 = vpack.c.b16 %v2437, %v2433
  %v2566 = vpack.c.b16 %v2438, %v2434
  %v2567 = vpack.c.b16 %v2439, %v2435
  %v2568 = vpack.c.b16 %v2444, %v2440
  %v2569 = vpack.c.b16 %v2445, %v2441
  %v2570 = vpack.c.b16 %v2446, %v2442
  %v2571 = vpack.c.b16 %v2447, %v2443
  %v2572 = vpack.c.b16 %v2452, %v2448
  %v2573 = vpack.c.b16 %v2453, %v2449
  %v2574 = vpack.c.b16 %v2454, %v2450
  %v2575 = vpack.c.b16 %v2455, %v2451
  %v2576 = vpack.c.b16 %v2460, %v2456
  %v2577 = vpack.c.b16 %v2461, %v2457
  %v2578 = vpack.c.b16 %v2462, %v2458
  %v2579 = vpack.c.b16 %v2463, %v2459
  %v2580 = vpack.c.b16 %v2468, %v2464
  %v2581 = vpack.c.b16 %v2469, %v2465
  %v2582 = vpack.c.b16 %v2470, %v2466
  %v2583 = vpack.c.b16 %v2471, %v2467
  %v2584 = vpack.c.b16 %v2476, %v2472
  %v2585 = vpack.c.b16 %v2477, %v2473
  %v2586 = vpack.c.b16 %v2478, %v2474
  %v2587 = vpack.c.b16 %v2479, %v2475
  %v2588 = vpack.c.b16 %v2484, %v2480
  %v2589 = vpack.c.b16 %v2485, %v2481
  %v2590 = vpack.c.b16 %v2486, %v2482
  %v2591 = vpack.c.b16 %v2487, %v2483
  %v2592 = vpack.c.b16 %v2492, %v2488
  %v2593 = vpack.c.b16 %v2493, %v2489
  %v2594 = vpack.c.b16 %v2494, %v2490
  %v2595 = vpack.c.b16 %v2495, %v2491
  %v2596 = vpack.c.b16 %v2500, %v2496
  %v2597 = vpack.c.b16 %v2501, %v2497
  %v2598 = vpack.c.b16 %v2502, %v2498
  %v2599 = vpack.c.b16 %v2503, %v2499
  %v2600 = vpack.c.b16 %v2508, %v2504
  %v2601 = vpack.c.b16 %v2509, %v2505
  %v2602 = vpack.c.b16 %v2510, %v2506
  %v2603 = vpack.c.b16 %v2511, %v2507
  %v2604 = vpack.c.b16 %v2516, %v2512
  %v2605 = vpack.c.b16 %v2517, %v2513
  %v2606 = vpack.c.b16 %v2518, %v2514
  %v2607 = vpack.c.b16 %v2519, %v2515
  %v2608 = vpack.c.b16 %v2524, %v2520
  %v2609 = vpack.c.b16 %v2525, %v2521
  %v2610 = vpack.c.b16 %v2526, %v2522
  %v2611 = vpack.c.b16 %v2527, %v2523
  %v2612 = vpack.c.b16 %v2532, %v2528
  %v2613 = vpack.c.b16 %v2533, %v2529
  %v2614 = vpack.c.b16 %v2534, %v2530
  %v2615 = vpack.c.b16 %v2535, %v2531
  %v2616 = vpack.c.b16 %v2540, %v2536
  %v2617 = vpack.c.b16 %v2541, %v2537
  %v2618 = vpack.c.b16 %v2542, %v2538
  %v2619 = vpack.c.b16 %v2543, %v2539
  %v2620 = vpack.c.b16 %v2548, %v2544
  %v2621 = vpack.c.b16 %v2549, %v2545
  %v2622 = vpack.c.b16 %v2550, %v2546
  %v2623 = vpack.c.b16 %v2551, %v2547
  %v2697 = vsel %vm1293, %v2328, 0
  %v2700 = vsel %vm1293, %v2331, 0
  %2702 = vmatpush.bf16.msra.mxu0 %v2580
  %2703 = vmatpush.bf16.msra.mxu0 %v2576
  %2704 = vmatpush.bf16.msra.mxu0 %v2572
  %2705 = vmatpush.bf16.msra.mxu0 %v2568
  %2706 = vmatpush.bf16.msra.mxu0 %v2564
  %2707 = vmatpush.bf16.msra.mxu0 %v2560
  %2708 = vmatpush.bf16.msra.mxu0 %v2556
  %2709 = vmatpush.bf16.msra.mxu0 %v2552
  %2710 = vmatmul.bf16.gmra.mxu0 %v2326
  %v2711 = vpop.f32.mrf.mxu0
  %v2712 = vadd.f32 %v2289, %v2711
  %v2713 = vpop.f32.mrf.mxu0
  %v2714 = vadd.f32 %v2294, %v2713
  %2715 = vmatmul.bf16.gmra.mxu0 %v2329
  %v2716 = vpop.f32.mrf.mxu0
  %v2717 = vadd.f32 %v2299, %v2716
  %v2718 = vpop.f32.mrf.mxu0
  %v2719 = vadd.f32 %v2304, %v2718
  %2720 = vdwg.mxu0
  %2721 = vmatpush.bf16.msra.mxu0 %v2612
  %2722 = vmatpush.bf16.msra.mxu0 %v2608
  %2723 = vmatpush.bf16.msra.mxu0 %v2604
  %2724 = vmatpush.bf16.msra.mxu0 %v2600
  %2725 = vmatpush.bf16.msra.mxu0 %v2596
  %2726 = vmatpush.bf16.msra.mxu0 %v2592
  %2727 = vmatpush.bf16.msra.mxu0 %v2588
  %2728 = vmatpush.bf16.msra.mxu0 %v2584
  %2729 = vmatmul.bf16.gmra.mxu0 %v2327
  %v2730 = vpop.f32.mrf.mxu0
  %v2731 = vadd.f32 %v2712, %v2730
  %v2732 = vpop.f32.mrf.mxu0
  %v2733 = vadd.f32 %v2714, %v2732
  %2734 = vmatmul.bf16.gmra.mxu0 %v2330
  %v2735 = vpop.f32.mrf.mxu0
  %v2736 = vadd.f32 %v2717, %v2735
  %v2737 = vpop.f32.mrf.mxu0
  %v2738 = vadd.f32 %v2719, %v2737
  %2739 = vdwg.mxu0
  %2740 = vmatpush.bf16.msra.mxu0 0
  %2741 = vmatpush.bf16.msra.mxu0 0
  %2742 = vmatpush.bf16.msra.mxu0 0
  %2743 = vmatpush.bf16.msra.mxu0 0
  %2744 = vmatpush.bf16.msra.mxu0 0
  %2745 = vmatpush.bf16.msra.mxu0 0
  %2746 = vmatpush.bf16.msra.mxu0 %v2620
  %2747 = vmatpush.bf16.msra.mxu0 %v2616
  %2748 = vmatmul.bf16.gmra.mxu0 %v2697
  %v2749 = vpop.f32.mrf.mxu0
  %v2750 = vadd.f32 %v2731, %v2749
  %v2751 = vpop.f32.mrf.mxu0
  %v2752 = vadd.f32 %v2733, %v2751
  %2753 = vmatmul.bf16.gmra.mxu0 %v2700
  %v2754 = vpop.f32.mrf.mxu0
  %v2755 = vadd.f32 %v2736, %v2754
  %v2756 = vpop.f32.mrf.mxu0
  %v2757 = vadd.f32 %v2738, %v2756
  %2758 = vdwg.mxu0
  %2759 = vmatpush.bf16.msra.mxu0 %v2581
  %2760 = vmatpush.bf16.msra.mxu0 %v2577
  %2761 = vmatpush.bf16.msra.mxu0 %v2573
  %2762 = vmatpush.bf16.msra.mxu0 %v2569
  %2763 = vmatpush.bf16.msra.mxu0 %v2565
  %2764 = vmatpush.bf16.msra.mxu0 %v2561
  %2765 = vmatpush.bf16.msra.mxu0 %v2557
  %2766 = vmatpush.bf16.msra.mxu0 %v2553
  %2767 = vmatmul.bf16.gmra.mxu0 %v2326
  %v2768 = vpop.f32.mrf.mxu0
  %v2769 = vadd.f32 %v2289, %v2768
  %v2770 = vpop.f32.mrf.mxu0
  %v2771 = vadd.f32 %v2294, %v2770
  %2772 = vmatmul.bf16.gmra.mxu0 %v2329
  %v2773 = vpop.f32.mrf.mxu0
  %v2774 = vadd.f32 %v2299, %v2773
  %v2775 = vpop.f32.mrf.mxu0
  %v2776 = vadd.f32 %v2304, %v2775
  %2777 = vdwg.mxu0
  %2778 = vmatpush.bf16.msra.mxu0 %v2613
  %2779 = vmatpush.bf16.msra.mxu0 %v2609
  %2780 = vmatpush.bf16.msra.mxu0 %v2605
  %2781 = vmatpush.bf16.msra.mxu0 %v2601
  %2782 = vmatpush.bf16.msra.mxu0 %v2597
  %2783 = vmatpush.bf16.msra.mxu0 %v2593
  %2784 = vmatpush.bf16.msra.mxu0 %v2589
  %2785 = vmatpush.bf16.msra.mxu0 %v2585
  %2786 = vmatmul.bf16.gmra.mxu0 %v2327
  %v2787 = vpop.f32.mrf.mxu0
  %v2788 = vadd.f32 %v2769, %v2787
  %v2789 = vpop.f32.mrf.mxu0
  %v2790 = vadd.f32 %v2771, %v2789
  %2791 = vmatmul.bf16.gmra.mxu0 %v2330
  %v2792 = vpop.f32.mrf.mxu0
  %v2793 = vadd.f32 %v2774, %v2792
  %v2794 = vpop.f32.mrf.mxu0
  %v2795 = vadd.f32 %v2776, %v2794
  %2796 = vdwg.mxu0
  %2797 = vmatpush.bf16.msra.mxu0 0
  %2798 = vmatpush.bf16.msra.mxu0 0
  %2799 = vmatpush.bf16.msra.mxu0 0
  %2800 = vmatpush.bf16.msra.mxu0 0
  %2801 = vmatpush.bf16.msra.mxu0 0
  %2802 = vmatpush.bf16.msra.mxu0 0
  %2803 = vmatpush.bf16.msra.mxu0 %v2621
  %2804 = vmatpush.bf16.msra.mxu0 %v2617
  %2805 = vmatmul.bf16.gmra.mxu0 %v2697
  %v2806 = vpop.f32.mrf.mxu0
  %v2807 = vadd.f32 %v2788, %v2806
  %v2808 = vpop.f32.mrf.mxu0
  %v2809 = vadd.f32 %v2790, %v2808
  %2810 = vmatmul.bf16.gmra.mxu0 %v2700
  %v2811 = vpop.f32.mrf.mxu0
  %v2812 = vadd.f32 %v2793, %v2811
  %v2813 = vpop.f32.mrf.mxu0
  %v2814 = vadd.f32 %v2795, %v2813
  %2815 = vdwg.mxu0
  %2816 = vmatpush.bf16.msra.mxu0 %v2582
  %2817 = vmatpush.bf16.msra.mxu0 %v2578
  %2818 = vmatpush.bf16.msra.mxu0 %v2574
  %2819 = vmatpush.bf16.msra.mxu0 %v2570
  %2820 = vmatpush.bf16.msra.mxu0 %v2566
  %2821 = vmatpush.bf16.msra.mxu0 %v2562
  %2822 = vmatpush.bf16.msra.mxu0 %v2558
  %2823 = vmatpush.bf16.msra.mxu0 %v2554
  %2824 = vmatmul.bf16.gmra.mxu0 %v2326
  %v2825 = vpop.f32.mrf.mxu0
  %v2826 = vadd.f32 %v2289, %v2825
  %v2827 = vpop.f32.mrf.mxu0
  %v2828 = vadd.f32 %v2294, %v2827
  %2829 = vmatmul.bf16.gmra.mxu0 %v2329
  %v2830 = vpop.f32.mrf.mxu0
  %v2831 = vadd.f32 %v2299, %v2830
  %v2832 = vpop.f32.mrf.mxu0
  %v2833 = vadd.f32 %v2304, %v2832
  %2834 = vdwg.mxu0
  %2835 = vmatpush.bf16.msra.mxu0 %v2614
  %2836 = vmatpush.bf16.msra.mxu0 %v2610
  %2837 = vmatpush.bf16.msra.mxu0 %v2606
  %2838 = vmatpush.bf16.msra.mxu0 %v2602
  %2839 = vmatpush.bf16.msra.mxu0 %v2598
  %2840 = vmatpush.bf16.msra.mxu0 %v2594
  %2841 = vmatpush.bf16.msra.mxu0 %v2590
  %2842 = vmatpush.bf16.msra.mxu0 %v2586
  %2843 = vmatmul.bf16.gmra.mxu0 %v2327
  %v2844 = vpop.f32.mrf.mxu0
  %v2845 = vadd.f32 %v2826, %v2844
  %v2846 = vpop.f32.mrf.mxu0
  %v2847 = vadd.f32 %v2828, %v2846
  %2848 = vmatmul.bf16.gmra.mxu0 %v2330
  %v2849 = vpop.f32.mrf.mxu0
  %v2850 = vadd.f32 %v2831, %v2849
  %v2851 = vpop.f32.mrf.mxu0
  %v2852 = vadd.f32 %v2833, %v2851
  %2853 = vdwg.mxu0
  %2854 = vmatpush.bf16.msra.mxu0 0
  %2855 = vmatpush.bf16.msra.mxu0 0
  %2856 = vmatpush.bf16.msra.mxu0 0
  %2857 = vmatpush.bf16.msra.mxu0 0
  %2858 = vmatpush.bf16.msra.mxu0 0
  %2859 = vmatpush.bf16.msra.mxu0 0
  %2860 = vmatpush.bf16.msra.mxu0 %v2622
  %2861 = vmatpush.bf16.msra.mxu0 %v2618
  %2862 = vmatmul.bf16.gmra.mxu0 %v2697
  %v2863 = vpop.f32.mrf.mxu0
  %v2864 = vadd.f32 %v2845, %v2863
  %v2865 = vpop.f32.mrf.mxu0
  %v2866 = vadd.f32 %v2847, %v2865
  %2867 = vmatmul.bf16.gmra.mxu0 %v2700
  %v2868 = vpop.f32.mrf.mxu0
  %v2869 = vadd.f32 %v2850, %v2868
  %v2870 = vpop.f32.mrf.mxu0
  %v2871 = vadd.f32 %v2852, %v2870
  %2872 = vdwg.mxu0
  %2873 = vmatpush.bf16.msra.mxu0 %v2583
  %2874 = vmatpush.bf16.msra.mxu0 %v2579
  %2875 = vmatpush.bf16.msra.mxu0 %v2575
  %2876 = vmatpush.bf16.msra.mxu0 %v2571
  %2877 = vmatpush.bf16.msra.mxu0 %v2567
  %2878 = vmatpush.bf16.msra.mxu0 %v2563
  %2879 = vmatpush.bf16.msra.mxu0 %v2559
  %2880 = vmatpush.bf16.msra.mxu0 %v2555
  %2881 = vmatmul.bf16.gmra.mxu0 %v2326
  %v2882 = vpop.f32.mrf.mxu0
  %v2883 = vadd.f32 %v2289, %v2882
  %v2884 = vpop.f32.mrf.mxu0
  %v2885 = vadd.f32 %v2294, %v2884
  %2886 = vmatmul.bf16.gmra.mxu0 %v2329
  %v2887 = vpop.f32.mrf.mxu0
  %v2888 = vadd.f32 %v2299, %v2887
  %v2889 = vpop.f32.mrf.mxu0
  %v2890 = vadd.f32 %v2304, %v2889
  %2891 = vdwg.mxu0
  %2892 = vmatpush.bf16.msra.mxu0 %v2615
  %2893 = vmatpush.bf16.msra.mxu0 %v2611
  %2894 = vmatpush.bf16.msra.mxu0 %v2607
  %2895 = vmatpush.bf16.msra.mxu0 %v2603
  %2896 = vmatpush.bf16.msra.mxu0 %v2599
  %2897 = vmatpush.bf16.msra.mxu0 %v2595
  %2898 = vmatpush.bf16.msra.mxu0 %v2591
  %2899 = vmatpush.bf16.msra.mxu0 %v2587
  %2900 = vmatmul.bf16.gmra.mxu0 %v2327
  %v2901 = vpop.f32.mrf.mxu0
  %v2902 = vadd.f32 %v2883, %v2901
  %v2903 = vpop.f32.mrf.mxu0
  %v2904 = vadd.f32 %v2885, %v2903
  %2905 = vmatmul.bf16.gmra.mxu0 %v2330
  %v2906 = vpop.f32.mrf.mxu0
  %v2907 = vadd.f32 %v2888, %v2906
  %v2908 = vpop.f32.mrf.mxu0
  %v2909 = vadd.f32 %v2890, %v2908
  %2910 = vdwg.mxu0
  %2911 = vmatpush.bf16.msra.mxu0 0
  %2912 = vmatpush.bf16.msra.mxu0 0
  %2913 = vmatpush.bf16.msra.mxu0 0
  %2914 = vmatpush.bf16.msra.mxu0 0
  %2915 = vmatpush.bf16.msra.mxu0 0
  %2916 = vmatpush.bf16.msra.mxu0 0
  %2917 = vmatpush.bf16.msra.mxu0 %v2623
  %2918 = vmatpush.bf16.msra.mxu0 %v2619
  %2919 = vmatmul.bf16.gmra.mxu0 %v2697
  %v2920 = vpop.f32.mrf.mxu0
  %v2921 = vadd.f32 %v2902, %v2920
  %v2922 = vpop.f32.mrf.mxu0
  %v2923 = vadd.f32 %v2904, %v2922
  %2924 = vmatmul.bf16.gmra.mxu0 %v2700
  %v2925 = vpop.f32.mrf.mxu0
  %v2926 = vadd.f32 %v2907, %v2925
  %v2927 = vpop.f32.mrf.mxu0
  %v2928 = vadd.f32 %v2909, %v2927
  %2929 = vdwg.mxu0
  %v2930 = vmax.f32 %v2750, 0.0
  %v2931 = vmax.f32 %v2807, 0.0
  %v2932 = vmax.f32 %v2864, 0.0
  %v2933 = vmax.f32 %v2921, 0.0
  %v2934 = vmax.f32 %v2752, 0.0
  %v2935 = vmax.f32 %v2809, 0.0
  %v2936 = vmax.f32 %v2866, 0.0
  %v2937 = vmax.f32 %v2923, 0.0
  %v2938 = vmax.f32 %v2755, 0.0
  %v2939 = vmax.f32 %v2812, 0.0
  %v2940 = vmax.f32 %v2869, 0.0
  %v2941 = vmax.f32 %v2926, 0.0
  %v2942 = vmax.f32 %v2757, 0.0
  %v2943 = vmax.f32 %v2814, 0.0
  %v2944 = vmax.f32 %v2871, 0.0
  %v2945 = vmax.f32 %v2928, 0.0
  %2946 = vrot.lane.b32.xlu0 %v2930, 17
  %v2947 = vpop.permute.xlu0 %2946
  %2948 = vrot.lane.b32.xlu0 %v2934, 17
  %v2949 = vpop.permute.xlu0 %2948
  %2950 = vrot.lane.b32.xlu0 %v2938, 17
  %v2951 = vpop.permute.xlu0 %2950
  %2952 = vrot.lane.b32.xlu0 %v2942, 17
  %v2953 = vpop.permute.xlu0 %2952
  %2954 = vrot.lane.b32.xlu0 %v2931, 17
  %v2955 = vpop.permute.xlu0 %2954
  %2956 = vrot.lane.b32.xlu0 %v2935, 17
  %v2957 = vpop.permute.xlu0 %2956
  %2958 = vrot.lane.b32.xlu0 %v2939, 17
  %v2959 = vpop.permute.xlu0 %2958
  %2960 = vrot.lane.b32.xlu0 %v2943, 17
  %v2961 = vpop.permute.xlu0 %2960
  %2962 = vrot.lane.b32.xlu0 %v2932, 17
  %v2963 = vpop.permute.xlu0 %2962
  %2964 = vrot.lane.b32.xlu0 %v2936, 17
  %v2965 = vpop.permute.xlu0 %2964
  %2966 = vrot.lane.b32.xlu0 %v2940, 17
  %v2967 = vpop.permute.xlu0 %2966
  %2968 = vrot.lane.b32.xlu0 %v2944, 17
  %v2969 = vpop.permute.xlu0 %2968
  %2970 = vrot.lane.b32.xlu0 %v2933, 17
  %v2971 = vpop.permute.xlu0 %2970
  %2972 = vrot.lane.b32.xlu0 %v2937, 17
  %v2973 = vpop.permute.xlu0 %2972
  %2974 = vrot.lane.b32.xlu0 %v2941, 17
  %v2975 = vpop.permute.xlu0 %2974
  %2976 = vrot.lane.b32.xlu0 %v2945, 17
  %v2977 = vpop.permute.xlu0 %2976
  %v2978 = vsel %vm95, %v2963, %v2971
  %v2979 = vsel %vm95, %v2965, %v2973
  %v2980 = vsel %vm95, %v2967, %v2975
  %v2981 = vsel %vm95, %v2969, %v2977
  %v2982 = vsel %vm95, %v2955, %v2963
  %v2983 = vsel %vm95, %v2957, %v2965
  %v2984 = vsel %vm95, %v2959, %v2967
  %v2985 = vsel %vm95, %v2961, %v2969
  %v2986 = vsel %vm95, %v2947, %v2955
  %v2987 = vsel %vm95, %v2949, %v2957
  %v2988 = vsel %vm95, %v2951, %v2959
  %v2989 = vsel %vm95, %v2953, %v2961
  %v2990 = vsel %vm95, %v2971, %v2947
  %v2991 = vsel %vm95, %v2973, %v2949
  %v2992 = vsel %vm95, %v2975, %v2951
  %v2993 = vsel %vm95, %v2977, %v2953
  %v2994 = vmul.f32 %v2990, %v113
  %v2995 = vmul.f32 %v2986, %v114
  %v2996 = vmul.f32 %v2982, %v115
  %v2997 = vmul.f32 %v2978, %v116
  %v2998 = vmul.f32 %v2991, %v113
  %v2999 = vmul.f32 %v2987, %v114
  %v3000 = vmul.f32 %v2983, %v115
  %v3001 = vmul.f32 %v2979, %v116
  %v3002 = vmul.f32 %v2992, %v113
  %v3003 = vmul.f32 %v2988, %v114
  %v3004 = vmul.f32 %v2984, %v115
  %v3005 = vmul.f32 %v2980, %v116
  %v3006 = vmul.f32 %v2993, %v113
  %v3007 = vmul.f32 %v2989, %v114
  %v3008 = vmul.f32 %v2985, %v115
  %v3009 = vmul.f32 %v2981, %v116
  %v3010 = vpack.c.bf16 %v2995, %v2994
  %v3011 = vpack.c.bf16 %v2997, %v2996
  %v3012 = vpack.c.bf16 %v2999, %v2998
  %v3013 = vpack.c.bf16 %v3001, %v3000
  %v3014 = vpack.c.bf16 %v3003, %v3002
  %v3015 = vpack.c.bf16 %v3005, %v3004
  %v3016 = vpack.c.bf16 %v3007, %v3006
  %v3017 = vpack.c.bf16 %v3009, %v3008
  %3018 = vst [vmem:[#allocation2] sm:$0xff] %v3010
  %3019 = vst [vmem:[#allocation2 + $0x8] sm:$0xff] %v3011
  %3020 = vst [vmem:[#allocation2 + $0x10] sm:$0xff] %v3012
  %3021 = vst [vmem:[#allocation2 + $0x18] sm:$0xff] %v3013
  %3022 = vst [vmem:[#allocation2 + $0x20] sm:$0xff] %v3014
  %3023 = vst [vmem:[#allocation2 + $0x28] sm:$0xff] %v3015
  %3024 = vst [vmem:[#allocation2 + $0x30] sm:$0xff] %v3016
  %3025 = vst [vmem:[#allocation2 + $0x38] sm:$0xff] %v3017
  %3026 = vrot.lane.b32.xlu0 %v2930, 16
  %v3027 = vpop.permute.xlu0 %3026
  %3028 = vrot.lane.b32.xlu0 %v2934, 16
  %v3029 = vpop.permute.xlu0 %3028
  %3030 = vrot.lane.b32.xlu0 %v2938, 16
  %v3031 = vpop.permute.xlu0 %3030
  %3032 = vrot.lane.b32.xlu0 %v2942, 16
  %v3033 = vpop.permute.xlu0 %3032
  %3034 = vrot.lane.b32.xlu0 %v2931, 16
  %v3035 = vpop.permute.xlu0 %3034
  %3036 = vrot.lane.b32.xlu0 %v2935, 16
  %v3037 = vpop.permute.xlu0 %3036
  %3038 = vrot.lane.b32.xlu0 %v2939, 16
  %v3039 = vpop.permute.xlu0 %3038
  %3040 = vrot.lane.b32.xlu0 %v2943, 16
  %v3041 = vpop.permute.xlu0 %3040
  %3042 = vrot.lane.b32.xlu0 %v2932, 16
  %v3043 = vpop.permute.xlu0 %3042
  %3044 = vrot.lane.b32.xlu0 %v2936, 16
  %v3045 = vpop.permute.xlu0 %3044
  %3046 = vrot.lane.b32.xlu0 %v2940, 16
  %v3047 = vpop.permute.xlu0 %3046
  %3048 = vrot.lane.b32.xlu0 %v2944, 16
  %v3049 = vpop.permute.xlu0 %3048
  %3050 = vrot.lane.b32.xlu0 %v2933, 16
  %v3051 = vpop.permute.xlu0 %3050
  %3052 = vrot.lane.b32.xlu0 %v2937, 16
  %v3053 = vpop.permute.xlu0 %3052
  %3054 = vrot.lane.b32.xlu0 %v2941, 16
  %v3055 = vpop.permute.xlu0 %3054
  %3056 = vrot.lane.b32.xlu0 %v2945, 16
  %v3057 = vpop.permute.xlu0 %3056
  %v3058 = vsel %vm185, %v3043, %v3051
  %v3059 = vsel %vm185, %v3045, %v3053
  %v3060 = vsel %vm185, %v3047, %v3055
  %v3061 = vsel %vm185, %v3049, %v3057
  %v3062 = vsel %vm185, %v3035, %v3043
  %v3063 = vsel %vm185, %v3037, %v3045
  %v3064 = vsel %vm185, %v3039, %v3047
  %v3065 = vsel %vm185, %v3041, %v3049
  %v3066 = vsel %vm185, %v3027, %v3035
  %v3067 = vsel %vm185, %v3029, %v3037
  %v3068 = vsel %vm185, %v3031, %v3039
  %v3069 = vsel %vm185, %v3033, %v3041
  %v3070 = vsel %vm185, %v3051, %v3027
  %v3071 = vsel %vm185, %v3053, %v3029
  %v3072 = vsel %vm185, %v3055, %v3031
  %v3073 = vsel %vm185, %v3057, %v3033
  %v3074 = vmul.f32 %v3070, %v203
  %v3075 = vmul.f32 %v3066, %v204
  %v3076 = vmul.f32 %v3062, %v205
  %v3077 = vmul.f32 %v3058, %v206
  %v3078 = vmul.f32 %v3071, %v203
  %v3079 = vmul.f32 %v3067, %v204
  %v3080 = vmul.f32 %v3063, %v205
  %v3081 = vmul.f32 %v3059, %v206
  %v3082 = vmul.f32 %v3072, %v203
  %v3083 = vmul.f32 %v3068, %v204
  %v3084 = vmul.f32 %v3064, %v205
  %v3085 = vmul.f32 %v3060, %v206
  %v3086 = vmul.f32 %v3073, %v203
  %v3087 = vmul.f32 %v3069, %v204
  %v3088 = vmul.f32 %v3065, %v205
  %v3089 = vmul.f32 %v3061, %v206
  %v3090 = vpack.c.bf16 %v3075, %v3074
  %v3091 = vpack.c.bf16 %v3077, %v3076
  %v3092 = vpack.c.bf16 %v3079, %v3078
  %v3093 = vpack.c.bf16 %v3081, %v3080
  %v3094 = vpack.c.bf16 %v3083, %v3082
  %v3095 = vpack.c.bf16 %v3085, %v3084
  %v3096 = vpack.c.bf16 %v3087, %v3086
  %v3097 = vpack.c.bf16 %v3089, %v3088
  %3098 = vst [vmem:[#allocation2 + $0x40] sm:$0xff] %v3090
  %3099 = vst [vmem:[#allocation2 + $0x48] sm:$0xff] %v3091
  %3100 = vst [vmem:[#allocation2 + $0x50] sm:$0xff] %v3092
  %3101 = vst [vmem:[#allocation2 + $0x58] sm:$0xff] %v3093
  %3102 = vst [vmem:[#allocation2 + $0x60] sm:$0xff] %v3094
  %3103 = vst [vmem:[#allocation2 + $0x68] sm:$0xff] %v3095
  %3104 = vst [vmem:[#allocation2 + $0x70] sm:$0xff] %v3096
  %3105 = vst [vmem:[#allocation2 + $0x78] sm:$0xff] %v3097
  %3106 = vrot.lane.b32.xlu0 %v2930, 15
  %v3107 = vpop.permute.xlu0 %3106
  %3108 = vrot.lane.b32.xlu0 %v2934, 15
  %v3109 = vpop.permute.xlu0 %3108
  %3110 = vrot.lane.b32.xlu0 %v2938, 15
  %v3111 = vpop.permute.xlu0 %3110
  %3112 = vrot.lane.b32.xlu0 %v2942, 15
  %v3113 = vpop.permute.xlu0 %3112
  %3114 = vrot.lane.b32.xlu0 %v2931, 15
  %v3115 = vpop.permute.xlu0 %3114
  %3116 = vrot.lane.b32.xlu0 %v2935, 15
  %v3117 = vpop.permute.xlu0 %3116
  %3118 = vrot.lane.b32.xlu0 %v2939, 15
  %v3119 = vpop.permute.xlu0 %3118
  %3120 = vrot.lane.b32.xlu0 %v2943, 15
  %v3121 = vpop.permute.xlu0 %3120
  %3122 = vrot.lane.b32.xlu0 %v2932, 15
  %v3123 = vpop.permute.xlu0 %3122
  %3124 = vrot.lane.b32.xlu0 %v2936, 15
  %v3125 = vpop.permute.xlu0 %3124
  %3126 = vrot.lane.b32.xlu0 %v2940, 15
  %v3127 = vpop.permute.xlu0 %3126
  %3128 = vrot.lane.b32.xlu0 %v2944, 15
  %v3129 = vpop.permute.xlu0 %3128
  %3130 = vrot.lane.b32.xlu0 %v2933, 15
  %v3131 = vpop.permute.xlu0 %3130
  %3132 = vrot.lane.b32.xlu0 %v2937, 15
  %v3133 = vpop.permute.xlu0 %3132
  %3134 = vrot.lane.b32.xlu0 %v2941, 15
  %v3135 = vpop.permute.xlu0 %3134
  %3136 = vrot.lane.b32.xlu0 %v2945, 15
  %v3137 = vpop.permute.xlu0 %3136
  %v3138 = vsel %vm275, %v3123, %v3131
  %v3139 = vsel %vm275, %v3125, %v3133
  %v3140 = vsel %vm275, %v3127, %v3135
  %v3141 = vsel %vm275, %v3129, %v3137
  %v3142 = vsel %vm275, %v3115, %v3123
  %v3143 = vsel %vm275, %v3117, %v3125
  %v3144 = vsel %vm275, %v3119, %v3127
  %v3145 = vsel %vm275, %v3121, %v3129
  %v3146 = vsel %vm275, %v3107, %v3115
  %v3147 = vsel %vm275, %v3109, %v3117
  %v3148 = vsel %vm275, %v3111, %v3119
  %v3149 = vsel %vm275, %v3113, %v3121
  %v3150 = vsel %vm275, %v3131, %v3107
  %v3151 = vsel %vm275, %v3133, %v3109
  %v3152 = vsel %vm275, %v3135, %v3111
  %v3153 = vsel %vm275, %v3137, %v3113
  %v3154 = vmul.f32 %v3150, %v293
  %v3155 = vmul.f32 %v3146, %v294
  %v3156 = vmul.f32 %v3142, %v295
  %v3157 = vmul.f32 %v3138, %v296
  %v3158 = vmul.f32 %v3151, %v293
  %v3159 = vmul.f32 %v3147, %v294
  %v3160 = vmul.f32 %v3143, %v295
  %v3161 = vmul.f32 %v3139, %v296
  %v3162 = vmul.f32 %v3152, %v293
  %v3163 = vmul.f32 %v3148, %v294
  %v3164 = vmul.f32 %v3144, %v295
  %v3165 = vmul.f32 %v3140, %v296
  %v3166 = vmul.f32 %v3153, %v293
  %v3167 = vmul.f32 %v3149, %v294
  %v3168 = vmul.f32 %v3145, %v295
  %v3169 = vmul.f32 %v3141, %v296
  %v3170 = vpack.c.bf16 %v3155, %v3154
  %v3171 = vpack.c.bf16 %v3157, %v3156
  %v3172 = vpack.c.bf16 %v3159, %v3158
  %v3173 = vpack.c.bf16 %v3161, %v3160
  %v3174 = vpack.c.bf16 %v3163, %v3162
  %v3175 = vpack.c.bf16 %v3165, %v3164
  %v3176 = vpack.c.bf16 %v3167, %v3166
  %v3177 = vpack.c.bf16 %v3169, %v3168
  %3178 = vst [vmem:[#allocation2 + $0x80] sm:$0xff] %v3170
  %3179 = vst [vmem:[#allocation2 + $0x88] sm:$0xff] %v3171
  %3180 = vst [vmem:[#allocation2 + $0x90] sm:$0xff] %v3172
  %3181 = vst [vmem:[#allocation2 + $0x98] sm:$0xff] %v3173
  %3182 = vst [vmem:[#allocation2 + $0xa0] sm:$0xff] %v3174
  %3183 = vst [vmem:[#allocation2 + $0xa8] sm:$0xff] %v3175
  %3184 = vst [vmem:[#allocation2 + $0xb0] sm:$0xff] %v3176
  %3185 = vst [vmem:[#allocation2 + $0xb8] sm:$0xff] %v3177
  %3186 = vrot.lane.b32.xlu0 %v2930, 1
  %v3187 = vpop.permute.xlu0 %3186
  %3188 = vrot.lane.b32.xlu0 %v2934, 1
  %v3189 = vpop.permute.xlu0 %3188
  %3190 = vrot.lane.b32.xlu0 %v2938, 1
  %v3191 = vpop.permute.xlu0 %3190
  %3192 = vrot.lane.b32.xlu0 %v2942, 1
  %v3193 = vpop.permute.xlu0 %3192
  %3194 = vrot.lane.b32.xlu0 %v2931, 1
  %v3195 = vpop.permute.xlu0 %3194
  %3196 = vrot.lane.b32.xlu0 %v2935, 1
  %v3197 = vpop.permute.xlu0 %3196
  %3198 = vrot.lane.b32.xlu0 %v2939, 1
  %v3199 = vpop.permute.xlu0 %3198
  %3200 = vrot.lane.b32.xlu0 %v2943, 1
  %v3201 = vpop.permute.xlu0 %3200
  %3202 = vrot.lane.b32.xlu0 %v2932, 1
  %v3203 = vpop.permute.xlu0 %3202
  %3204 = vrot.lane.b32.xlu0 %v2936, 1
  %v3205 = vpop.permute.xlu0 %3204
  %3206 = vrot.lane.b32.xlu0 %v2940, 1
  %v3207 = vpop.permute.xlu0 %3206
  %3208 = vrot.lane.b32.xlu0 %v2944, 1
  %v3209 = vpop.permute.xlu0 %3208
  %3210 = vrot.lane.b32.xlu0 %v2933, 1
  %v3211 = vpop.permute.xlu0 %3210
  %3212 = vrot.lane.b32.xlu0 %v2937, 1
  %v3213 = vpop.permute.xlu0 %3212
  %3214 = vrot.lane.b32.xlu0 %v2941, 1
  %v3215 = vpop.permute.xlu0 %3214
  %3216 = vrot.lane.b32.xlu0 %v2945, 1
  %v3217 = vpop.permute.xlu0 %3216
  %v3218 = vsel %vm365, %v3203, %v3211
  %v3219 = vsel %vm365, %v3205, %v3213
  %v3220 = vsel %vm365, %v3207, %v3215
  %v3221 = vsel %vm365, %v3209, %v3217
  %v3222 = vsel %vm365, %v3195, %v3203
  %v3223 = vsel %vm365, %v3197, %v3205
  %v3224 = vsel %vm365, %v3199, %v3207
  %v3225 = vsel %vm365, %v3201, %v3209
  %v3226 = vsel %vm365, %v3187, %v3195
  %v3227 = vsel %vm365, %v3189, %v3197
  %v3228 = vsel %vm365, %v3191, %v3199
  %v3229 = vsel %vm365, %v3193, %v3201
  %v3230 = vsel %vm365, %v3211, %v3187
  %v3231 = vsel %vm365, %v3213, %v3189
  %v3232 = vsel %vm365, %v3215, %v3191
  %v3233 = vsel %vm365, %v3217, %v3193
  %v3234 = vmul.f32 %v3230, %v383
  %v3235 = vmul.f32 %v3226, %v384
  %v3236 = vmul.f32 %v3222, %v385
  %v3237 = vmul.f32 %v3218, %v386
  %v3238 = vmul.f32 %v3231, %v383
  %v3239 = vmul.f32 %v3227, %v384
  %v3240 = vmul.f32 %v3223, %v385
  %v3241 = vmul.f32 %v3219, %v386
  %v3242 = vmul.f32 %v3232, %v383
  %v3243 = vmul.f32 %v3228, %v384
  %v3244 = vmul.f32 %v3224, %v385
  %v3245 = vmul.f32 %v3220, %v386
  %v3246 = vmul.f32 %v3233, %v383
  %v3247 = vmul.f32 %v3229, %v384
  %v3248 = vmul.f32 %v3225, %v385
  %v3249 = vmul.f32 %v3221, %v386
  %v3250 = vpack.c.bf16 %v3235, %v3234
  %v3251 = vpack.c.bf16 %v3237, %v3236
  %v3252 = vpack.c.bf16 %v3239, %v3238
  %v3253 = vpack.c.bf16 %v3241, %v3240
  %v3254 = vpack.c.bf16 %v3243, %v3242
  %v3255 = vpack.c.bf16 %v3245, %v3244
  %v3256 = vpack.c.bf16 %v3247, %v3246
  %v3257 = vpack.c.bf16 %v3249, %v3248
  %3258 = vst [vmem:[#allocation2 + $0xc0] sm:$0xff] %v3250
  %3259 = vst [vmem:[#allocation2 + $0xc8] sm:$0xff] %v3251
  %3260 = vst [vmem:[#allocation2 + $0xd0] sm:$0xff] %v3252
  %3261 = vst [vmem:[#allocation2 + $0xd8] sm:$0xff] %v3253
  %3262 = vst [vmem:[#allocation2 + $0xe0] sm:$0xff] %v3254
  %3263 = vst [vmem:[#allocation2 + $0xe8] sm:$0xff] %v3255
  %3264 = vst [vmem:[#allocation2 + $0xf0] sm:$0xff] %v3256
  %3265 = vst [vmem:[#allocation2 + $0xf8] sm:$0xff] %v3257
  %v3266 = vpack.c.bf16 %v2931, %v2930
  %v3267 = vpack.c.bf16 %v2933, %v2932
  %v3268 = vpack.c.bf16 %v2935, %v2934
  %v3269 = vpack.c.bf16 %v2937, %v2936
  %v3270 = vpack.c.bf16 %v2939, %v2938
  %v3271 = vpack.c.bf16 %v2941, %v2940
  %v3272 = vpack.c.bf16 %v2943, %v2942
  %v3273 = vpack.c.bf16 %v2945, %v2944
  %3274 = vst [vmem:[#allocation2 + $0x100] sm:$0xff] %v3266
  %3275 = vst [vmem:[#allocation2 + $0x108] sm:$0xff] %v3267
  %3276 = vst [vmem:[#allocation2 + $0x110] sm:$0xff] %v3268
  %3277 = vst [vmem:[#allocation2 + $0x118] sm:$0xff] %v3269
  %3278 = vst [vmem:[#allocation2 + $0x120] sm:$0xff] %v3270
  %3279 = vst [vmem:[#allocation2 + $0x128] sm:$0xff] %v3271
  %3280 = vst [vmem:[#allocation2 + $0x130] sm:$0xff] %v3272
  %3281 = vst [vmem:[#allocation2 + $0x138] sm:$0xff] %v3273
  %3282 = vrot.lane.b32.xlu0 %v2930, 127
  %v3283 = vpop.permute.xlu0 %3282
  %3284 = vrot.lane.b32.xlu0 %v2934, 127
  %v3285 = vpop.permute.xlu0 %3284
  %3286 = vrot.lane.b32.xlu0 %v2938, 127
  %v3287 = vpop.permute.xlu0 %3286
  %3288 = vrot.lane.b32.xlu0 %v2942, 127
  %v3289 = vpop.permute.xlu0 %3288
  %3290 = vrot.lane.b32.xlu0 %v2931, 127
  %v3291 = vpop.permute.xlu0 %3290
  %3292 = vrot.lane.b32.xlu0 %v2935, 127
  %v3293 = vpop.permute.xlu0 %3292
  %3294 = vrot.lane.b32.xlu0 %v2939, 127
  %v3295 = vpop.permute.xlu0 %3294
  %3296 = vrot.lane.b32.xlu0 %v2943, 127
  %v3297 = vpop.permute.xlu0 %3296
  %3298 = vrot.lane.b32.xlu0 %v2932, 127
  %v3299 = vpop.permute.xlu0 %3298
  %3300 = vrot.lane.b32.xlu0 %v2936, 127
  %v3301 = vpop.permute.xlu0 %3300
  %3302 = vrot.lane.b32.xlu0 %v2940, 127
  %v3303 = vpop.permute.xlu0 %3302
  %3304 = vrot.lane.b32.xlu0 %v2944, 127
  %v3305 = vpop.permute.xlu0 %3304
  %3306 = vrot.lane.b32.xlu0 %v2933, 127
  %v3307 = vpop.permute.xlu0 %3306
  %3308 = vrot.lane.b32.xlu0 %v2937, 127
  %v3309 = vpop.permute.xlu0 %3308
  %3310 = vrot.lane.b32.xlu0 %v2941, 127
  %v3311 = vpop.permute.xlu0 %3310
  %3312 = vrot.lane.b32.xlu0 %v2945, 127
  %v3313 = vpop.permute.xlu0 %3312
  %v3314 = vsel %vm471, %v3299, %v3307
  %v3315 = vsel %vm471, %v3301, %v3309
  %v3316 = vsel %vm471, %v3303, %v3311
  %v3317 = vsel %vm471, %v3305, %v3313
  %v3318 = vsel %vm471, %v3291, %v3299
  %v3319 = vsel %vm471, %v3293, %v3301
  %v3320 = vsel %vm471, %v3295, %v3303
  %v3321 = vsel %vm471, %v3297, %v3305
  %v3322 = vsel %vm471, %v3283, %v3291
  %v3323 = vsel %vm471, %v3285, %v3293
  %v3324 = vsel %vm471, %v3287, %v3295
  %v3325 = vsel %vm471, %v3289, %v3297
  %v3326 = vsel %vm471, %v3307, %v3283
  %v3327 = vsel %vm471, %v3309, %v3285
  %v3328 = vsel %vm471, %v3311, %v3287
  %v3329 = vsel %vm471, %v3313, %v3289
  %v3330 = vmul.f32 %v3322, %v489
  %v3331 = vmul.f32 %v3318, %v490
  %v3332 = vmul.f32 %v3314, %v491
  %v3333 = vmul.f32 %v3326, %v492
  %v3334 = vmul.f32 %v3323, %v489
  %v3335 = vmul.f32 %v3319, %v490
  %v3336 = vmul.f32 %v3315, %v491
  %v3337 = vmul.f32 %v3327, %v492
  %v3338 = vmul.f32 %v3324, %v489
  %v3339 = vmul.f32 %v3320, %v490
  %v3340 = vmul.f32 %v3316, %v491
  %v3341 = vmul.f32 %v3328, %v492
  %v3342 = vmul.f32 %v3325, %v489
  %v3343 = vmul.f32 %v3321, %v490
  %v3344 = vmul.f32 %v3317, %v491
  %v3345 = vmul.f32 %v3329, %v492
  %v3346 = vpack.c.bf16 %v3331, %v3330
  %v3347 = vpack.c.bf16 %v3333, %v3332
  %v3348 = vpack.c.bf16 %v3335, %v3334
  %v3349 = vpack.c.bf16 %v3337, %v3336
  %v3350 = vpack.c.bf16 %v3339, %v3338
  %v3351 = vpack.c.bf16 %v3341, %v3340
  %v3352 = vpack.c.bf16 %v3343, %v3342
  %v3353 = vpack.c.bf16 %v3345, %v3344
  %3354 = vst [vmem:[#allocation2 + $0x140] sm:$0xff] %v3346
  %3355 = vst [vmem:[#allocation2 + $0x148] sm:$0xff] %v3347
  %3356 = vst [vmem:[#allocation2 + $0x150] sm:$0xff] %v3348
  %3357 = vst [vmem:[#allocation2 + $0x158] sm:$0xff] %v3349
  %3358 = vst [vmem:[#allocation2 + $0x160] sm:$0xff] %v3350
  %3359 = vst [vmem:[#allocation2 + $0x168] sm:$0xff] %v3351
  %3360 = vst [vmem:[#allocation2 + $0x170] sm:$0xff] %v3352
  %3361 = vst [vmem:[#allocation2 + $0x178] sm:$0xff] %v3353
  %3362 = vrot.lane.b32.xlu0 %v2930, 113
  %v3363 = vpop.permute.xlu0 %3362
  %3364 = vrot.lane.b32.xlu0 %v2934, 113
  %v3365 = vpop.permute.xlu0 %3364
  %3366 = vrot.lane.b32.xlu0 %v2938, 113
  %v3367 = vpop.permute.xlu0 %3366
  %3368 = vrot.lane.b32.xlu0 %v2942, 113
  %v3369 = vpop.permute.xlu0 %3368
  %3370 = vrot.lane.b32.xlu0 %v2931, 113
  %v3371 = vpop.permute.xlu0 %3370
  %3372 = vrot.lane.b32.xlu0 %v2935, 113
  %v3373 = vpop.permute.xlu0 %3372
  %3374 = vrot.lane.b32.xlu0 %v2939, 113
  %v3375 = vpop.permute.xlu0 %3374
  %3376 = vrot.lane.b32.xlu0 %v2943, 113
  %v3377 = vpop.permute.xlu0 %3376
  %3378 = vrot.lane.b32.xlu0 %v2932, 113
  %v3379 = vpop.permute.xlu0 %3378
  %3380 = vrot.lane.b32.xlu0 %v2936, 113
  %v3381 = vpop.permute.xlu0 %3380
  %3382 = vrot.lane.b32.xlu0 %v2940, 113
  %v3383 = vpop.permute.xlu0 %3382
  %3384 = vrot.lane.b32.xlu0 %v2944, 113
  %v3385 = vpop.permute.xlu0 %3384
  %3386 = vrot.lane.b32.xlu0 %v2933, 113
  %v3387 = vpop.permute.xlu0 %3386
  %3388 = vrot.lane.b32.xlu0 %v2937, 113
  %v3389 = vpop.permute.xlu0 %3388
  %3390 = vrot.lane.b32.xlu0 %v2941, 113
  %v3391 = vpop.permute.xlu0 %3390
  %3392 = vrot.lane.b32.xlu0 %v2945, 113
  %v3393 = vpop.permute.xlu0 %3392
  %v3394 = vsel %vm561, %v3379, %v3387
  %v3395 = vsel %vm561, %v3381, %v3389
  %v3396 = vsel %vm561, %v3383, %v3391
  %v3397 = vsel %vm561, %v3385, %v3393
  %v3398 = vsel %vm561, %v3371, %v3379
  %v3399 = vsel %vm561, %v3373, %v3381
  %v3400 = vsel %vm561, %v3375, %v3383
  %v3401 = vsel %vm561, %v3377, %v3385
  %v3402 = vsel %vm561, %v3363, %v3371
  %v3403 = vsel %vm561, %v3365, %v3373
  %v3404 = vsel %vm561, %v3367, %v3375
  %v3405 = vsel %vm561, %v3369, %v3377
  %v3406 = vsel %vm561, %v3387, %v3363
  %v3407 = vsel %vm561, %v3389, %v3365
  %v3408 = vsel %vm561, %v3391, %v3367
  %v3409 = vsel %vm561, %v3393, %v3369
  %v3410 = vmul.f32 %v3402, %v579
  %v3411 = vmul.f32 %v3398, %v580
  %v3412 = vmul.f32 %v3394, %v581
  %v3413 = vmul.f32 %v3406, %v582
  %v3414 = vmul.f32 %v3403, %v579
  %v3415 = vmul.f32 %v3399, %v580
  %v3416 = vmul.f32 %v3395, %v581
  %v3417 = vmul.f32 %v3407, %v582
  %v3418 = vmul.f32 %v3404, %v579
  %v3419 = vmul.f32 %v3400, %v580
  %v3420 = vmul.f32 %v3396, %v581
  %v3421 = vmul.f32 %v3408, %v582
  %v3422 = vmul.f32 %v3405, %v579
  %v3423 = vmul.f32 %v3401, %v580
  %v3424 = vmul.f32 %v3397, %v581
  %v3425 = vmul.f32 %v3409, %v582
  %v3426 = vpack.c.bf16 %v3411, %v3410
  %v3427 = vpack.c.bf16 %v3413, %v3412
  %v3428 = vpack.c.bf16 %v3415, %v3414
  %v3429 = vpack.c.bf16 %v3417, %v3416
  %v3430 = vpack.c.bf16 %v3419, %v3418
  %v3431 = vpack.c.bf16 %v3421, %v3420
  %v3432 = vpack.c.bf16 %v3423, %v3422
  %v3433 = vpack.c.bf16 %v3425, %v3424
  %3434 = vst [vmem:[#allocation2 + $0x180] sm:$0xff] %v3426
  %3435 = vst [vmem:[#allocation2 + $0x188] sm:$0xff] %v3427
  %3436 = vst [vmem:[#allocation2 + $0x190] sm:$0xff] %v3428
  %3437 = vst [vmem:[#allocation2 + $0x198] sm:$0xff] %v3429
  %3438 = vst [vmem:[#allocation2 + $0x1a0] sm:$0xff] %v3430
  %3439 = vst [vmem:[#allocation2 + $0x1a8] sm:$0xff] %v3431
  %3440 = vst [vmem:[#allocation2 + $0x1b0] sm:$0xff] %v3432
  %3441 = vst [vmem:[#allocation2 + $0x1b8] sm:$0xff] %v3433
  %3442 = vrot.lane.b32.xlu0 %v2930, 112
  %v3443 = vpop.permute.xlu0 %3442
  %3444 = vrot.lane.b32.xlu0 %v2934, 112
  %v3445 = vpop.permute.xlu0 %3444
  %3446 = vrot.lane.b32.xlu0 %v2938, 112
  %v3447 = vpop.permute.xlu0 %3446
  %3448 = vrot.lane.b32.xlu0 %v2942, 112
  %v3449 = vpop.permute.xlu0 %3448
  %3450 = vrot.lane.b32.xlu0 %v2931, 112
  %v3451 = vpop.permute.xlu0 %3450
  %3452 = vrot.lane.b32.xlu0 %v2935, 112
  %v3453 = vpop.permute.xlu0 %3452
  %3454 = vrot.lane.b32.xlu0 %v2939, 112
  %v3455 = vpop.permute.xlu0 %3454
  %3456 = vrot.lane.b32.xlu0 %v2943, 112
  %v3457 = vpop.permute.xlu0 %3456
  %3458 = vrot.lane.b32.xlu0 %v2932, 112
  %v3459 = vpop.permute.xlu0 %3458
  %3460 = vrot.lane.b32.xlu0 %v2936, 112
  %v3461 = vpop.permute.xlu0 %3460
  %3462 = vrot.lane.b32.xlu0 %v2940, 112
  %v3463 = vpop.permute.xlu0 %3462
  %3464 = vrot.lane.b32.xlu0 %v2944, 112
  %v3465 = vpop.permute.xlu0 %3464
  %3466 = vrot.lane.b32.xlu0 %v2933, 112
  %v3467 = vpop.permute.xlu0 %3466
  %3468 = vrot.lane.b32.xlu0 %v2937, 112
  %v3469 = vpop.permute.xlu0 %3468
  %3470 = vrot.lane.b32.xlu0 %v2941, 112
  %v3471 = vpop.permute.xlu0 %3470
  %3472 = vrot.lane.b32.xlu0 %v2945, 112
  %v3473 = vpop.permute.xlu0 %3472
  %v3474 = vsel %vm651, %v3459, %v3467
  %v3475 = vsel %vm651, %v3461, %v3469
  %v3476 = vsel %vm651, %v3463, %v3471
  %v3477 = vsel %vm651, %v3465, %v3473
  %v3478 = vsel %vm651, %v3451, %v3459
  %v3479 = vsel %vm651, %v3453, %v3461
  %v3480 = vsel %vm651, %v3455, %v3463
  %v3481 = vsel %vm651, %v3457, %v3465
  %v3482 = vsel %vm651, %v3443, %v3451
  %v3483 = vsel %vm651, %v3445, %v3453
  %v3484 = vsel %vm651, %v3447, %v3455
  %v3485 = vsel %vm651, %v3449, %v3457
  %v3486 = vsel %vm651, %v3467, %v3443
  %v3487 = vsel %vm651, %v3469, %v3445
  %v3488 = vsel %vm651, %v3471, %v3447
  %v3489 = vsel %vm651, %v3473, %v3449
  %v3490 = vmul.f32 %v3482, %v669
  %v3491 = vmul.f32 %v3478, %v670
  %v3492 = vmul.f32 %v3474, %v671
  %v3493 = vmul.f32 %v3486, %v672
  %v3494 = vmul.f32 %v3483, %v669
  %v3495 = vmul.f32 %v3479, %v670
  %v3496 = vmul.f32 %v3475, %v671
  %v3497 = vmul.f32 %v3487, %v672
  %v3498 = vmul.f32 %v3484, %v669
  %v3499 = vmul.f32 %v3480, %v670
  %v3500 = vmul.f32 %v3476, %v671
  %v3501 = vmul.f32 %v3488, %v672
  %v3502 = vmul.f32 %v3485, %v669
  %v3503 = vmul.f32 %v3481, %v670
  %v3504 = vmul.f32 %v3477, %v671
  %v3505 = vmul.f32 %v3489, %v672
  %v3506 = vpack.c.bf16 %v3491, %v3490
  %v3507 = vpack.c.bf16 %v3493, %v3492
  %v3508 = vpack.c.bf16 %v3495, %v3494
  %v3509 = vpack.c.bf16 %v3497, %v3496
  %v3510 = vpack.c.bf16 %v3499, %v3498
  %v3511 = vpack.c.bf16 %v3501, %v3500
  %v3512 = vpack.c.bf16 %v3503, %v3502
  %v3513 = vpack.c.bf16 %v3505, %v3504
  %3514 = vst [vmem:[#allocation2 + $0x1c0] sm:$0xff] %v3506
  %3515 = vst [vmem:[#allocation2 + $0x1c8] sm:$0xff] %v3507
  %3516 = vst [vmem:[#allocation2 + $0x1d0] sm:$0xff] %v3508
  %3517 = vst [vmem:[#allocation2 + $0x1d8] sm:$0xff] %v3509
  %3518 = vst [vmem:[#allocation2 + $0x1e0] sm:$0xff] %v3510
  %3519 = vst [vmem:[#allocation2 + $0x1e8] sm:$0xff] %v3511
  %3520 = vst [vmem:[#allocation2 + $0x1f0] sm:$0xff] %v3512
  %3521 = vst [vmem:[#allocation2 + $0x1f8] sm:$0xff] %v3513
  %3522 = vrot.lane.b32.xlu0 %v2930, 111
  %v3523 = vpop.permute.xlu0 %3522
  %3524 = vrot.lane.b32.xlu0 %v2934, 111
  %v3525 = vpop.permute.xlu0 %3524
  %3526 = vrot.lane.b32.xlu0 %v2938, 111
  %v3527 = vpop.permute.xlu0 %3526
  %3528 = vrot.lane.b32.xlu0 %v2942, 111
  %v3529 = vpop.permute.xlu0 %3528
  %3530 = vrot.lane.b32.xlu0 %v2931, 111
  %v3531 = vpop.permute.xlu0 %3530
  %3532 = vrot.lane.b32.xlu0 %v2935, 111
  %v3533 = vpop.permute.xlu0 %3532
  %3534 = vrot.lane.b32.xlu0 %v2939, 111
  %v3535 = vpop.permute.xlu0 %3534
  %3536 = vrot.lane.b32.xlu0 %v2943, 111
  %v3537 = vpop.permute.xlu0 %3536
  %3538 = vrot.lane.b32.xlu0 %v2932, 111
  %v3539 = vpop.permute.xlu0 %3538
  %3540 = vrot.lane.b32.xlu0 %v2936, 111
  %v3541 = vpop.permute.xlu0 %3540
  %3542 = vrot.lane.b32.xlu0 %v2940, 111
  %v3543 = vpop.permute.xlu0 %3542
  %3544 = vrot.lane.b32.xlu0 %v2944, 111
  %v3545 = vpop.permute.xlu0 %3544
  %3546 = vrot.lane.b32.xlu0 %v2933, 111
  %v3547 = vpop.permute.xlu0 %3546
  %3548 = vrot.lane.b32.xlu0 %v2937, 111
  %v3549 = vpop.permute.xlu0 %3548
  %3550 = vrot.lane.b32.xlu0 %v2941, 111
  %v3551 = vpop.permute.xlu0 %3550
  %3552 = vrot.lane.b32.xlu0 %v2945, 111
  %v3553 = vpop.permute.xlu0 %3552
  %v3554 = vsel %vm741, %v3539, %v3547
  %v3555 = vsel %vm741, %v3541, %v3549
  %v3556 = vsel %vm741, %v3543, %v3551
  %v3557 = vsel %vm741, %v3545, %v3553
  %v3558 = vsel %vm741, %v3531, %v3539
  %v3559 = vsel %vm741, %v3533, %v3541
  %v3560 = vsel %vm741, %v3535, %v3543
  %v3561 = vsel %vm741, %v3537, %v3545
  %v3562 = vsel %vm741, %v3523, %v3531
  %v3563 = vsel %vm741, %v3525, %v3533
  %v3564 = vsel %vm741, %v3527, %v3535
  %v3565 = vsel %vm741, %v3529, %v3537
  %v3566 = vsel %vm741, %v3547, %v3523
  %v3567 = vsel %vm741, %v3549, %v3525
  %v3568 = vsel %vm741, %v3551, %v3527
  %v3569 = vsel %vm741, %v3553, %v3529
  %v3570 = vmul.f32 %v3562, %v759
  %v3571 = vmul.f32 %v3558, %v760
  %v3572 = vmul.f32 %v3554, %v761
  %v3573 = vmul.f32 %v3566, %v762
  %v3574 = vmul.f32 %v3563, %v759
  %v3575 = vmul.f32 %v3559, %v760
  %v3576 = vmul.f32 %v3555, %v761
  %v3577 = vmul.f32 %v3567, %v762
  %v3578 = vmul.f32 %v3564, %v759
  %v3579 = vmul.f32 %v3560, %v760
  %v3580 = vmul.f32 %v3556, %v761
  %v3581 = vmul.f32 %v3568, %v762
  %v3582 = vmul.f32 %v3565, %v759
  %v3583 = vmul.f32 %v3561, %v760
  %v3584 = vmul.f32 %v3557, %v761
  %v3585 = vmul.f32 %v3569, %v762
  %v3586 = vpack.c.bf16 %v3571, %v3570
  %v3587 = vpack.c.bf16 %v3573, %v3572
  %v3588 = vpack.c.bf16 %v3575, %v3574
  %v3589 = vpack.c.bf16 %v3577, %v3576
  %v3590 = vpack.c.bf16 %v3579, %v3578
  %v3591 = vpack.c.bf16 %v3581, %v3580
  %v3592 = vpack.c.bf16 %v3583, %v3582
  %v3593 = vpack.c.bf16 %v3585, %v3584
  %3594 = vst [vmem:[#allocation2 + $0x200] sm:$0xff] %v3586
  %3595 = vst [vmem:[#allocation2 + $0x208] sm:$0xff] %v3587
  %3596 = vst [vmem:[#allocation2 + $0x210] sm:$0xff] %v3588
  %3597 = vst [vmem:[#allocation2 + $0x218] sm:$0xff] %v3589
  %3598 = vst [vmem:[#allocation2 + $0x220] sm:$0xff] %v3590
  %3599 = vst [vmem:[#allocation2 + $0x228] sm:$0xff] %v3591
  %3600 = vst [vmem:[#allocation2 + $0x230] sm:$0xff] %v3592
  %3601 = vst [vmem:[#allocation2 + $0x238] sm:$0xff] %v3593
  %s3602 = scalar_lea.vmem %s2, 96
  %v3603 = vld [vmem:[%s3602] sm:$0xff]
  %v3604 = vld [vmem:[%s3602 + $0x8] sm:$0xf]
  %v3605 = vld [vmem:[%s3602 + $0xc] sm:$0xff]
  %v3606 = vld [vmem:[%s3602 + $0x14] sm:$0xf]
  %v3607 = vld [vmem:[%s3602 + $0x18] sm:$0xff]
  %v3608 = vld [vmem:[%s3602 + $0x20] sm:$0xf]
  %v3609 = vld [vmem:[%s3602 + $0x24] sm:$0xff]
  %v3610 = vld [vmem:[%s3602 + $0x2c] sm:$0xf]
  %v3611 = vld [vmem:[#allocation2] sm:$0xff]
  %v3612 = vld [vmem:[#allocation2 + $0x8] sm:$0xff]
  %v3613 = vld [vmem:[#allocation2 + $0x10] sm:$0xff]
  %v3614 = vld [vmem:[#allocation2 + $0x18] sm:$0xff]
  %v3615 = vld [vmem:[#allocation2 + $0x20] sm:$0xff]
  %v3616 = vld [vmem:[#allocation2 + $0x28] sm:$0xff]
  %v3617 = vld [vmem:[#allocation2 + $0x30] sm:$0xff]
  %v3618 = vld [vmem:[#allocation2 + $0x38] sm:$0xff]
  %v3619 = vld [vmem:[#allocation2 + $0x40] sm:$0xff]
  %v3620 = vld [vmem:[#allocation2 + $0x48] sm:$0xff]
  %v3621 = vld [vmem:[#allocation2 + $0x50] sm:$0xff]
  %v3622 = vld [vmem:[#allocation2 + $0x58] sm:$0xff]
  %v3623 = vld [vmem:[#allocation2 + $0x60] sm:$0xff]
  %v3624 = vld [vmem:[#allocation2 + $0x68] sm:$0xff]
  %v3625 = vld [vmem:[#allocation2 + $0x70] sm:$0xff]
  %v3626 = vld [vmem:[#allocation2 + $0x78] sm:$0xff]
  %v3627 = vld [vmem:[#allocation2 + $0x80] sm:$0xff]
  %v3628 = vld [vmem:[#allocation2 + $0x88] sm:$0xff]
  %v3629 = vld [vmem:[#allocation2 + $0x90] sm:$0xff]
  %v3630 = vld [vmem:[#allocation2 + $0x98] sm:$0xff]
  %v3631 = vld [vmem:[#allocation2 + $0xa0] sm:$0xff]
  %v3632 = vld [vmem:[#allocation2 + $0xa8] sm:$0xff]
  %v3633 = vld [vmem:[#allocation2 + $0xb0] sm:$0xff]
  %v3634 = vld [vmem:[#allocation2 + $0xb8] sm:$0xff]
  %v3635 = vld [vmem:[#allocation2 + $0xc0] sm:$0xff]
  %v3636 = vld [vmem:[#allocation2 + $0xc8] sm:$0xff]
  %v3637 = vld [vmem:[#allocation2 + $0xd0] sm:$0xff]
  %v3638 = vld [vmem:[#allocation2 + $0xd8] sm:$0xff]
  %v3639 = vld [vmem:[#allocation2 + $0xe0] sm:$0xff]
  %v3640 = vld [vmem:[#allocation2 + $0xe8] sm:$0xff]
  %v3641 = vld [vmem:[#allocation2 + $0xf0] sm:$0xff]
  %v3642 = vld [vmem:[#allocation2 + $0xf8] sm:$0xff]
  %v3643 = vld [vmem:[#allocation2 + $0x100] sm:$0xff]
  %v3644 = vld [vmem:[#allocation2 + $0x108] sm:$0xff]
  %v3645 = vld [vmem:[#allocation2 + $0x110] sm:$0xff]
  %v3646 = vld [vmem:[#allocation2 + $0x118] sm:$0xff]
  %v3647 = vld [vmem:[#allocation2 + $0x120] sm:$0xff]
  %v3648 = vld [vmem:[#allocation2 + $0x128] sm:$0xff]
  %v3649 = vld [vmem:[#allocation2 + $0x130] sm:$0xff]
  %v3650 = vld [vmem:[#allocation2 + $0x138] sm:$0xff]
  %v3651 = vld [vmem:[#allocation2 + $0x140] sm:$0xff]
  %v3652 = vld [vmem:[#allocation2 + $0x148] sm:$0xff]
  %v3653 = vld [vmem:[#allocation2 + $0x150] sm:$0xff]
  %v3654 = vld [vmem:[#allocation2 + $0x158] sm:$0xff]
  %v3655 = vld [vmem:[#allocation2 + $0x160] sm:$0xff]
  %v3656 = vld [vmem:[#allocation2 + $0x168] sm:$0xff]
  %v3657 = vld [vmem:[#allocation2 + $0x170] sm:$0xff]
  %v3658 = vld [vmem:[#allocation2 + $0x178] sm:$0xff]
  %v3659 = vld [vmem:[#allocation2 + $0x180] sm:$0xff]
  %v3660 = vld [vmem:[#allocation2 + $0x188] sm:$0xff]
  %v3661 = vld [vmem:[#allocation2 + $0x190] sm:$0xff]
  %v3662 = vld [vmem:[#allocation2 + $0x198] sm:$0xff]
  %v3663 = vld [vmem:[#allocation2 + $0x1a0] sm:$0xff]
  %v3664 = vld [vmem:[#allocation2 + $0x1a8] sm:$0xff]
  %v3665 = vld [vmem:[#allocation2 + $0x1b0] sm:$0xff]
  %v3666 = vld [vmem:[#allocation2 + $0x1b8] sm:$0xff]
  %v3667 = vld [vmem:[#allocation2 + $0x1c0] sm:$0xff]
  %v3668 = vld [vmem:[#allocation2 + $0x1c8] sm:$0xff]
  %v3669 = vld [vmem:[#allocation2 + $0x1d0] sm:$0xff]
  %v3670 = vld [vmem:[#allocation2 + $0x1d8] sm:$0xff]
  %v3671 = vld [vmem:[#allocation2 + $0x1e0] sm:$0xff]
  %v3672 = vld [vmem:[#allocation2 + $0x1e8] sm:$0xff]
  %v3673 = vld [vmem:[#allocation2 + $0x1f0] sm:$0xff]
  %v3674 = vld [vmem:[#allocation2 + $0x1f8] sm:$0xff]
  %v3675 = vld [vmem:[#allocation2 + $0x200] sm:$0xff]
  %v3676 = vld [vmem:[#allocation2 + $0x208] sm:$0xff]
  %v3677 = vld [vmem:[#allocation2 + $0x210] sm:$0xff]
  %v3678 = vld [vmem:[#allocation2 + $0x218] sm:$0xff]
  %v3679 = vld [vmem:[#allocation2 + $0x220] sm:$0xff]
  %v3680 = vld [vmem:[#allocation2 + $0x228] sm:$0xff]
  %v3681 = vld [vmem:[#allocation2 + $0x230] sm:$0xff]
  %v3682 = vld [vmem:[#allocation2 + $0x238] sm:$0xff]
  %s3683 = scalar_lea.vmem %s3, 64
  %v3684 = vld [vmem:[%s3683] sm:$0xff]
  %v3685 = vld [vmem:[%s3683 + $0x8] sm:$0xff]
  %v3686 = vld [vmem:[%s3683 + $0x10] sm:$0xff]
  %v3687 = vld [vmem:[%s3683 + $0x18] sm:$0xff]
  %3689 = vset.pattern.permute.xlu0 0
  %3690 = vperm.xlu0 %3689, %v3684
  %v3691 = vpop.permute.xlu0 %3690
  %3694 = vset.pattern.permute.xlu0 0
  %3695 = vperm.xlu0 %3694, %v3685
  %v3696 = vpop.permute.xlu0 %3695
  %3699 = vset.pattern.permute.xlu0 0
  %3700 = vperm.xlu0 %3699, %v3686
  %v3701 = vpop.permute.xlu0 %3700
  %3704 = vset.pattern.permute.xlu0 0
  %3705 = vperm.xlu0 %3704, %v3687
  %v3706 = vpop.permute.xlu0 %3705
  %v3716 = vunpack.c.l.b16 %v3603
  %v3717 = vunpack.c.h.b16 %v3603
  %v3718 = vunpack.c.l.b16 %v3604
  %v3719 = vunpack.c.l.b16 %v3605
  %v3720 = vunpack.c.h.b16 %v3605
  %v3721 = vunpack.c.l.b16 %v3606
  %v3722 = vunpack.c.l.b16 %v3607
  %v3723 = vunpack.c.h.b16 %v3607
  %v3724 = vunpack.c.l.b16 %v3608
  %v3725 = vunpack.c.l.b16 %v3609
  %v3726 = vunpack.c.h.b16 %v3609
  %v3727 = vunpack.c.l.b16 %v3610
  %v3728 = vpack.c.b16 %v3719, %v3716
  %v3729 = vpack.c.b16 %v3720, %v3717
  %v3730 = vpack.c.b16 %v3721, %v3718
  %v3731 = vpack.c.b16 %v3725, %v3722
  %v3732 = vpack.c.b16 %v3726, %v3723
  %v3733 = vpack.c.b16 %v3727, %v3724
  %v3810 = vunpack.c.l.b16 %v3611
  %v3811 = vunpack.c.h.b16 %v3611
  %v3812 = vunpack.c.l.b16 %v3612
  %v3813 = vunpack.c.h.b16 %v3612
  %v3814 = vunpack.c.l.b16 %v3613
  %v3815 = vunpack.c.h.b16 %v3613
  %v3816 = vunpack.c.l.b16 %v3614
  %v3817 = vunpack.c.h.b16 %v3614
  %v3818 = vunpack.c.l.b16 %v3615
  %v3819 = vunpack.c.h.b16 %v3615
  %v3820 = vunpack.c.l.b16 %v3616
  %v3821 = vunpack.c.h.b16 %v3616
  %v3822 = vunpack.c.l.b16 %v3617
  %v3823 = vunpack.c.h.b16 %v3617
  %v3824 = vunpack.c.l.b16 %v3618
  %v3825 = vunpack.c.h.b16 %v3618
  %v3826 = vunpack.c.l.b16 %v3619
  %v3827 = vunpack.c.h.b16 %v3619
  %v3828 = vunpack.c.l.b16 %v3620
  %v3829 = vunpack.c.h.b16 %v3620
  %v3830 = vunpack.c.l.b16 %v3621
  %v3831 = vunpack.c.h.b16 %v3621
  %v3832 = vunpack.c.l.b16 %v3622
  %v3833 = vunpack.c.h.b16 %v3622
  %v3834 = vunpack.c.l.b16 %v3623
  %v3835 = vunpack.c.h.b16 %v3623
  %v3836 = vunpack.c.l.b16 %v3624
  %v3837 = vunpack.c.h.b16 %v3624
  %v3838 = vunpack.c.l.b16 %v3625
  %v3839 = vunpack.c.h.b16 %v3625
  %v3840 = vunpack.c.l.b16 %v3626
  %v3841 = vunpack.c.h.b16 %v3626
  %v3842 = vunpack.c.l.b16 %v3627
  %v3843 = vunpack.c.h.b16 %v3627
  %v3844 = vunpack.c.l.b16 %v3628
  %v3845 = vunpack.c.h.b16 %v3628
  %v3846 = vunpack.c.l.b16 %v3629
  %v3847 = vunpack.c.h.b16 %v3629
  %v3848 = vunpack.c.l.b16 %v3630
  %v3849 = vunpack.c.h.b16 %v3630
  %v3850 = vunpack.c.l.b16 %v3631
  %v3851 = vunpack.c.h.b16 %v3631
  %v3852 = vunpack.c.l.b16 %v3632
  %v3853 = vunpack.c.h.b16 %v3632
  %v3854 = vunpack.c.l.b16 %v3633
  %v3855 = vunpack.c.h.b16 %v3633
  %v3856 = vunpack.c.l.b16 %v3634
  %v3857 = vunpack.c.h.b16 %v3634
  %v3858 = vunpack.c.l.b16 %v3635
  %v3859 = vunpack.c.h.b16 %v3635
  %v3860 = vunpack.c.l.b16 %v3636
  %v3861 = vunpack.c.h.b16 %v3636
  %v3862 = vunpack.c.l.b16 %v3637
  %v3863 = vunpack.c.h.b16 %v3637
  %v3864 = vunpack.c.l.b16 %v3638
  %v3865 = vunpack.c.h.b16 %v3638
  %v3866 = vunpack.c.l.b16 %v3639
  %v3867 = vunpack.c.h.b16 %v3639
  %v3868 = vunpack.c.l.b16 %v3640
  %v3869 = vunpack.c.h.b16 %v3640
  %v3870 = vunpack.c.l.b16 %v3641
  %v3871 = vunpack.c.h.b16 %v3641
  %v3872 = vunpack.c.l.b16 %v3642
  %v3873 = vunpack.c.h.b16 %v3642
  %v3874 = vunpack.c.l.b16 %v3643
  %v3875 = vunpack.c.h.b16 %v3643
  %v3876 = vunpack.c.l.b16 %v3644
  %v3877 = vunpack.c.h.b16 %v3644
  %v3878 = vunpack.c.l.b16 %v3645
  %v3879 = vunpack.c.h.b16 %v3645
  %v3880 = vunpack.c.l.b16 %v3646
  %v3881 = vunpack.c.h.b16 %v3646
  %v3882 = vunpack.c.l.b16 %v3647
  %v3883 = vunpack.c.h.b16 %v3647
  %v3884 = vunpack.c.l.b16 %v3648
  %v3885 = vunpack.c.h.b16 %v3648
  %v3886 = vunpack.c.l.b16 %v3649
  %v3887 = vunpack.c.h.b16 %v3649
  %v3888 = vunpack.c.l.b16 %v3650
  %v3889 = vunpack.c.h.b16 %v3650
  %v3890 = vunpack.c.l.b16 %v3651
  %v3891 = vunpack.c.h.b16 %v3651
  %v3892 = vunpack.c.l.b16 %v3652
  %v3893 = vunpack.c.h.b16 %v3652
  %v3894 = vunpack.c.l.b16 %v3653
  %v3895 = vunpack.c.h.b16 %v3653
  %v3896 = vunpack.c.l.b16 %v3654
  %v3897 = vunpack.c.h.b16 %v3654
  %v3898 = vunpack.c.l.b16 %v3655
  %v3899 = vunpack.c.h.b16 %v3655
  %v3900 = vunpack.c.l.b16 %v3656
  %v3901 = vunpack.c.h.b16 %v3656
  %v3902 = vunpack.c.l.b16 %v3657
  %v3903 = vunpack.c.h.b16 %v3657
  %v3904 = vunpack.c.l.b16 %v3658
  %v3905 = vunpack.c.h.b16 %v3658
  %v3906 = vunpack.c.l.b16 %v3659
  %v3907 = vunpack.c.h.b16 %v3659
  %v3908 = vunpack.c.l.b16 %v3660
  %v3909 = vunpack.c.h.b16 %v3660
  %v3910 = vunpack.c.l.b16 %v3661
  %v3911 = vunpack.c.h.b16 %v3661
  %v3912 = vunpack.c.l.b16 %v3662
  %v3913 = vunpack.c.h.b16 %v3662
  %v3914 = vunpack.c.l.b16 %v3663
  %v3915 = vunpack.c.h.b16 %v3663
  %v3916 = vunpack.c.l.b16 %v3664
  %v3917 = vunpack.c.h.b16 %v3664
  %v3918 = vunpack.c.l.b16 %v3665
  %v3919 = vunpack.c.h.b16 %v3665
  %v3920 = vunpack.c.l.b16 %v3666
  %v3921 = vunpack.c.h.b16 %v3666
  %v3922 = vunpack.c.l.b16 %v3667
  %v3923 = vunpack.c.h.b16 %v3667
  %v3924 = vunpack.c.l.b16 %v3668
  %v3925 = vunpack.c.h.b16 %v3668
  %v3926 = vunpack.c.l.b16 %v3669
  %v3927 = vunpack.c.h.b16 %v3669
  %v3928 = vunpack.c.l.b16 %v3670
  %v3929 = vunpack.c.h.b16 %v3670
  %v3930 = vunpack.c.l.b16 %v3671
  %v3931 = vunpack.c.h.b16 %v3671
  %v3932 = vunpack.c.l.b16 %v3672
  %v3933 = vunpack.c.h.b16 %v3672
  %v3934 = vunpack.c.l.b16 %v3673
  %v3935 = vunpack.c.h.b16 %v3673
  %v3936 = vunpack.c.l.b16 %v3674
  %v3937 = vunpack.c.h.b16 %v3674
  %v3938 = vunpack.c.l.b16 %v3675
  %v3939 = vunpack.c.h.b16 %v3675
  %v3940 = vunpack.c.l.b16 %v3676
  %v3941 = vunpack.c.h.b16 %v3676
  %v3942 = vunpack.c.l.b16 %v3677
  %v3943 = vunpack.c.h.b16 %v3677
  %v3944 = vunpack.c.l.b16 %v3678
  %v3945 = vunpack.c.h.b16 %v3678
  %v3946 = vunpack.c.l.b16 %v3679
  %v3947 = vunpack.c.h.b16 %v3679
  %v3948 = vunpack.c.l.b16 %v3680
  %v3949 = vunpack.c.h.b16 %v3680
  %v3950 = vunpack.c.l.b16 %v3681
  %v3951 = vunpack.c.h.b16 %v3681
  %v3952 = vunpack.c.l.b16 %v3682
  %v3953 = vunpack.c.h.b16 %v3682
  %v3954 = vpack.c.b16 %v3814, %v3810
  %v3955 = vpack.c.b16 %v3815, %v3811
  %v3956 = vpack.c.b16 %v3816, %v3812
  %v3957 = vpack.c.b16 %v3817, %v3813
  %v3958 = vpack.c.b16 %v3822, %v3818
  %v3959 = vpack.c.b16 %v3823, %v3819
  %v3960 = vpack.c.b16 %v3824, %v3820
  %v3961 = vpack.c.b16 %v3825, %v3821
  %v3962 = vpack.c.b16 %v3830, %v3826
  %v3963 = vpack.c.b16 %v3831, %v3827
  %v3964 = vpack.c.b16 %v3832, %v3828
  %v3965 = vpack.c.b16 %v3833, %v3829
  %v3966 = vpack.c.b16 %v3838, %v3834
  %v3967 = vpack.c.b16 %v3839, %v3835
  %v3968 = vpack.c.b16 %v3840, %v3836
  %v3969 = vpack.c.b16 %v3841, %v3837
  %v3970 = vpack.c.b16 %v3846, %v3842
  %v3971 = vpack.c.b16 %v3847, %v3843
  %v3972 = vpack.c.b16 %v3848, %v3844
  %v3973 = vpack.c.b16 %v3849, %v3845
  %v3974 = vpack.c.b16 %v3854, %v3850
  %v3975 = vpack.c.b16 %v3855, %v3851
  %v3976 = vpack.c.b16 %v3856, %v3852
  %v3977 = vpack.c.b16 %v3857, %v3853
  %v3978 = vpack.c.b16 %v3862, %v3858
  %v3979 = vpack.c.b16 %v3863, %v3859
  %v3980 = vpack.c.b16 %v3864, %v3860
  %v3981 = vpack.c.b16 %v3865, %v3861
  %v3982 = vpack.c.b16 %v3870, %v3866
  %v3983 = vpack.c.b16 %v3871, %v3867
  %v3984 = vpack.c.b16 %v3872, %v3868
  %v3985 = vpack.c.b16 %v3873, %v3869
  %v3986 = vpack.c.b16 %v3878, %v3874
  %v3987 = vpack.c.b16 %v3879, %v3875
  %v3988 = vpack.c.b16 %v3880, %v3876
  %v3989 = vpack.c.b16 %v3881, %v3877
  %v3990 = vpack.c.b16 %v3886, %v3882
  %v3991 = vpack.c.b16 %v3887, %v3883
  %v3992 = vpack.c.b16 %v3888, %v3884
  %v3993 = vpack.c.b16 %v3889, %v3885
  %v3994 = vpack.c.b16 %v3894, %v3890
  %v3995 = vpack.c.b16 %v3895, %v3891
  %v3996 = vpack.c.b16 %v3896, %v3892
  %v3997 = vpack.c.b16 %v3897, %v3893
  %v3998 = vpack.c.b16 %v3902, %v3898
  %v3999 = vpack.c.b16 %v3903, %v3899
  %v4000 = vpack.c.b16 %v3904, %v3900
  %v4001 = vpack.c.b16 %v3905, %v3901
  %v4002 = vpack.c.b16 %v3910, %v3906
  %v4003 = vpack.c.b16 %v3911, %v3907
  %v4004 = vpack.c.b16 %v3912, %v3908
  %v4005 = vpack.c.b16 %v3913, %v3909
  %v4006 = vpack.c.b16 %v3918, %v3914
  %v4007 = vpack.c.b16 %v3919, %v3915
  %v4008 = vpack.c.b16 %v3920, %v3916
  %v4009 = vpack.c.b16 %v3921, %v3917
  %v4010 = vpack.c.b16 %v3926, %v3922
  %v4011 = vpack.c.b16 %v3927, %v3923
  %v4012 = vpack.c.b16 %v3928, %v3924
  %v4013 = vpack.c.b16 %v3929, %v3925
  %v4014 = vpack.c.b16 %v3934, %v3930
  %v4015 = vpack.c.b16 %v3935, %v3931
  %v4016 = vpack.c.b16 %v3936, %v3932
  %v4017 = vpack.c.b16 %v3937, %v3933
  %v4018 = vpack.c.b16 %v3942, %v3938
  %v4019 = vpack.c.b16 %v3943, %v3939
  %v4020 = vpack.c.b16 %v3944, %v3940
  %v4021 = vpack.c.b16 %v3945, %v3941
  %v4022 = vpack.c.b16 %v3950, %v3946
  %v4023 = vpack.c.b16 %v3951, %v3947
  %v4024 = vpack.c.b16 %v3952, %v3948
  %v4025 = vpack.c.b16 %v3953, %v3949
  %v4099 = vsel %vm1293, %v3730, 0
  %v4102 = vsel %vm1293, %v3733, 0
  %4104 = vmatpush.bf16.msra.mxu0 %v3982
  %4105 = vmatpush.bf16.msra.mxu0 %v3978
  %4106 = vmatpush.bf16.msra.mxu0 %v3974
  %4107 = vmatpush.bf16.msra.mxu0 %v3970
  %4108 = vmatpush.bf16.msra.mxu0 %v3966
  %4109 = vmatpush.bf16.msra.mxu0 %v3962
  %4110 = vmatpush.bf16.msra.mxu0 %v3958
  %4111 = vmatpush.bf16.msra.mxu0 %v3954
  %4112 = vmatmul.bf16.gmra.mxu0 %v3728
  %v4113 = vpop.f32.mrf.mxu0
  %v4114 = vadd.f32 %v3691, %v4113
  %v4115 = vpop.f32.mrf.mxu0
  %v4116 = vadd.f32 %v3696, %v4115
  %4117 = vmatmul.bf16.gmra.mxu0 %v3731
  %v4118 = vpop.f32.mrf.mxu0
  %v4119 = vadd.f32 %v3701, %v4118
  %v4120 = vpop.f32.mrf.mxu0
  %v4121 = vadd.f32 %v3706, %v4120
  %4122 = vdwg.mxu0
  %4123 = vmatpush.bf16.msra.mxu0 %v4014
  %4124 = vmatpush.bf16.msra.mxu0 %v4010
  %4125 = vmatpush.bf16.msra.mxu0 %v4006
  %4126 = vmatpush.bf16.msra.mxu0 %v4002
  %4127 = vmatpush.bf16.msra.mxu0 %v3998
  %4128 = vmatpush.bf16.msra.mxu0 %v3994
  %4129 = vmatpush.bf16.msra.mxu0 %v3990
  %4130 = vmatpush.bf16.msra.mxu0 %v3986
  %4131 = vmatmul.bf16.gmra.mxu0 %v3729
  %v4132 = vpop.f32.mrf.mxu0
  %v4133 = vadd.f32 %v4114, %v4132
  %v4134 = vpop.f32.mrf.mxu0
  %v4135 = vadd.f32 %v4116, %v4134
  %4136 = vmatmul.bf16.gmra.mxu0 %v3732
  %v4137 = vpop.f32.mrf.mxu0
  %v4138 = vadd.f32 %v4119, %v4137
  %v4139 = vpop.f32.mrf.mxu0
  %v4140 = vadd.f32 %v4121, %v4139
  %4141 = vdwg.mxu0
  %4142 = vmatpush.bf16.msra.mxu0 0
  %4143 = vmatpush.bf16.msra.mxu0 0
  %4144 = vmatpush.bf16.msra.mxu0 0
  %4145 = vmatpush.bf16.msra.mxu0 0
  %4146 = vmatpush.bf16.msra.mxu0 0
  %4147 = vmatpush.bf16.msra.mxu0 0
  %4148 = vmatpush.bf16.msra.mxu0 %v4022
  %4149 = vmatpush.bf16.msra.mxu0 %v4018
  %4150 = vmatmul.bf16.gmra.mxu0 %v4099
  %v4151 = vpop.f32.mrf.mxu0
  %v4152 = vadd.f32 %v4133, %v4151
  %v4153 = vpop.f32.mrf.mxu0
  %v4154 = vadd.f32 %v4135, %v4153
  %4155 = vmatmul.bf16.gmra.mxu0 %v4102
  %v4156 = vpop.f32.mrf.mxu0
  %v4157 = vadd.f32 %v4138, %v4156
  %v4158 = vpop.f32.mrf.mxu0
  %v4159 = vadd.f32 %v4140, %v4158
  %4160 = vdwg.mxu0
  %4161 = vmatpush.bf16.msra.mxu0 %v3983
  %4162 = vmatpush.bf16.msra.mxu0 %v3979
  %4163 = vmatpush.bf16.msra.mxu0 %v3975
  %4164 = vmatpush.bf16.msra.mxu0 %v3971
  %4165 = vmatpush.bf16.msra.mxu0 %v3967
  %4166 = vmatpush.bf16.msra.mxu0 %v3963
  %4167 = vmatpush.bf16.msra.mxu0 %v3959
  %4168 = vmatpush.bf16.msra.mxu0 %v3955
  %4169 = vmatmul.bf16.gmra.mxu0 %v3728
  %v4170 = vpop.f32.mrf.mxu0
  %v4171 = vadd.f32 %v3691, %v4170
  %v4172 = vpop.f32.mrf.mxu0
  %v4173 = vadd.f32 %v3696, %v4172
  %4174 = vmatmul.bf16.gmra.mxu0 %v3731
  %v4175 = vpop.f32.mrf.mxu0
  %v4176 = vadd.f32 %v3701, %v4175
  %v4177 = vpop.f32.mrf.mxu0
  %v4178 = vadd.f32 %v3706, %v4177
  %4179 = vdwg.mxu0
  %4180 = vmatpush.bf16.msra.mxu0 %v4015
  %4181 = vmatpush.bf16.msra.mxu0 %v4011
  %4182 = vmatpush.bf16.msra.mxu0 %v4007
  %4183 = vmatpush.bf16.msra.mxu0 %v4003
  %4184 = vmatpush.bf16.msra.mxu0 %v3999
  %4185 = vmatpush.bf16.msra.mxu0 %v3995
  %4186 = vmatpush.bf16.msra.mxu0 %v3991
  %4187 = vmatpush.bf16.msra.mxu0 %v3987
  %4188 = vmatmul.bf16.gmra.mxu0 %v3729
  %v4189 = vpop.f32.mrf.mxu0
  %v4190 = vadd.f32 %v4171, %v4189
  %v4191 = vpop.f32.mrf.mxu0
  %v4192 = vadd.f32 %v4173, %v4191
  %4193 = vmatmul.bf16.gmra.mxu0 %v3732
  %v4194 = vpop.f32.mrf.mxu0
  %v4195 = vadd.f32 %v4176, %v4194
  %v4196 = vpop.f32.mrf.mxu0
  %v4197 = vadd.f32 %v4178, %v4196
  %4198 = vdwg.mxu0
  %4199 = vmatpush.bf16.msra.mxu0 0
  %4200 = vmatpush.bf16.msra.mxu0 0
  %4201 = vmatpush.bf16.msra.mxu0 0
  %4202 = vmatpush.bf16.msra.mxu0 0
  %4203 = vmatpush.bf16.msra.mxu0 0
  %4204 = vmatpush.bf16.msra.mxu0 0
  %4205 = vmatpush.bf16.msra.mxu0 %v4023
  %4206 = vmatpush.bf16.msra.mxu0 %v4019
  %4207 = vmatmul.bf16.gmra.mxu0 %v4099
  %v4208 = vpop.f32.mrf.mxu0
  %v4209 = vadd.f32 %v4190, %v4208
  %v4210 = vpop.f32.mrf.mxu0
  %v4211 = vadd.f32 %v4192, %v4210
  %4212 = vmatmul.bf16.gmra.mxu0 %v4102
  %v4213 = vpop.f32.mrf.mxu0
  %v4214 = vadd.f32 %v4195, %v4213
  %v4215 = vpop.f32.mrf.mxu0
  %v4216 = vadd.f32 %v4197, %v4215
  %4217 = vdwg.mxu0
  %4218 = vmatpush.bf16.msra.mxu0 %v3984
  %4219 = vmatpush.bf16.msra.mxu0 %v3980
  %4220 = vmatpush.bf16.msra.mxu0 %v3976
  %4221 = vmatpush.bf16.msra.mxu0 %v3972
  %4222 = vmatpush.bf16.msra.mxu0 %v3968
  %4223 = vmatpush.bf16.msra.mxu0 %v3964
  %4224 = vmatpush.bf16.msra.mxu0 %v3960
  %4225 = vmatpush.bf16.msra.mxu0 %v3956
  %4226 = vmatmul.bf16.gmra.mxu0 %v3728
  %v4227 = vpop.f32.mrf.mxu0
  %v4228 = vadd.f32 %v3691, %v4227
  %v4229 = vpop.f32.mrf.mxu0
  %v4230 = vadd.f32 %v3696, %v4229
  %4231 = vmatmul.bf16.gmra.mxu0 %v3731
  %v4232 = vpop.f32.mrf.mxu0
  %v4233 = vadd.f32 %v3701, %v4232
  %v4234 = vpop.f32.mrf.mxu0
  %v4235 = vadd.f32 %v3706, %v4234
  %4236 = vdwg.mxu0
  %4237 = vmatpush.bf16.msra.mxu0 %v4016
  %4238 = vmatpush.bf16.msra.mxu0 %v4012
  %4239 = vmatpush.bf16.msra.mxu0 %v4008
  %4240 = vmatpush.bf16.msra.mxu0 %v4004
  %4241 = vmatpush.bf16.msra.mxu0 %v4000
  %4242 = vmatpush.bf16.msra.mxu0 %v3996
  %4243 = vmatpush.bf16.msra.mxu0 %v3992
  %4244 = vmatpush.bf16.msra.mxu0 %v3988
  %4245 = vmatmul.bf16.gmra.mxu0 %v3729
  %v4246 = vpop.f32.mrf.mxu0
  %v4247 = vadd.f32 %v4228, %v4246
  %v4248 = vpop.f32.mrf.mxu0
  %v4249 = vadd.f32 %v4230, %v4248
  %4250 = vmatmul.bf16.gmra.mxu0 %v3732
  %v4251 = vpop.f32.mrf.mxu0
  %v4252 = vadd.f32 %v4233, %v4251
  %v4253 = vpop.f32.mrf.mxu0
  %v4254 = vadd.f32 %v4235, %v4253
  %4255 = vdwg.mxu0
  %4256 = vmatpush.bf16.msra.mxu0 0
  %4257 = vmatpush.bf16.msra.mxu0 0
  %4258 = vmatpush.bf16.msra.mxu0 0
  %4259 = vmatpush.bf16.msra.mxu0 0
  %4260 = vmatpush.bf16.msra.mxu0 0
  %4261 = vmatpush.bf16.msra.mxu0 0
  %4262 = vmatpush.bf16.msra.mxu0 %v4024
  %4263 = vmatpush.bf16.msra.mxu0 %v4020
  %4264 = vmatmul.bf16.gmra.mxu0 %v4099
  %v4265 = vpop.f32.mrf.mxu0
  %v4266 = vadd.f32 %v4247, %v4265
  %v4267 = vpop.f32.mrf.mxu0
  %v4268 = vadd.f32 %v4249, %v4267
  %4269 = vmatmul.bf16.gmra.mxu0 %v4102
  %v4270 = vpop.f32.mrf.mxu0
  %v4271 = vadd.f32 %v4252, %v4270
  %v4272 = vpop.f32.mrf.mxu0
  %v4273 = vadd.f32 %v4254, %v4272
  %4274 = vdwg.mxu0
  %4275 = vmatpush.bf16.msra.mxu0 %v3985
  %4276 = vmatpush.bf16.msra.mxu0 %v3981
  %4277 = vmatpush.bf16.msra.mxu0 %v3977
  %4278 = vmatpush.bf16.msra.mxu0 %v3973
  %4279 = vmatpush.bf16.msra.mxu0 %v3969
  %4280 = vmatpush.bf16.msra.mxu0 %v3965
  %4281 = vmatpush.bf16.msra.mxu0 %v3961
  %4282 = vmatpush.bf16.msra.mxu0 %v3957
  %4283 = vmatmul.bf16.gmra.mxu0 %v3728
  %v4284 = vpop.f32.mrf.mxu0
  %v4285 = vadd.f32 %v3691, %v4284
  %v4286 = vpop.f32.mrf.mxu0
  %v4287 = vadd.f32 %v3696, %v4286
  %4288 = vmatmul.bf16.gmra.mxu0 %v3731
  %v4289 = vpop.f32.mrf.mxu0
  %v4290 = vadd.f32 %v3701, %v4289
  %v4291 = vpop.f32.mrf.mxu0
  %v4292 = vadd.f32 %v3706, %v4291
  %4293 = vdwg.mxu0
  %4294 = vmatpush.bf16.msra.mxu0 %v4017
  %4295 = vmatpush.bf16.msra.mxu0 %v4013
  %4296 = vmatpush.bf16.msra.mxu0 %v4009
  %4297 = vmatpush.bf16.msra.mxu0 %v4005
  %4298 = vmatpush.bf16.msra.mxu0 %v4001
  %4299 = vmatpush.bf16.msra.mxu0 %v3997
  %4300 = vmatpush.bf16.msra.mxu0 %v3993
  %4301 = vmatpush.bf16.msra.mxu0 %v3989
  %4302 = vmatmul.bf16.gmra.mxu0 %v3729
  %v4303 = vpop.f32.mrf.mxu0
  %v4304 = vadd.f32 %v4285, %v4303
  %v4305 = vpop.f32.mrf.mxu0
  %v4306 = vadd.f32 %v4287, %v4305
  %4307 = vmatmul.bf16.gmra.mxu0 %v3732
  %v4308 = vpop.f32.mrf.mxu0
  %v4309 = vadd.f32 %v4290, %v4308
  %v4310 = vpop.f32.mrf.mxu0
  %v4311 = vadd.f32 %v4292, %v4310
  %4312 = vdwg.mxu0
  %4313 = vmatpush.bf16.msra.mxu0 0
  %4314 = vmatpush.bf16.msra.mxu0 0
  %4315 = vmatpush.bf16.msra.mxu0 0
  %4316 = vmatpush.bf16.msra.mxu0 0
  %4317 = vmatpush.bf16.msra.mxu0 0
  %4318 = vmatpush.bf16.msra.mxu0 0
  %4319 = vmatpush.bf16.msra.mxu0 %v4025
  %4320 = vmatpush.bf16.msra.mxu0 %v4021
  %4321 = vmatmul.bf16.gmra.mxu0 %v4099
  %v4322 = vpop.f32.mrf.mxu0
  %v4323 = vadd.f32 %v4304, %v4322
  %v4324 = vpop.f32.mrf.mxu0
  %v4325 = vadd.f32 %v4306, %v4324
  %4326 = vmatmul.bf16.gmra.mxu0 %v4102
  %v4327 = vpop.f32.mrf.mxu0
  %v4328 = vadd.f32 %v4309, %v4327
  %v4329 = vpop.f32.mrf.mxu0
  %v4330 = vadd.f32 %v4311, %v4329
  %4331 = vdwg.mxu0
  %v4332 = vmax.f32 %v4152, 0.0
  %v4333 = vmax.f32 %v4209, 0.0
  %v4334 = vmax.f32 %v4266, 0.0
  %v4335 = vmax.f32 %v4323, 0.0
  %v4336 = vmax.f32 %v4154, 0.0
  %v4337 = vmax.f32 %v4211, 0.0
  %v4338 = vmax.f32 %v4268, 0.0
  %v4339 = vmax.f32 %v4325, 0.0
  %v4340 = vmax.f32 %v4157, 0.0
  %v4341 = vmax.f32 %v4214, 0.0
  %v4342 = vmax.f32 %v4271, 0.0
  %v4343 = vmax.f32 %v4328, 0.0
  %v4344 = vmax.f32 %v4159, 0.0
  %v4345 = vmax.f32 %v4216, 0.0
  %v4346 = vmax.f32 %v4273, 0.0
  %v4347 = vmax.f32 %v4330, 0.0
  %v4348 = vld [vmem:[%s4] sm:$0xf]
  %v4349 = vld [vmem:[%s4 + $0x4] sm:$0xf]
  %v4350 = vld [vmem:[%s4 + $0x8] sm:$0xf]
  %v4351 = vld [vmem:[%s4 + $0xc] sm:$0xf]
  %v4352 = vld [vmem:[%s4 + $0x10] sm:$0xf]
  %v4353 = vld [vmem:[%s4 + $0x14] sm:$0xf]
  %v4354 = vld [vmem:[%s4 + $0x18] sm:$0xf]
  %v4355 = vld [vmem:[%s4 + $0x1c] sm:$0xf]
  %v4356 = vld [vmem:[%s4 + $0x20] sm:$0xf]
  %v4357 = vld [vmem:[%s4 + $0x24] sm:$0xf]
  %v4358 = vld [vmem:[%s4 + $0x28] sm:$0xf]
  %v4359 = vld [vmem:[%s4 + $0x2c] sm:$0xf]
  %v4360 = vld [vmem:[%s4 + $0x30] sm:$0xf]
  %v4361 = vld [vmem:[%s4 + $0x34] sm:$0xf]
  %v4362 = vld [vmem:[%s4 + $0x38] sm:$0xf]
  %v4363 = vld [vmem:[%s4 + $0x3c] sm:$0xf]
  %v4364 = vld [vmem:[%s4 + $0x40] sm:$0xf]
  %v4365 = vld [vmem:[%s4 + $0x44] sm:$0xf]
  %v4366 = vld [vmem:[%s4 + $0x48] sm:$0xf]
  %v4367 = vld [vmem:[%s4 + $0x4c] sm:$0xf]
  %v4368 = vld [vmem:[%s4 + $0x50] sm:$0xf]
  %v4369 = vld [vmem:[%s4 + $0x54] sm:$0xf]
  %v4370 = vld [vmem:[%s4 + $0x58] sm:$0xf]
  %v4371 = vld [vmem:[%s4 + $0x5c] sm:$0xf]
  %v4372 = vld [vmem:[%s4 + $0x60] sm:$0xf]
  %v4373 = vld [vmem:[%s4 + $0x64] sm:$0xf]
  %v4374 = vld [vmem:[%s4 + $0x68] sm:$0xf]
  %v4375 = vld [vmem:[%s4 + $0x6c] sm:$0xf]
  %v4376 = vld [vmem:[%s4 + $0x70] sm:$0xf]
  %v4377 = vld [vmem:[%s4 + $0x74] sm:$0xf]
  %v4378 = vld [vmem:[%s4 + $0x78] sm:$0xf]
  %v4379 = vld [vmem:[%s4 + $0x7c] sm:$0xf]
  %v4380 = vld [vmem:[%s4 + $0x80] sm:$0xf]
  %v4381 = vld [vmem:[%s4 + $0x84] sm:$0xf]
  %v4382 = vld [vmem:[%s4 + $0x88] sm:$0xf]
  %v4383 = vld [vmem:[%s4 + $0x8c] sm:$0xf]
  %v4384 = vld [vmem:[%s4 + $0x90] sm:$0xf]
  %v4385 = vld [vmem:[%s4 + $0x94] sm:$0xf]
  %v4386 = vld [vmem:[%s4 + $0x98] sm:$0xf]
  %v4387 = vld [vmem:[%s4 + $0x9c] sm:$0xf]
  %v4388 = vld [vmem:[%s4 + $0xa0] sm:$0xf]
  %v4389 = vld [vmem:[%s4 + $0xa4] sm:$0xf]
  %v4390 = vld [vmem:[%s4 + $0xa8] sm:$0xf]
  %v4391 = vld [vmem:[%s4 + $0xac] sm:$0xf]
  %v4392 = vld [vmem:[%s4 + $0xb0] sm:$0xf]
  %v4393 = vld [vmem:[%s4 + $0xb4] sm:$0xf]
  %v4394 = vld [vmem:[%s4 + $0xb8] sm:$0xf]
  %v4395 = vld [vmem:[%s4 + $0xbc] sm:$0xf]
  %v4396 = vld [vmem:[%s4 + $0xc0] sm:$0xf]
  %v4397 = vld [vmem:[%s4 + $0xc4] sm:$0xf]
  %v4398 = vld [vmem:[%s4 + $0xc8] sm:$0xf]
  %v4399 = vld [vmem:[%s4 + $0xcc] sm:$0xf]
  %v4400 = vld [vmem:[%s4 + $0xd0] sm:$0xf]
  %v4401 = vld [vmem:[%s4 + $0xd4] sm:$0xf]
  %v4402 = vld [vmem:[%s4 + $0xd8] sm:$0xf]
  %v4403 = vld [vmem:[%s4 + $0xdc] sm:$0xf]
  %v4404 = vld [vmem:[%s4 + $0xe0] sm:$0xf]
  %v4405 = vld [vmem:[%s4 + $0xe4] sm:$0xf]
  %v4406 = vld [vmem:[%s4 + $0xe8] sm:$0xf]
  %v4407 = vld [vmem:[%s4 + $0xec] sm:$0xf]
  %v4408 = vld [vmem:[%s4 + $0xf0] sm:$0xf]
  %v4409 = vld [vmem:[%s4 + $0xf4] sm:$0xf]
  %v4410 = vld [vmem:[%s4 + $0xf8] sm:$0xf]
  %v4411 = vld [vmem:[%s4 + $0xfc] sm:$0xf]
  %v4412 = vpack.c.bf16 %v4336, %v4332
  %v4413 = vpack.c.bf16 %v4337, %v4333
  %v4414 = vpack.c.bf16 %v4338, %v4334
  %v4415 = vpack.c.bf16 %v4339, %v4335
  %v4416 = vpack.c.bf16 %v4344, %v4340
  %v4417 = vpack.c.bf16 %v4345, %v4341
  %v4418 = vpack.c.bf16 %v4346, %v4342
  %v4419 = vpack.c.bf16 %v4347, %v4343
  %v4420 = vld [vmem:[%s5] sm:$0xff]
  %v4421 = vld [vmem:[%s5 + $0x8] sm:$0xff]
  %v4422 = vld [vmem:[%s5 + $0x10] sm:$0xff]
  %v4423 = vld [vmem:[%s5 + $0x18] sm:$0xff]
  %v4424 = vld [vmem:[%s5 + $0x20] sm:$0xff]
  %v4425 = vld [vmem:[%s5 + $0x28] sm:$0xff]
  %v4426 = vld [vmem:[%s5 + $0x30] sm:$0xff]
  %v4427 = vld [vmem:[%s5 + $0x38] sm:$0xff]
  %v4428 = vld [vmem:[%s5 + $0x40] sm:$0xff]
  %v4429 = vld [vmem:[%s5 + $0x48] sm:$0xff]
  %v4430 = vld [vmem:[%s5 + $0x50] sm:$0xff]
  %v4431 = vld [vmem:[%s5 + $0x58] sm:$0xff]
  %v4432 = vld [vmem:[%s5 + $0x60] sm:$0xff]
  %v4433 = vld [vmem:[%s5 + $0x68] sm:$0xff]
  %v4434 = vld [vmem:[%s5 + $0x70] sm:$0xff]
  %v4435 = vld [vmem:[%s5 + $0x78] sm:$0xff]
  %v4436 = vld [vmem:[%s5 + $0x80] sm:$0xff]
  %v4437 = vld [vmem:[%s5 + $0x88] sm:$0xff]
  %v4438 = vld [vmem:[%s5 + $0x90] sm:$0xff]
  %v4439 = vld [vmem:[%s5 + $0x98] sm:$0xff]
  %v4440 = vld [vmem:[%s5 + $0xa0] sm:$0xff]
  %v4441 = vld [vmem:[%s5 + $0xa8] sm:$0xff]
  %v4442 = vld [vmem:[%s5 + $0xb0] sm:$0xff]
  %v4443 = vld [vmem:[%s5 + $0xb8] sm:$0xff]
  %v4444 = vld [vmem:[%s5 + $0xc0] sm:$0xff]
  %v4445 = vld [vmem:[%s5 + $0xc8] sm:$0xff]
  %v4446 = vld [vmem:[%s5 + $0xd0] sm:$0xff]
  %v4447 = vld [vmem:[%s5 + $0xd8] sm:$0xff]
  %v4448 = vld [vmem:[%s5 + $0xe0] sm:$0xff]
  %v4449 = vld [vmem:[%s5 + $0xe8] sm:$0xff]
  %v4450 = vld [vmem:[%s5 + $0xf0] sm:$0xff]
  %v4451 = vld [vmem:[%s5 + $0xf8] sm:$0xff]
  %v4452 = vld [vmem:[%s5 + $0x100] sm:$0xff]
  %v4453 = vld [vmem:[%s5 + $0x108] sm:$0xff]
  %v4454 = vld [vmem:[%s5 + $0x110] sm:$0xff]
  %v4455 = vld [vmem:[%s5 + $0x118] sm:$0xff]
  %v4456 = vld [vmem:[%s5 + $0x120] sm:$0xff]
  %v4457 = vld [vmem:[%s5 + $0x128] sm:$0xff]
  %v4458 = vld [vmem:[%s5 + $0x130] sm:$0xff]
  %v4459 = vld [vmem:[%s5 + $0x138] sm:$0xff]
  %v4460 = vld [vmem:[%s5 + $0x140] sm:$0xff]
  %v4461 = vld [vmem:[%s5 + $0x148] sm:$0xff]
  %v4462 = vld [vmem:[%s5 + $0x150] sm:$0xff]
  %v4463 = vld [vmem:[%s5 + $0x158] sm:$0xff]
  %v4464 = vld [vmem:[%s5 + $0x160] sm:$0xff]
  %v4465 = vld [vmem:[%s5 + $0x168] sm:$0xff]
  %v4466 = vld [vmem:[%s5 + $0x170] sm:$0xff]
  %v4467 = vld [vmem:[%s5 + $0x178] sm:$0xff]
  %v4468 = vld [vmem:[%s5 + $0x180] sm:$0xff]
  %v4469 = vld [vmem:[%s5 + $0x188] sm:$0xff]
  %v4470 = vld [vmem:[%s5 + $0x190] sm:$0xff]
  %v4471 = vld [vmem:[%s5 + $0x198] sm:$0xff]
  %v4472 = vld [vmem:[%s5 + $0x1a0] sm:$0xff]
  %v4473 = vld [vmem:[%s5 + $0x1a8] sm:$0xff]
  %v4474 = vld [vmem:[%s5 + $0x1b0] sm:$0xff]
  %v4475 = vld [vmem:[%s5 + $0x1b8] sm:$0xff]
  %v4476 = vld [vmem:[%s5 + $0x1c0] sm:$0xff]
  %v4477 = vld [vmem:[%s5 + $0x1c8] sm:$0xff]
  %v4478 = vld [vmem:[%s5 + $0x1d0] sm:$0xff]
  %v4479 = vld [vmem:[%s5 + $0x1d8] sm:$0xff]
  %v4480 = vld [vmem:[%s5 + $0x1e0] sm:$0xff]
  %v4481 = vld [vmem:[%s5 + $0x1e8] sm:$0xff]
  %v4482 = vld [vmem:[%s5 + $0x1f0] sm:$0xff]
  %v4483 = vld [vmem:[%s5 + $0x1f8] sm:$0xff]
  %4485 = vset.pattern.permute.xlu0 0
  %4486 = vperm.xlu0 %4485, %v4420
  %v4487 = vpop.permute.xlu0 %4486
  %4490 = vset.pattern.permute.xlu0 0
  %4491 = vperm.xlu0 %4490, %v4421
  %v4492 = vpop.permute.xlu0 %4491
  %4495 = vset.pattern.permute.xlu0 0
  %4496 = vperm.xlu0 %4495, %v4422
  %v4497 = vpop.permute.xlu0 %4496
  %4500 = vset.pattern.permute.xlu0 0
  %4501 = vperm.xlu0 %4500, %v4423
  %v4502 = vpop.permute.xlu0 %4501
  %4505 = vset.pattern.permute.xlu0 0
  %4506 = vperm.xlu0 %4505, %v4424
  %v4507 = vpop.permute.xlu0 %4506
  %4510 = vset.pattern.permute.xlu0 0
  %4511 = vperm.xlu0 %4510, %v4425
  %v4512 = vpop.permute.xlu0 %4511
  %4515 = vset.pattern.permute.xlu0 0
  %4516 = vperm.xlu0 %4515, %v4426
  %v4517 = vpop.permute.xlu0 %4516
  %4520 = vset.pattern.permute.xlu0 0
  %4521 = vperm.xlu0 %4520, %v4427
  %v4522 = vpop.permute.xlu0 %4521
  %4525 = vset.pattern.permute.xlu0 0
  %4526 = vperm.xlu0 %4525, %v4428
  %v4527 = vpop.permute.xlu0 %4526
  %4530 = vset.pattern.permute.xlu0 0
  %4531 = vperm.xlu0 %4530, %v4429
  %v4532 = vpop.permute.xlu0 %4531
  %4535 = vset.pattern.permute.xlu0 0
  %4536 = vperm.xlu0 %4535, %v4430
  %v4537 = vpop.permute.xlu0 %4536
  %4540 = vset.pattern.permute.xlu0 0
  %4541 = vperm.xlu0 %4540, %v4431
  %v4542 = vpop.permute.xlu0 %4541
  %4545 = vset.pattern.permute.xlu0 0
  %4546 = vperm.xlu0 %4545, %v4432
  %v4547 = vpop.permute.xlu0 %4546
  %4550 = vset.pattern.permute.xlu0 0
  %4551 = vperm.xlu0 %4550, %v4433
  %v4552 = vpop.permute.xlu0 %4551
  %4555 = vset.pattern.permute.xlu0 0
  %4556 = vperm.xlu0 %4555, %v4434
  %v4557 = vpop.permute.xlu0 %4556
  %4560 = vset.pattern.permute.xlu0 0
  %4561 = vperm.xlu0 %4560, %v4435
  %v4562 = vpop.permute.xlu0 %4561
  %4565 = vset.pattern.permute.xlu0 0
  %4566 = vperm.xlu0 %4565, %v4436
  %v4567 = vpop.permute.xlu0 %4566
  %4570 = vset.pattern.permute.xlu0 0
  %4571 = vperm.xlu0 %4570, %v4437
  %v4572 = vpop.permute.xlu0 %4571
  %4575 = vset.pattern.permute.xlu0 0
  %4576 = vperm.xlu0 %4575, %v4438
  %v4577 = vpop.permute.xlu0 %4576
  %4580 = vset.pattern.permute.xlu0 0
  %4581 = vperm.xlu0 %4580, %v4439
  %v4582 = vpop.permute.xlu0 %4581
  %4585 = vset.pattern.permute.xlu0 0
  %4586 = vperm.xlu0 %4585, %v4440
  %v4587 = vpop.permute.xlu0 %4586
  %4590 = vset.pattern.permute.xlu0 0
  %4591 = vperm.xlu0 %4590, %v4441
  %v4592 = vpop.permute.xlu0 %4591
  %4595 = vset.pattern.permute.xlu0 0
  %4596 = vperm.xlu0 %4595, %v4442
  %v4597 = vpop.permute.xlu0 %4596
  %4600 = vset.pattern.permute.xlu0 0
  %4601 = vperm.xlu0 %4600, %v4443
  %v4602 = vpop.permute.xlu0 %4601
  %4605 = vset.pattern.permute.xlu0 0
  %4606 = vperm.xlu0 %4605, %v4444
  %v4607 = vpop.permute.xlu0 %4606
  %4610 = vset.pattern.permute.xlu0 0
  %4611 = vperm.xlu0 %4610, %v4445
  %v4612 = vpop.permute.xlu0 %4611
  %4615 = vset.pattern.permute.xlu0 0
  %4616 = vperm.xlu0 %4615, %v4446
  %v4617 = vpop.permute.xlu0 %4616
  %4620 = vset.pattern.permute.xlu0 0
  %4621 = vperm.xlu0 %4620, %v4447
  %v4622 = vpop.permute.xlu0 %4621
  %4625 = vset.pattern.permute.xlu0 0
  %4626 = vperm.xlu0 %4625, %v4448
  %v4627 = vpop.permute.xlu0 %4626
  %4630 = vset.pattern.permute.xlu0 0
  %4631 = vperm.xlu0 %4630, %v4449
  %v4632 = vpop.permute.xlu0 %4631
  %4635 = vset.pattern.permute.xlu0 0
  %4636 = vperm.xlu0 %4635, %v4450
  %v4637 = vpop.permute.xlu0 %4636
  %4640 = vset.pattern.permute.xlu0 0
  %4641 = vperm.xlu0 %4640, %v4451
  %v4642 = vpop.permute.xlu0 %4641
  %4645 = vset.pattern.permute.xlu0 0
  %4646 = vperm.xlu0 %4645, %v4452
  %v4647 = vpop.permute.xlu0 %4646
  %4650 = vset.pattern.permute.xlu0 0
  %4651 = vperm.xlu0 %4650, %v4453
  %v4652 = vpop.permute.xlu0 %4651
  %4655 = vset.pattern.permute.xlu0 0
  %4656 = vperm.xlu0 %4655, %v4454
  %v4657 = vpop.permute.xlu0 %4656
  %4660 = vset.pattern.permute.xlu0 0
  %4661 = vperm.xlu0 %4660, %v4455
  %v4662 = vpop.permute.xlu0 %4661
  %4665 = vset.pattern.permute.xlu0 0
  %4666 = vperm.xlu0 %4665, %v4456
  %v4667 = vpop.permute.xlu0 %4666
  %4670 = vset.pattern.permute.xlu0 0
  %4671 = vperm.xlu0 %4670, %v4457
  %v4672 = vpop.permute.xlu0 %4671
  %4675 = vset.pattern.permute.xlu0 0
  %4676 = vperm.xlu0 %4675, %v4458
  %v4677 = vpop.permute.xlu0 %4676
  %4680 = vset.pattern.permute.xlu0 0
  %4681 = vperm.xlu0 %4680, %v4459
  %v4682 = vpop.permute.xlu0 %4681
  %4685 = vset.pattern.permute.xlu0 0
  %4686 = vperm.xlu0 %4685, %v4460
  %v4687 = vpop.permute.xlu0 %4686
  %4690 = vset.pattern.permute.xlu0 0
  %4691 = vperm.xlu0 %4690, %v4461
  %v4692 = vpop.permute.xlu0 %4691
  %4695 = vset.pattern.permute.xlu0 0
  %4696 = vperm.xlu0 %4695, %v4462
  %v4697 = vpop.permute.xlu0 %4696
  %4700 = vset.pattern.permute.xlu0 0
  %4701 = vperm.xlu0 %4700, %v4463
  %v4702 = vpop.permute.xlu0 %4701
  %4705 = vset.pattern.permute.xlu0 0
  %4706 = vperm.xlu0 %4705, %v4464
  %v4707 = vpop.permute.xlu0 %4706
  %4710 = vset.pattern.permute.xlu0 0
  %4711 = vperm.xlu0 %4710, %v4465
  %v4712 = vpop.permute.xlu0 %4711
  %4715 = vset.pattern.permute.xlu0 0
  %4716 = vperm.xlu0 %4715, %v4466
  %v4717 = vpop.permute.xlu0 %4716
  %4720 = vset.pattern.permute.xlu0 0
  %4721 = vperm.xlu0 %4720, %v4467
  %v4722 = vpop.permute.xlu0 %4721
  %4725 = vset.pattern.permute.xlu0 0
  %4726 = vperm.xlu0 %4725, %v4468
  %v4727 = vpop.permute.xlu0 %4726
  %4730 = vset.pattern.permute.xlu0 0
  %4731 = vperm.xlu0 %4730, %v4469
  %v4732 = vpop.permute.xlu0 %4731
  %4735 = vset.pattern.permute.xlu0 0
  %4736 = vperm.xlu0 %4735, %v4470
  %v4737 = vpop.permute.xlu0 %4736
  %4740 = vset.pattern.permute.xlu0 0
  %4741 = vperm.xlu0 %4740, %v4471
  %v4742 = vpop.permute.xlu0 %4741
  %4745 = vset.pattern.permute.xlu0 0
  %4746 = vperm.xlu0 %4745, %v4472
  %v4747 = vpop.permute.xlu0 %4746
  %4750 = vset.pattern.permute.xlu0 0
  %4751 = vperm.xlu0 %4750, %v4473
  %v4752 = vpop.permute.xlu0 %4751
  %4755 = vset.pattern.permute.xlu0 0
  %4756 = vperm.xlu0 %4755, %v4474
  %v4757 = vpop.permute.xlu0 %4756
  %4760 = vset.pattern.permute.xlu0 0
  %4761 = vperm.xlu0 %4760, %v4475
  %v4762 = vpop.permute.xlu0 %4761
  %4765 = vset.pattern.permute.xlu0 0
  %4766 = vperm.xlu0 %4765, %v4476
  %v4767 = vpop.permute.xlu0 %4766
  %4770 = vset.pattern.permute.xlu0 0
  %4771 = vperm.xlu0 %4770, %v4477
  %v4772 = vpop.permute.xlu0 %4771
  %4775 = vset.pattern.permute.xlu0 0
  %4776 = vperm.xlu0 %4775, %v4478
  %v4777 = vpop.permute.xlu0 %4776
  %4780 = vset.pattern.permute.xlu0 0
  %4781 = vperm.xlu0 %4780, %v4479
  %v4782 = vpop.permute.xlu0 %4781
  %4785 = vset.pattern.permute.xlu0 0
  %4786 = vperm.xlu0 %4785, %v4480
  %v4787 = vpop.permute.xlu0 %4786
  %4790 = vset.pattern.permute.xlu0 0
  %4791 = vperm.xlu0 %4790, %v4481
  %v4792 = vpop.permute.xlu0 %4791
  %4795 = vset.pattern.permute.xlu0 0
  %4796 = vperm.xlu0 %4795, %v4482
  %v4797 = vpop.permute.xlu0 %4796
  %4800 = vset.pattern.permute.xlu0 0
  %4801 = vperm.xlu0 %4800, %v4483
  %v4802 = vpop.permute.xlu0 %4801
  %v4868 = vunpack.c.l.b16 %v4348
  %v4869 = vunpack.c.l.b16 %v4349
  %v4870 = vunpack.c.l.b16 %v4350
  %v4871 = vunpack.c.l.b16 %v4351
  %v4872 = vunpack.c.l.b16 %v4352
  %v4873 = vunpack.c.l.b16 %v4353
  %v4874 = vunpack.c.l.b16 %v4354
  %v4875 = vunpack.c.l.b16 %v4355
  %v4876 = vunpack.c.l.b16 %v4356
  %v4877 = vunpack.c.l.b16 %v4357
  %v4878 = vunpack.c.l.b16 %v4358
  %v4879 = vunpack.c.l.b16 %v4359
  %v4880 = vunpack.c.l.b16 %v4360
  %v4881 = vunpack.c.l.b16 %v4361
  %v4882 = vunpack.c.l.b16 %v4362
  %v4883 = vunpack.c.l.b16 %v4363
  %v4884 = vunpack.c.l.b16 %v4364
  %v4885 = vunpack.c.l.b16 %v4365
  %v4886 = vunpack.c.l.b16 %v4366
  %v4887 = vunpack.c.l.b16 %v4367
  %v4888 = vunpack.c.l.b16 %v4368
  %v4889 = vunpack.c.l.b16 %v4369
  %v4890 = vunpack.c.l.b16 %v4370
  %v4891 = vunpack.c.l.b16 %v4371
  %v4892 = vunpack.c.l.b16 %v4372
  %v4893 = vunpack.c.l.b16 %v4373
  %v4894 = vunpack.c.l.b16 %v4374
  %v4895 = vunpack.c.l.b16 %v4375
  %v4896 = vunpack.c.l.b16 %v4376
  %v4897 = vunpack.c.l.b16 %v4377
  %v4898 = vunpack.c.l.b16 %v4378
  %v4899 = vunpack.c.l.b16 %v4379
  %v4900 = vunpack.c.l.b16 %v4380
  %v4901 = vunpack.c.l.b16 %v4381
  %v4902 = vunpack.c.l.b16 %v4382
  %v4903 = vunpack.c.l.b16 %v4383
  %v4904 = vunpack.c.l.b16 %v4384
  %v4905 = vunpack.c.l.b16 %v4385
  %v4906 = vunpack.c.l.b16 %v4386
  %v4907 = vunpack.c.l.b16 %v4387
  %v4908 = vunpack.c.l.b16 %v4388
  %v4909 = vunpack.c.l.b16 %v4389
  %v4910 = vunpack.c.l.b16 %v4390
  %v4911 = vunpack.c.l.b16 %v4391
  %v4912 = vunpack.c.l.b16 %v4392
  %v4913 = vunpack.c.l.b16 %v4393
  %v4914 = vunpack.c.l.b16 %v4394
  %v4915 = vunpack.c.l.b16 %v4395
  %v4916 = vunpack.c.l.b16 %v4396
  %v4917 = vunpack.c.l.b16 %v4397
  %v4918 = vunpack.c.l.b16 %v4398
  %v4919 = vunpack.c.l.b16 %v4399
  %v4920 = vunpack.c.l.b16 %v4400
  %v4921 = vunpack.c.l.b16 %v4401
  %v4922 = vunpack.c.l.b16 %v4402
  %v4923 = vunpack.c.l.b16 %v4403
  %v4924 = vunpack.c.l.b16 %v4404
  %v4925 = vunpack.c.l.b16 %v4405
  %v4926 = vunpack.c.l.b16 %v4406
  %v4927 = vunpack.c.l.b16 %v4407
  %v4928 = vunpack.c.l.b16 %v4408
  %v4929 = vunpack.c.l.b16 %v4409
  %v4930 = vunpack.c.l.b16 %v4410
  %v4931 = vunpack.c.l.b16 %v4411
  %v4932 = vpack.c.b16 %v4869, %v4868
  %v4933 = vpack.c.b16 %v4871, %v4870
  %v4934 = vpack.c.b16 %v4873, %v4872
  %v4935 = vpack.c.b16 %v4875, %v4874
  %v4936 = vpack.c.b16 %v4877, %v4876
  %v4937 = vpack.c.b16 %v4879, %v4878
  %v4938 = vpack.c.b16 %v4881, %v4880
  %v4939 = vpack.c.b16 %v4883, %v4882
  %v4940 = vpack.c.b16 %v4885, %v4884
  %v4941 = vpack.c.b16 %v4887, %v4886
  %v4942 = vpack.c.b16 %v4889, %v4888
  %v4943 = vpack.c.b16 %v4891, %v4890
  %v4944 = vpack.c.b16 %v4893, %v4892
  %v4945 = vpack.c.b16 %v4895, %v4894
  %v4946 = vpack.c.b16 %v4897, %v4896
  %v4947 = vpack.c.b16 %v4899, %v4898
  %v4948 = vpack.c.b16 %v4901, %v4900
  %v4949 = vpack.c.b16 %v4903, %v4902
  %v4950 = vpack.c.b16 %v4905, %v4904
  %v4951 = vpack.c.b16 %v4907, %v4906
  %v4952 = vpack.c.b16 %v4909, %v4908
  %v4953 = vpack.c.b16 %v4911, %v4910
  %v4954 = vpack.c.b16 %v4913, %v4912
  %v4955 = vpack.c.b16 %v4915, %v4914
  %v4956 = vpack.c.b16 %v4917, %v4916
  %v4957 = vpack.c.b16 %v4919, %v4918
  %v4958 = vpack.c.b16 %v4921, %v4920
  %v4959 = vpack.c.b16 %v4923, %v4922
  %v4960 = vpack.c.b16 %v4925, %v4924
  %v4961 = vpack.c.b16 %v4927, %v4926
  %v4962 = vpack.c.b16 %v4929, %v4928
  %v4963 = vpack.c.b16 %v4931, %v4930
  %v4965 = vsel %vm1293, %v4932, 0
  %v4968 = vsel %vm1293, %v4933, 0
  %v4971 = vsel %vm1293, %v4934, 0
  %v4974 = vsel %vm1293, %v4935, 0
  %v4977 = vsel %vm1293, %v4936, 0
  %v4980 = vsel %vm1293, %v4937, 0
  %v4983 = vsel %vm1293, %v4938, 0
  %v4986 = vsel %vm1293, %v4939, 0
  %v4989 = vsel %vm1293, %v4940, 0
  %v4992 = vsel %vm1293, %v4941, 0
  %v4995 = vsel %vm1293, %v4942, 0
  %v4998 = vsel %vm1293, %v4943, 0
  %v5001 = vsel %vm1293, %v4944, 0
  %v5004 = vsel %vm1293, %v4945, 0
  %v5007 = vsel %vm1293, %v4946, 0
  %v5010 = vsel %vm1293, %v4947, 0
  %v5013 = vsel %vm1293, %v4948, 0
  %v5016 = vsel %vm1293, %v4949, 0
  %v5019 = vsel %vm1293, %v4950, 0
  %v5022 = vsel %vm1293, %v4951, 0
  %v5025 = vsel %vm1293, %v4952, 0
  %v5028 = vsel %vm1293, %v4953, 0
  %v5031 = vsel %vm1293, %v4954, 0
  %v5034 = vsel %vm1293, %v4955, 0
  %v5037 = vsel %vm1293, %v4956, 0
  %v5040 = vsel %vm1293, %v4957, 0
  %v5043 = vsel %vm1293, %v4958, 0
  %v5046 = vsel %vm1293, %v4959, 0
  %v5049 = vsel %vm1293, %v4960, 0
  %v5052 = vsel %vm1293, %v4961, 0
  %v5055 = vsel %vm1293, %v4962, 0
  %v5058 = vsel %vm1293, %v4963, 0
  %5060 = vmatpush.bf16.msra.mxu0 0
  %5061 = vmatpush.bf16.msra.mxu0 0
  %5062 = vmatpush.bf16.msra.mxu0 0
  %5063 = vmatpush.bf16.msra.mxu0 0
  %5064 = vmatpush.bf16.msra.mxu0 0
  %5065 = vmatpush.bf16.msra.mxu0 0
  %5066 = vmatpush.bf16.msra.mxu0 %v4416
  %5067 = vmatpush.bf16.msra.mxu0 %v4412
  %5068 = vmatmul.bf16.gmra.mxu0 %v4965
  %v5069 = vpop.f32.mrf.mxu0
  %v5070 = vadd.f32 %v4487, %v5069
  %v5071 = vpop.f32.mrf.mxu0
  %v5072 = vadd.f32 %v4492, %v5071
  %5073 = vmatmul.bf16.gmra.mxu0 %v4968
  %v5074 = vpop.f32.mrf.mxu0
  %v5075 = vadd.f32 %v4497, %v5074
  %v5076 = vpop.f32.mrf.mxu0
  %v5077 = vadd.f32 %v4502, %v5076
  %5078 = vmatmul.bf16.gmra.mxu0 %v4971
  %v5079 = vpop.f32.mrf.mxu0
  %v5080 = vadd.f32 %v4507, %v5079
  %v5081 = vpop.f32.mrf.mxu0
  %v5082 = vadd.f32 %v4512, %v5081
  %5083 = vmatmul.bf16.gmra.mxu0 %v4974
  %v5084 = vpop.f32.mrf.mxu0
  %v5085 = vadd.f32 %v4517, %v5084
  %v5086 = vpop.f32.mrf.mxu0
  %v5087 = vadd.f32 %v4522, %v5086
  %5088 = vmatmul.bf16.gmra.mxu0 %v4977
  %v5089 = vpop.f32.mrf.mxu0
  %v5090 = vadd.f32 %v4527, %v5089
  %v5091 = vpop.f32.mrf.mxu0
  %v5092 = vadd.f32 %v4532, %v5091
  %5093 = vmatmul.bf16.gmra.mxu0 %v4980
  %v5094 = vpop.f32.mrf.mxu0
  %v5095 = vadd.f32 %v4537, %v5094
  %v5096 = vpop.f32.mrf.mxu0
  %v5097 = vadd.f32 %v4542, %v5096
  %5098 = vmatmul.bf16.gmra.mxu0 %v4983
  %v5099 = vpop.f32.mrf.mxu0
  %v5100 = vadd.f32 %v4547, %v5099
  %v5101 = vpop.f32.mrf.mxu0
  %v5102 = vadd.f32 %v4552, %v5101
  %5103 = vmatmul.bf16.gmra.mxu0 %v4986
  %v5104 = vpop.f32.mrf.mxu0
  %v5105 = vadd.f32 %v4557, %v5104
  %v5106 = vpop.f32.mrf.mxu0
  %v5107 = vadd.f32 %v4562, %v5106
  %5108 = vmatmul.bf16.gmra.mxu0 %v4989
  %v5109 = vpop.f32.mrf.mxu0
  %v5110 = vadd.f32 %v4567, %v5109
  %v5111 = vpop.f32.mrf.mxu0
  %v5112 = vadd.f32 %v4572, %v5111
  %5113 = vmatmul.bf16.gmra.mxu0 %v4992
  %v5114 = vpop.f32.mrf.mxu0
  %v5115 = vadd.f32 %v4577, %v5114
  %v5116 = vpop.f32.mrf.mxu0
  %v5117 = vadd.f32 %v4582, %v5116
  %5118 = vmatmul.bf16.gmra.mxu0 %v4995
  %v5119 = vpop.f32.mrf.mxu0
  %v5120 = vadd.f32 %v4587, %v5119
  %v5121 = vpop.f32.mrf.mxu0
  %v5122 = vadd.f32 %v4592, %v5121
  %5123 = vmatmul.bf16.gmra.mxu0 %v4998
  %v5124 = vpop.f32.mrf.mxu0
  %v5125 = vadd.f32 %v4597, %v5124
  %v5126 = vpop.f32.mrf.mxu0
  %v5127 = vadd.f32 %v4602, %v5126
  %5128 = vmatmul.bf16.gmra.mxu0 %v5001
  %v5129 = vpop.f32.mrf.mxu0
  %v5130 = vadd.f32 %v4607, %v5129
  %v5131 = vpop.f32.mrf.mxu0
  %v5132 = vadd.f32 %v4612, %v5131
  %5133 = vmatmul.bf16.gmra.mxu0 %v5004
  %v5134 = vpop.f32.mrf.mxu0
  %v5135 = vadd.f32 %v4617, %v5134
  %v5136 = vpop.f32.mrf.mxu0
  %v5137 = vadd.f32 %v4622, %v5136
  %5138 = vmatmul.bf16.gmra.mxu0 %v5007
  %v5139 = vpop.f32.mrf.mxu0
  %v5140 = vadd.f32 %v4627, %v5139
  %v5141 = vpop.f32.mrf.mxu0
  %v5142 = vadd.f32 %v4632, %v5141
  %5143 = vmatmul.bf16.gmra.mxu0 %v5010
  %v5144 = vpop.f32.mrf.mxu0
  %v5145 = vadd.f32 %v4637, %v5144
  %v5146 = vpop.f32.mrf.mxu0
  %v5147 = vadd.f32 %v4642, %v5146
  %5148 = vmatmul.bf16.gmra.mxu0 %v5013
  %v5149 = vpop.f32.mrf.mxu0
  %v5150 = vadd.f32 %v4647, %v5149
  %v5151 = vpop.f32.mrf.mxu0
  %v5152 = vadd.f32 %v4652, %v5151
  %5153 = vmatmul.bf16.gmra.mxu0 %v5016
  %v5154 = vpop.f32.mrf.mxu0
  %v5155 = vadd.f32 %v4657, %v5154
  %v5156 = vpop.f32.mrf.mxu0
  %v5157 = vadd.f32 %v4662, %v5156
  %5158 = vmatmul.bf16.gmra.mxu0 %v5019
  %v5159 = vpop.f32.mrf.mxu0
  %v5160 = vadd.f32 %v4667, %v5159
  %v5161 = vpop.f32.mrf.mxu0
  %v5162 = vadd.f32 %v4672, %v5161
  %5163 = vmatmul.bf16.gmra.mxu0 %v5022
  %v5164 = vpop.f32.mrf.mxu0
  %v5165 = vadd.f32 %v4677, %v5164
  %v5166 = vpop.f32.mrf.mxu0
  %v5167 = vadd.f32 %v4682, %v5166
  %5168 = vmatmul.bf16.gmra.mxu0 %v5025
  %v5169 = vpop.f32.mrf.mxu0
  %v5170 = vadd.f32 %v4687, %v5169
  %v5171 = vpop.f32.mrf.mxu0
  %v5172 = vadd.f32 %v4692, %v5171
  %5173 = vmatmul.bf16.gmra.mxu0 %v5028
  %v5174 = vpop.f32.mrf.mxu0
  %v5175 = vadd.f32 %v4697, %v5174
  %v5176 = vpop.f32.mrf.mxu0
  %v5177 = vadd.f32 %v4702, %v5176
  %5178 = vmatmul.bf16.gmra.mxu0 %v5031
  %v5179 = vpop.f32.mrf.mxu0
  %v5180 = vadd.f32 %v4707, %v5179
  %v5181 = vpop.f32.mrf.mxu0
  %v5182 = vadd.f32 %v4712, %v5181
  %5183 = vmatmul.bf16.gmra.mxu0 %v5034
  %v5184 = vpop.f32.mrf.mxu0
  %v5185 = vadd.f32 %v4717, %v5184
  %v5186 = vpop.f32.mrf.mxu0
  %v5187 = vadd.f32 %v4722, %v5186
  %5188 = vmatmul.bf16.gmra.mxu0 %v5037
  %v5189 = vpop.f32.mrf.mxu0
  %v5190 = vadd.f32 %v4727, %v5189
  %v5191 = vpop.f32.mrf.mxu0
  %v5192 = vadd.f32 %v4732, %v5191
  %5193 = vmatmul.bf16.gmra.mxu0 %v5040
  %v5194 = vpop.f32.mrf.mxu0
  %v5195 = vadd.f32 %v4737, %v5194
  %v5196 = vpop.f32.mrf.mxu0
  %v5197 = vadd.f32 %v4742, %v5196
  %5198 = vmatmul.bf16.gmra.mxu0 %v5043
  %v5199 = vpop.f32.mrf.mxu0
  %v5200 = vadd.f32 %v4747, %v5199
  %v5201 = vpop.f32.mrf.mxu0
  %v5202 = vadd.f32 %v4752, %v5201
  %5203 = vmatmul.bf16.gmra.mxu0 %v5046
  %v5204 = vpop.f32.mrf.mxu0
  %v5205 = vadd.f32 %v4757, %v5204
  %v5206 = vpop.f32.mrf.mxu0
  %v5207 = vadd.f32 %v4762, %v5206
  %5208 = vmatmul.bf16.gmra.mxu0 %v5049
  %v5209 = vpop.f32.mrf.mxu0
  %v5210 = vadd.f32 %v4767, %v5209
  %v5211 = vpop.f32.mrf.mxu0
  %v5212 = vadd.f32 %v4772, %v5211
  %5213 = vmatmul.bf16.gmra.mxu0 %v5052
  %v5214 = vpop.f32.mrf.mxu0
  %v5215 = vadd.f32 %v4777, %v5214
  %v5216 = vpop.f32.mrf.mxu0
  %v5217 = vadd.f32 %v4782, %v5216
  %5218 = vmatmul.bf16.gmra.mxu0 %v5055
  %v5219 = vpop.f32.mrf.mxu0
  %v5220 = vadd.f32 %v4787, %v5219
  %v5221 = vpop.f32.mrf.mxu0
  %v5222 = vadd.f32 %v4792, %v5221
  %5223 = vmatmul.bf16.gmra.mxu0 %v5058
  %v5224 = vpop.f32.mrf.mxu0
  %v5225 = vadd.f32 %v4797, %v5224
  %v5226 = vpop.f32.mrf.mxu0
  %v5227 = vadd.f32 %v4802, %v5226
  %5228 = vdwg.mxu0
  %5229 = vmatpush.bf16.msra.mxu0 0
  %5230 = vmatpush.bf16.msra.mxu0 0
  %5231 = vmatpush.bf16.msra.mxu0 0
  %5232 = vmatpush.bf16.msra.mxu0 0
  %5233 = vmatpush.bf16.msra.mxu0 0
  %5234 = vmatpush.bf16.msra.mxu0 0
  %5235 = vmatpush.bf16.msra.mxu0 %v4417
  %5236 = vmatpush.bf16.msra.mxu0 %v4413
  %5237 = vmatmul.bf16.gmra.mxu0 %v4965
  %v5238 = vpop.f32.mrf.mxu0
  %v5239 = vadd.f32 %v4487, %v5238
  %v5240 = vpop.f32.mrf.mxu0
  %v5241 = vadd.f32 %v4492, %v5240
  %5242 = vmatmul.bf16.gmra.mxu0 %v4968
  %v5243 = vpop.f32.mrf.mxu0
  %v5244 = vadd.f32 %v4497, %v5243
  %v5245 = vpop.f32.mrf.mxu0
  %v5246 = vadd.f32 %v4502, %v5245
  %5247 = vmatmul.bf16.gmra.mxu0 %v4971
  %v5248 = vpop.f32.mrf.mxu0
  %v5249 = vadd.f32 %v4507, %v5248
  %v5250 = vpop.f32.mrf.mxu0
  %v5251 = vadd.f32 %v4512, %v5250
  %5252 = vmatmul.bf16.gmra.mxu0 %v4974
  %v5253 = vpop.f32.mrf.mxu0
  %v5254 = vadd.f32 %v4517, %v5253
  %v5255 = vpop.f32.mrf.mxu0
  %v5256 = vadd.f32 %v4522, %v5255
  %5257 = vmatmul.bf16.gmra.mxu0 %v4977
  %v5258 = vpop.f32.mrf.mxu0
  %v5259 = vadd.f32 %v4527, %v5258
  %v5260 = vpop.f32.mrf.mxu0
  %v5261 = vadd.f32 %v4532, %v5260
  %5262 = vmatmul.bf16.gmra.mxu0 %v4980
  %v5263 = vpop.f32.mrf.mxu0
  %v5264 = vadd.f32 %v4537, %v5263
  %v5265 = vpop.f32.mrf.mxu0
  %v5266 = vadd.f32 %v4542, %v5265
  %5267 = vmatmul.bf16.gmra.mxu0 %v4983
  %v5268 = vpop.f32.mrf.mxu0
  %v5269 = vadd.f32 %v4547, %v5268
  %v5270 = vpop.f32.mrf.mxu0
  %v5271 = vadd.f32 %v4552, %v5270
  %5272 = vmatmul.bf16.gmra.mxu0 %v4986
  %v5273 = vpop.f32.mrf.mxu0
  %v5274 = vadd.f32 %v4557, %v5273
  %v5275 = vpop.f32.mrf.mxu0
  %v5276 = vadd.f32 %v4562, %v5275
  %5277 = vmatmul.bf16.gmra.mxu0 %v4989
  %v5278 = vpop.f32.mrf.mxu0
  %v5279 = vadd.f32 %v4567, %v5278
  %v5280 = vpop.f32.mrf.mxu0
  %v5281 = vadd.f32 %v4572, %v5280
  %5282 = vmatmul.bf16.gmra.mxu0 %v4992
  %v5283 = vpop.f32.mrf.mxu0
  %v5284 = vadd.f32 %v4577, %v5283
  %v5285 = vpop.f32.mrf.mxu0
  %v5286 = vadd.f32 %v4582, %v5285
  %5287 = vmatmul.bf16.gmra.mxu0 %v4995
  %v5288 = vpop.f32.mrf.mxu0
  %v5289 = vadd.f32 %v4587, %v5288
  %v5290 = vpop.f32.mrf.mxu0
  %v5291 = vadd.f32 %v4592, %v5290
  %5292 = vmatmul.bf16.gmra.mxu0 %v4998
  %v5293 = vpop.f32.mrf.mxu0
  %v5294 = vadd.f32 %v4597, %v5293
  %v5295 = vpop.f32.mrf.mxu0
  %v5296 = vadd.f32 %v4602, %v5295
  %5297 = vmatmul.bf16.gmra.mxu0 %v5001
  %v5298 = vpop.f32.mrf.mxu0
  %v5299 = vadd.f32 %v4607, %v5298
  %v5300 = vpop.f32.mrf.mxu0
  %v5301 = vadd.f32 %v4612, %v5300
  %5302 = vmatmul.bf16.gmra.mxu0 %v5004
  %v5303 = vpop.f32.mrf.mxu0
  %v5304 = vadd.f32 %v4617, %v5303
  %v5305 = vpop.f32.mrf.mxu0
  %v5306 = vadd.f32 %v4622, %v5305
  %5307 = vmatmul.bf16.gmra.mxu0 %v5007
  %v5308 = vpop.f32.mrf.mxu0
  %v5309 = vadd.f32 %v4627, %v5308
  %v5310 = vpop.f32.mrf.mxu0
  %v5311 = vadd.f32 %v4632, %v5310
  %5312 = vmatmul.bf16.gmra.mxu0 %v5010
  %v5313 = vpop.f32.mrf.mxu0
  %v5314 = vadd.f32 %v4637, %v5313
  %v5315 = vpop.f32.mrf.mxu0
  %v5316 = vadd.f32 %v4642, %v5315
  %5317 = vmatmul.bf16.gmra.mxu0 %v5013
  %v5318 = vpop.f32.mrf.mxu0
  %v5319 = vadd.f32 %v4647, %v5318
  %v5320 = vpop.f32.mrf.mxu0
  %v5321 = vadd.f32 %v4652, %v5320
  %5322 = vmatmul.bf16.gmra.mxu0 %v5016
  %v5323 = vpop.f32.mrf.mxu0
  %v5324 = vadd.f32 %v4657, %v5323
  %v5325 = vpop.f32.mrf.mxu0
  %v5326 = vadd.f32 %v4662, %v5325
  %5327 = vmatmul.bf16.gmra.mxu0 %v5019
  %v5328 = vpop.f32.mrf.mxu0
  %v5329 = vadd.f32 %v4667, %v5328
  %v5330 = vpop.f32.mrf.mxu0
  %v5331 = vadd.f32 %v4672, %v5330
  %5332 = vmatmul.bf16.gmra.mxu0 %v5022
  %v5333 = vpop.f32.mrf.mxu0
  %v5334 = vadd.f32 %v4677, %v5333
  %v5335 = vpop.f32.mrf.mxu0
  %v5336 = vadd.f32 %v4682, %v5335
  %5337 = vmatmul.bf16.gmra.mxu0 %v5025
  %v5338 = vpop.f32.mrf.mxu0
  %v5339 = vadd.f32 %v4687, %v5338
  %v5340 = vpop.f32.mrf.mxu0
  %v5341 = vadd.f32 %v4692, %v5340
  %5342 = vmatmul.bf16.gmra.mxu0 %v5028
  %v5343 = vpop.f32.mrf.mxu0
  %v5344 = vadd.f32 %v4697, %v5343
  %v5345 = vpop.f32.mrf.mxu0
  %v5346 = vadd.f32 %v4702, %v5345
  %5347 = vmatmul.bf16.gmra.mxu0 %v5031
  %v5348 = vpop.f32.mrf.mxu0
  %v5349 = vadd.f32 %v4707, %v5348
  %v5350 = vpop.f32.mrf.mxu0
  %v5351 = vadd.f32 %v4712, %v5350
  %5352 = vmatmul.bf16.gmra.mxu0 %v5034
  %v5353 = vpop.f32.mrf.mxu0
  %v5354 = vadd.f32 %v4717, %v5353
  %v5355 = vpop.f32.mrf.mxu0
  %v5356 = vadd.f32 %v4722, %v5355
  %5357 = vmatmul.bf16.gmra.mxu0 %v5037
  %v5358 = vpop.f32.mrf.mxu0
  %v5359 = vadd.f32 %v4727, %v5358
  %v5360 = vpop.f32.mrf.mxu0
  %v5361 = vadd.f32 %v4732, %v5360
  %5362 = vmatmul.bf16.gmra.mxu0 %v5040
  %v5363 = vpop.f32.mrf.mxu0
  %v5364 = vadd.f32 %v4737, %v5363
  %v5365 = vpop.f32.mrf.mxu0
  %v5366 = vadd.f32 %v4742, %v5365
  %5367 = vmatmul.bf16.gmra.mxu0 %v5043
  %v5368 = vpop.f32.mrf.mxu0
  %v5369 = vadd.f32 %v4747, %v5368
  %v5370 = vpop.f32.mrf.mxu0
  %v5371 = vadd.f32 %v4752, %v5370
  %5372 = vmatmul.bf16.gmra.mxu0 %v5046
  %v5373 = vpop.f32.mrf.mxu0
  %v5374 = vadd.f32 %v4757, %v5373
  %v5375 = vpop.f32.mrf.mxu0
  %v5376 = vadd.f32 %v4762, %v5375
  %5377 = vmatmul.bf16.gmra.mxu0 %v5049
  %v5378 = vpop.f32.mrf.mxu0
  %v5379 = vadd.f32 %v4767, %v5378
  %v5380 = vpop.f32.mrf.mxu0
  %v5381 = vadd.f32 %v4772, %v5380
  %5382 = vmatmul.bf16.gmra.mxu0 %v5052
  %v5383 = vpop.f32.mrf.mxu0
  %v5384 = vadd.f32 %v4777, %v5383
  %v5385 = vpop.f32.mrf.mxu0
  %v5386 = vadd.f32 %v4782, %v5385
  %5387 = vmatmul.bf16.gmra.mxu0 %v5055
  %v5388 = vpop.f32.mrf.mxu0
  %v5389 = vadd.f32 %v4787, %v5388
  %v5390 = vpop.f32.mrf.mxu0
  %v5391 = vadd.f32 %v4792, %v5390
  %5392 = vmatmul.bf16.gmra.mxu0 %v5058
  %v5393 = vpop.f32.mrf.mxu0
  %v5394 = vadd.f32 %v4797, %v5393
  %v5395 = vpop.f32.mrf.mxu0
  %v5396 = vadd.f32 %v4802, %v5395
  %5397 = vdwg.mxu0
  %5398 = vmatpush.bf16.msra.mxu0 0
  %5399 = vmatpush.bf16.msra.mxu0 0
  %5400 = vmatpush.bf16.msra.mxu0 0
  %5401 = vmatpush.bf16.msra.mxu0 0
  %5402 = vmatpush.bf16.msra.mxu0 0
  %5403 = vmatpush.bf16.msra.mxu0 0
  %5404 = vmatpush.bf16.msra.mxu0 %v4418
  %5405 = vmatpush.bf16.msra.mxu0 %v4414
  %5406 = vmatmul.bf16.gmra.mxu0 %v4965
  %v5407 = vpop.f32.mrf.mxu0
  %v5408 = vadd.f32 %v4487, %v5407
  %v5409 = vpop.f32.mrf.mxu0
  %v5410 = vadd.f32 %v4492, %v5409
  %5411 = vmatmul.bf16.gmra.mxu0 %v4968
  %v5412 = vpop.f32.mrf.mxu0
  %v5413 = vadd.f32 %v4497, %v5412
  %v5414 = vpop.f32.mrf.mxu0
  %v5415 = vadd.f32 %v4502, %v5414
  %5416 = vmatmul.bf16.gmra.mxu0 %v4971
  %v5417 = vpop.f32.mrf.mxu0
  %v5418 = vadd.f32 %v4507, %v5417
  %v5419 = vpop.f32.mrf.mxu0
  %v5420 = vadd.f32 %v4512, %v5419
  %5421 = vmatmul.bf16.gmra.mxu0 %v4974
  %v5422 = vpop.f32.mrf.mxu0
  %v5423 = vadd.f32 %v4517, %v5422
  %v5424 = vpop.f32.mrf.mxu0
  %v5425 = vadd.f32 %v4522, %v5424
  %5426 = vmatmul.bf16.gmra.mxu0 %v4977
  %v5427 = vpop.f32.mrf.mxu0
  %v5428 = vadd.f32 %v4527, %v5427
  %v5429 = vpop.f32.mrf.mxu0
  %v5430 = vadd.f32 %v4532, %v5429
  %5431 = vmatmul.bf16.gmra.mxu0 %v4980
  %v5432 = vpop.f32.mrf.mxu0
  %v5433 = vadd.f32 %v4537, %v5432
  %v5434 = vpop.f32.mrf.mxu0
  %v5435 = vadd.f32 %v4542, %v5434
  %5436 = vmatmul.bf16.gmra.mxu0 %v4983
  %v5437 = vpop.f32.mrf.mxu0
  %v5438 = vadd.f32 %v4547, %v5437
  %v5439 = vpop.f32.mrf.mxu0
  %v5440 = vadd.f32 %v4552, %v5439
  %5441 = vmatmul.bf16.gmra.mxu0 %v4986
  %v5442 = vpop.f32.mrf.mxu0
  %v5443 = vadd.f32 %v4557, %v5442
  %v5444 = vpop.f32.mrf.mxu0
  %v5445 = vadd.f32 %v4562, %v5444
  %5446 = vmatmul.bf16.gmra.mxu0 %v4989
  %v5447 = vpop.f32.mrf.mxu0
  %v5448 = vadd.f32 %v4567, %v5447
  %v5449 = vpop.f32.mrf.mxu0
  %v5450 = vadd.f32 %v4572, %v5449
  %5451 = vmatmul.bf16.gmra.mxu0 %v4992
  %v5452 = vpop.f32.mrf.mxu0
  %v5453 = vadd.f32 %v4577, %v5452
  %v5454 = vpop.f32.mrf.mxu0
  %v5455 = vadd.f32 %v4582, %v5454
  %5456 = vmatmul.bf16.gmra.mxu0 %v4995
  %v5457 = vpop.f32.mrf.mxu0
  %v5458 = vadd.f32 %v4587, %v5457
  %v5459 = vpop.f32.mrf.mxu0
  %v5460 = vadd.f32 %v4592, %v5459
  %5461 = vmatmul.bf16.gmra.mxu0 %v4998
  %v5462 = vpop.f32.mrf.mxu0
  %v5463 = vadd.f32 %v4597, %v5462
  %v5464 = vpop.f32.mrf.mxu0
  %v5465 = vadd.f32 %v4602, %v5464
  %5466 = vmatmul.bf16.gmra.mxu0 %v5001
  %v5467 = vpop.f32.mrf.mxu0
  %v5468 = vadd.f32 %v4607, %v5467
  %v5469 = vpop.f32.mrf.mxu0
  %v5470 = vadd.f32 %v4612, %v5469
  %5471 = vmatmul.bf16.gmra.mxu0 %v5004
  %v5472 = vpop.f32.mrf.mxu0
  %v5473 = vadd.f32 %v4617, %v5472
  %v5474 = vpop.f32.mrf.mxu0
  %v5475 = vadd.f32 %v4622, %v5474
  %5476 = vmatmul.bf16.gmra.mxu0 %v5007
  %v5477 = vpop.f32.mrf.mxu0
  %v5478 = vadd.f32 %v4627, %v5477
  %v5479 = vpop.f32.mrf.mxu0
  %v5480 = vadd.f32 %v4632, %v5479
  %5481 = vmatmul.bf16.gmra.mxu0 %v5010
  %v5482 = vpop.f32.mrf.mxu0
  %v5483 = vadd.f32 %v4637, %v5482
  %v5484 = vpop.f32.mrf.mxu0
  %v5485 = vadd.f32 %v4642, %v5484
  %5486 = vmatmul.bf16.gmra.mxu0 %v5013
  %v5487 = vpop.f32.mrf.mxu0
  %v5488 = vadd.f32 %v4647, %v5487
  %v5489 = vpop.f32.mrf.mxu0
  %v5490 = vadd.f32 %v4652, %v5489
  %5491 = vmatmul.bf16.gmra.mxu0 %v5016
  %v5492 = vpop.f32.mrf.mxu0
  %v5493 = vadd.f32 %v4657, %v5492
  %v5494 = vpop.f32.mrf.mxu0
  %v5495 = vadd.f32 %v4662, %v5494
  %5496 = vmatmul.bf16.gmra.mxu0 %v5019
  %v5497 = vpop.f32.mrf.mxu0
  %v5498 = vadd.f32 %v4667, %v5497
  %v5499 = vpop.f32.mrf.mxu0
  %v5500 = vadd.f32 %v4672, %v5499
  %5501 = vmatmul.bf16.gmra.mxu0 %v5022
  %v5502 = vpop.f32.mrf.mxu0
  %v5503 = vadd.f32 %v4677, %v5502
  %v5504 = vpop.f32.mrf.mxu0
  %v5505 = vadd.f32 %v4682, %v5504
  %5506 = vmatmul.bf16.gmra.mxu0 %v5025
  %v5507 = vpop.f32.mrf.mxu0
  %v5508 = vadd.f32 %v4687, %v5507
  %v5509 = vpop.f32.mrf.mxu0
  %v5510 = vadd.f32 %v4692, %v5509
  %5511 = vmatmul.bf16.gmra.mxu0 %v5028
  %v5512 = vpop.f32.mrf.mxu0
  %v5513 = vadd.f32 %v4697, %v5512
  %v5514 = vpop.f32.mrf.mxu0
  %v5515 = vadd.f32 %v4702, %v5514
  %5516 = vmatmul.bf16.gmra.mxu0 %v5031
  %v5517 = vpop.f32.mrf.mxu0
  %v5518 = vadd.f32 %v4707, %v5517
  %v5519 = vpop.f32.mrf.mxu0
  %v5520 = vadd.f32 %v4712, %v5519
  %5521 = vmatmul.bf16.gmra.mxu0 %v5034
  %v5522 = vpop.f32.mrf.mxu0
  %v5523 = vadd.f32 %v4717, %v5522
  %v5524 = vpop.f32.mrf.mxu0
  %v5525 = vadd.f32 %v4722, %v5524
  %5526 = vmatmul.bf16.gmra.mxu0 %v5037
  %v5527 = vpop.f32.mrf.mxu0
  %v5528 = vadd.f32 %v4727, %v5527
  %v5529 = vpop.f32.mrf.mxu0
  %v5530 = vadd.f32 %v4732, %v5529
  %5531 = vmatmul.bf16.gmra.mxu0 %v5040
  %v5532 = vpop.f32.mrf.mxu0
  %v5533 = vadd.f32 %v4737, %v5532
  %v5534 = vpop.f32.mrf.mxu0
  %v5535 = vadd.f32 %v4742, %v5534
  %5536 = vmatmul.bf16.gmra.mxu0 %v5043
  %v5537 = vpop.f32.mrf.mxu0
  %v5538 = vadd.f32 %v4747, %v5537
  %v5539 = vpop.f32.mrf.mxu0
  %v5540 = vadd.f32 %v4752, %v5539
  %5541 = vmatmul.bf16.gmra.mxu0 %v5046
  %v5542 = vpop.f32.mrf.mxu0
  %v5543 = vadd.f32 %v4757, %v5542
  %v5544 = vpop.f32.mrf.mxu0
  %v5545 = vadd.f32 %v4762, %v5544
  %5546 = vmatmul.bf16.gmra.mxu0 %v5049
  %v5547 = vpop.f32.mrf.mxu0
  %v5548 = vadd.f32 %v4767, %v5547
  %v5549 = vpop.f32.mrf.mxu0
  %v5550 = vadd.f32 %v4772, %v5549
  %5551 = vmatmul.bf16.gmra.mxu0 %v5052
  %v5552 = vpop.f32.mrf.mxu0
  %v5553 = vadd.f32 %v4777, %v5552
  %v5554 = vpop.f32.mrf.mxu0
  %v5555 = vadd.f32 %v4782, %v5554
  %5556 = vmatmul.bf16.gmra.mxu0 %v5055
  %v5557 = vpop.f32.mrf.mxu0
  %v5558 = vadd.f32 %v4787, %v5557
  %v5559 = vpop.f32.mrf.mxu0
  %v5560 = vadd.f32 %v4792, %v5559
  %5561 = vmatmul.bf16.gmra.mxu0 %v5058
  %v5562 = vpop.f32.mrf.mxu0
  %v5563 = vadd.f32 %v4797, %v5562
  %v5564 = vpop.f32.mrf.mxu0
  %v5565 = vadd.f32 %v4802, %v5564
  %5566 = vdwg.mxu0
  %5567 = vmatpush.bf16.msra.mxu0 0
  %5568 = vmatpush.bf16.msra.mxu0 0
  %5569 = vmatpush.bf16.msra.mxu0 0
  %5570 = vmatpush.bf16.msra.mxu0 0
  %5571 = vmatpush.bf16.msra.mxu0 0
  %5572 = vmatpush.bf16.msra.mxu0 0
  %5573 = vmatpush.bf16.msra.mxu0 %v4419
  %5574 = vmatpush.bf16.msra.mxu0 %v4415
  %5575 = vmatmul.bf16.gmra.mxu0 %v4965
  %v5576 = vpop.f32.mrf.mxu0
  %v5577 = vadd.f32 %v4487, %v5576
  %v5578 = vpop.f32.mrf.mxu0
  %v5579 = vadd.f32 %v4492, %v5578
  %5580 = vmatmul.bf16.gmra.mxu0 %v4968
  %v5581 = vpop.f32.mrf.mxu0
  %v5582 = vadd.f32 %v4497, %v5581
  %v5583 = vpop.f32.mrf.mxu0
  %v5584 = vadd.f32 %v4502, %v5583
  %5585 = vmatmul.bf16.gmra.mxu0 %v4971
  %v5586 = vpop.f32.mrf.mxu0
  %v5587 = vadd.f32 %v4507, %v5586
  %v5588 = vpop.f32.mrf.mxu0
  %v5589 = vadd.f32 %v4512, %v5588
  %5590 = vmatmul.bf16.gmra.mxu0 %v4974
  %v5591 = vpop.f32.mrf.mxu0
  %v5592 = vadd.f32 %v4517, %v5591
  %v5593 = vpop.f32.mrf.mxu0
  %v5594 = vadd.f32 %v4522, %v5593
  %5595 = vmatmul.bf16.gmra.mxu0 %v4977
  %v5596 = vpop.f32.mrf.mxu0
  %v5597 = vadd.f32 %v4527, %v5596
  %v5598 = vpop.f32.mrf.mxu0
  %v5599 = vadd.f32 %v4532, %v5598
  %5600 = vmatmul.bf16.gmra.mxu0 %v4980
  %v5601 = vpop.f32.mrf.mxu0
  %v5602 = vadd.f32 %v4537, %v5601
  %v5603 = vpop.f32.mrf.mxu0
  %v5604 = vadd.f32 %v4542, %v5603
  %5605 = vmatmul.bf16.gmra.mxu0 %v4983
  %v5606 = vpop.f32.mrf.mxu0
  %v5607 = vadd.f32 %v4547, %v5606
  %v5608 = vpop.f32.mrf.mxu0
  %v5609 = vadd.f32 %v4552, %v5608
  %5610 = vmatmul.bf16.gmra.mxu0 %v4986
  %v5611 = vpop.f32.mrf.mxu0
  %v5612 = vadd.f32 %v4557, %v5611
  %v5613 = vpop.f32.mrf.mxu0
  %v5614 = vadd.f32 %v4562, %v5613
  %5615 = vmatmul.bf16.gmra.mxu0 %v4989
  %v5616 = vpop.f32.mrf.mxu0
  %v5617 = vadd.f32 %v4567, %v5616
  %v5618 = vpop.f32.mrf.mxu0
  %v5619 = vadd.f32 %v4572, %v5618
  %5620 = vmatmul.bf16.gmra.mxu0 %v4992
  %v5621 = vpop.f32.mrf.mxu0
  %v5622 = vadd.f32 %v4577, %v5621
  %v5623 = vpop.f32.mrf.mxu0
  %v5624 = vadd.f32 %v4582, %v5623
  %5625 = vmatmul.bf16.gmra.mxu0 %v4995
  %v5626 = vpop.f32.mrf.mxu0
  %v5627 = vadd.f32 %v4587, %v5626
  %v5628 = vpop.f32.mrf.mxu0
  %v5629 = vadd.f32 %v4592, %v5628
  %5630 = vmatmul.bf16.gmra.mxu0 %v4998
  %v5631 = vpop.f32.mrf.mxu0
  %v5632 = vadd.f32 %v4597, %v5631
  %v5633 = vpop.f32.mrf.mxu0
  %v5634 = vadd.f32 %v4602, %v5633
  %5635 = vmatmul.bf16.gmra.mxu0 %v5001
  %v5636 = vpop.f32.mrf.mxu0
  %v5637 = vadd.f32 %v4607, %v5636
  %v5638 = vpop.f32.mrf.mxu0
  %v5639 = vadd.f32 %v4612, %v5638
  %5640 = vmatmul.bf16.gmra.mxu0 %v5004
  %v5641 = vpop.f32.mrf.mxu0
  %v5642 = vadd.f32 %v4617, %v5641
  %v5643 = vpop.f32.mrf.mxu0
  %v5644 = vadd.f32 %v4622, %v5643
  %5645 = vmatmul.bf16.gmra.mxu0 %v5007
  %v5646 = vpop.f32.mrf.mxu0
  %v5647 = vadd.f32 %v4627, %v5646
  %v5648 = vpop.f32.mrf.mxu0
  %v5649 = vadd.f32 %v4632, %v5648
  %5650 = vmatmul.bf16.gmra.mxu0 %v5010
  %v5651 = vpop.f32.mrf.mxu0
  %v5652 = vadd.f32 %v4637, %v5651
  %v5653 = vpop.f32.mrf.mxu0
  %v5654 = vadd.f32 %v4642, %v5653
  %5655 = vmatmul.bf16.gmra.mxu0 %v5013
  %v5656 = vpop.f32.mrf.mxu0
  %v5657 = vadd.f32 %v4647, %v5656
  %v5658 = vpop.f32.mrf.mxu0
  %v5659 = vadd.f32 %v4652, %v5658
  %5660 = vmatmul.bf16.gmra.mxu0 %v5016
  %v5661 = vpop.f32.mrf.mxu0
  %v5662 = vadd.f32 %v4657, %v5661
  %v5663 = vpop.f32.mrf.mxu0
  %v5664 = vadd.f32 %v4662, %v5663
  %5665 = vmatmul.bf16.gmra.mxu0 %v5019
  %v5666 = vpop.f32.mrf.mxu0
  %v5667 = vadd.f32 %v4667, %v5666
  %v5668 = vpop.f32.mrf.mxu0
  %v5669 = vadd.f32 %v4672, %v5668
  %5670 = vmatmul.bf16.gmra.mxu0 %v5022
  %v5671 = vpop.f32.mrf.mxu0
  %v5672 = vadd.f32 %v4677, %v5671
  %v5673 = vpop.f32.mrf.mxu0
  %v5674 = vadd.f32 %v4682, %v5673
  %5675 = vmatmul.bf16.gmra.mxu0 %v5025
  %v5676 = vpop.f32.mrf.mxu0
  %v5677 = vadd.f32 %v4687, %v5676
  %v5678 = vpop.f32.mrf.mxu0
  %v5679 = vadd.f32 %v4692, %v5678
  %5680 = vmatmul.bf16.gmra.mxu0 %v5028
  %v5681 = vpop.f32.mrf.mxu0
  %v5682 = vadd.f32 %v4697, %v5681
  %v5683 = vpop.f32.mrf.mxu0
  %v5684 = vadd.f32 %v4702, %v5683
  %5685 = vmatmul.bf16.gmra.mxu0 %v5031
  %v5686 = vpop.f32.mrf.mxu0
  %v5687 = vadd.f32 %v4707, %v5686
  %v5688 = vpop.f32.mrf.mxu0
  %v5689 = vadd.f32 %v4712, %v5688
  %5690 = vmatmul.bf16.gmra.mxu0 %v5034
  %v5691 = vpop.f32.mrf.mxu0
  %v5692 = vadd.f32 %v4717, %v5691
  %v5693 = vpop.f32.mrf.mxu0
  %v5694 = vadd.f32 %v4722, %v5693
  %5695 = vmatmul.bf16.gmra.mxu0 %v5037
  %v5696 = vpop.f32.mrf.mxu0
  %v5697 = vadd.f32 %v4727, %v5696
  %v5698 = vpop.f32.mrf.mxu0
  %v5699 = vadd.f32 %v4732, %v5698
  %5700 = vmatmul.bf16.gmra.mxu0 %v5040
  %v5701 = vpop.f32.mrf.mxu0
  %v5702 = vadd.f32 %v4737, %v5701
  %v5703 = vpop.f32.mrf.mxu0
  %v5704 = vadd.f32 %v4742, %v5703
  %5705 = vmatmul.bf16.gmra.mxu0 %v5043
  %v5706 = vpop.f32.mrf.mxu0
  %v5707 = vadd.f32 %v4747, %v5706
  %v5708 = vpop.f32.mrf.mxu0
  %v5709 = vadd.f32 %v4752, %v5708
  %5710 = vmatmul.bf16.gmra.mxu0 %v5046
  %v5711 = vpop.f32.mrf.mxu0
  %v5712 = vadd.f32 %v4757, %v5711
  %v5713 = vpop.f32.mrf.mxu0
  %v5714 = vadd.f32 %v4762, %v5713
  %5715 = vmatmul.bf16.gmra.mxu0 %v5049
  %v5716 = vpop.f32.mrf.mxu0
  %v5717 = vadd.f32 %v4767, %v5716
  %v5718 = vpop.f32.mrf.mxu0
  %v5719 = vadd.f32 %v4772, %v5718
  %5720 = vmatmul.bf16.gmra.mxu0 %v5052
  %v5721 = vpop.f32.mrf.mxu0
  %v5722 = vadd.f32 %v4777, %v5721
  %v5723 = vpop.f32.mrf.mxu0
  %v5724 = vadd.f32 %v4782, %v5723
  %5725 = vmatmul.bf16.gmra.mxu0 %v5055
  %v5726 = vpop.f32.mrf.mxu0
  %v5727 = vadd.f32 %v4787, %v5726
  %v5728 = vpop.f32.mrf.mxu0
  %v5729 = vadd.f32 %v4792, %v5728
  %5730 = vmatmul.bf16.gmra.mxu0 %v5058
  %v5731 = vpop.f32.mrf.mxu0
  %v5732 = vadd.f32 %v4797, %v5731
  %v5733 = vpop.f32.mrf.mxu0
  %v5734 = vadd.f32 %v4802, %v5733
  %5735 = vdwg.mxu0
  %v5736 = vmax.f32 %v5070, 0.0
  %v5737 = vmax.f32 %v5239, 0.0
  %v5738 = vmax.f32 %v5408, 0.0
  %v5739 = vmax.f32 %v5577, 0.0
  %v5740 = vmax.f32 %v5072, 0.0
  %v5741 = vmax.f32 %v5241, 0.0
  %v5742 = vmax.f32 %v5410, 0.0
  %v5743 = vmax.f32 %v5579, 0.0
  %v5744 = vmax.f32 %v5075, 0.0
  %v5745 = vmax.f32 %v5244, 0.0
  %v5746 = vmax.f32 %v5413, 0.0
  %v5747 = vmax.f32 %v5582, 0.0
  %v5748 = vmax.f32 %v5077, 0.0
  %v5749 = vmax.f32 %v5246, 0.0
  %v5750 = vmax.f32 %v5415, 0.0
  %v5751 = vmax.f32 %v5584, 0.0
  %v5752 = vmax.f32 %v5080, 0.0
  %v5753 = vmax.f32 %v5249, 0.0
  %v5754 = vmax.f32 %v5418, 0.0
  %v5755 = vmax.f32 %v5587, 0.0
  %v5756 = vmax.f32 %v5082, 0.0
  %v5757 = vmax.f32 %v5251, 0.0
  %v5758 = vmax.f32 %v5420, 0.0
  %v5759 = vmax.f32 %v5589, 0.0
  %v5760 = vmax.f32 %v5085, 0.0
  %v5761 = vmax.f32 %v5254, 0.0
  %v5762 = vmax.f32 %v5423, 0.0
  %v5763 = vmax.f32 %v5592, 0.0
  %v5764 = vmax.f32 %v5087, 0.0
  %v5765 = vmax.f32 %v5256, 0.0
  %v5766 = vmax.f32 %v5425, 0.0
  %v5767 = vmax.f32 %v5594, 0.0
  %v5768 = vmax.f32 %v5090, 0.0
  %v5769 = vmax.f32 %v5259, 0.0
  %v5770 = vmax.f32 %v5428, 0.0
  %v5771 = vmax.f32 %v5597, 0.0
  %v5772 = vmax.f32 %v5092, 0.0
  %v5773 = vmax.f32 %v5261, 0.0
  %v5774 = vmax.f32 %v5430, 0.0
  %v5775 = vmax.f32 %v5599, 0.0
  %v5776 = vmax.f32 %v5095, 0.0
  %v5777 = vmax.f32 %v5264, 0.0
  %v5778 = vmax.f32 %v5433, 0.0
  %v5779 = vmax.f32 %v5602, 0.0
  %v5780 = vmax.f32 %v5097, 0.0
  %v5781 = vmax.f32 %v5266, 0.0
  %v5782 = vmax.f32 %v5435, 0.0
  %v5783 = vmax.f32 %v5604, 0.0
  %v5784 = vmax.f32 %v5100, 0.0
  %v5785 = vmax.f32 %v5269, 0.0
  %v5786 = vmax.f32 %v5438, 0.0
  %v5787 = vmax.f32 %v5607, 0.0
  %v5788 = vmax.f32 %v5102, 0.0
  %v5789 = vmax.f32 %v5271, 0.0
  %v5790 = vmax.f32 %v5440, 0.0
  %v5791 = vmax.f32 %v5609, 0.0
  %v5792 = vmax.f32 %v5105, 0.0
  %v5793 = vmax.f32 %v5274, 0.0
  %v5794 = vmax.f32 %v5443, 0.0
  %v5795 = vmax.f32 %v5612, 0.0
  %v5796 = vmax.f32 %v5107, 0.0
  %v5797 = vmax.f32 %v5276, 0.0
  %v5798 = vmax.f32 %v5445, 0.0
  %v5799 = vmax.f32 %v5614, 0.0
  %v5800 = vmax.f32 %v5110, 0.0
  %v5801 = vmax.f32 %v5279, 0.0
  %v5802 = vmax.f32 %v5448, 0.0
  %v5803 = vmax.f32 %v5617, 0.0
  %v5804 = vmax.f32 %v5112, 0.0
  %v5805 = vmax.f32 %v5281, 0.0
  %v5806 = vmax.f32 %v5450, 0.0
  %v5807 = vmax.f32 %v5619, 0.0
  %v5808 = vmax.f32 %v5115, 0.0
  %v5809 = vmax.f32 %v5284, 0.0
  %v5810 = vmax.f32 %v5453, 0.0
  %v5811 = vmax.f32 %v5622, 0.0
  %v5812 = vmax.f32 %v5117, 0.0
  %v5813 = vmax.f32 %v5286, 0.0
  %v5814 = vmax.f32 %v5455, 0.0
  %v5815 = vmax.f32 %v5624, 0.0
  %v5816 = vmax.f32 %v5120, 0.0
  %v5817 = vmax.f32 %v5289, 0.0
  %v5818 = vmax.f32 %v5458, 0.0
  %v5819 = vmax.f32 %v5627, 0.0
  %v5820 = vmax.f32 %v5122, 0.0
  %v5821 = vmax.f32 %v5291, 0.0
  %v5822 = vmax.f32 %v5460, 0.0
  %v5823 = vmax.f32 %v5629, 0.0
  %v5824 = vmax.f32 %v5125, 0.0
  %v5825 = vmax.f32 %v5294, 0.0
  %v5826 = vmax.f32 %v5463, 0.0
  %v5827 = vmax.f32 %v5632, 0.0
  %v5828 = vmax.f32 %v5127, 0.0
  %v5829 = vmax.f32 %v5296, 0.0
  %v5830 = vmax.f32 %v5465, 0.0
  %v5831 = vmax.f32 %v5634, 0.0
  %v5832 = vmax.f32 %v5130, 0.0
  %v5833 = vmax.f32 %v5299, 0.0
  %v5834 = vmax.f32 %v5468, 0.0
  %v5835 = vmax.f32 %v5637, 0.0
  %v5836 = vmax.f32 %v5132, 0.0
  %v5837 = vmax.f32 %v5301, 0.0
  %v5838 = vmax.f32 %v5470, 0.0
  %v5839 = vmax.f32 %v5639, 0.0
  %v5840 = vmax.f32 %v5135, 0.0
  %v5841 = vmax.f32 %v5304, 0.0
  %v5842 = vmax.f32 %v5473, 0.0
  %v5843 = vmax.f32 %v5642, 0.0
  %v5844 = vmax.f32 %v5137, 0.0
  %v5845 = vmax.f32 %v5306, 0.0
  %v5846 = vmax.f32 %v5475, 0.0
  %v5847 = vmax.f32 %v5644, 0.0
  %v5848 = vmax.f32 %v5140, 0.0
  %v5849 = vmax.f32 %v5309, 0.0
  %v5850 = vmax.f32 %v5478, 0.0
  %v5851 = vmax.f32 %v5647, 0.0
  %v5852 = vmax.f32 %v5142, 0.0
  %v5853 = vmax.f32 %v5311, 0.0
  %v5854 = vmax.f32 %v5480, 0.0
  %v5855 = vmax.f32 %v5649, 0.0
  %v5856 = vmax.f32 %v5145, 0.0
  %v5857 = vmax.f32 %v5314, 0.0
  %v5858 = vmax.f32 %v5483, 0.0
  %v5859 = vmax.f32 %v5652, 0.0
  %v5860 = vmax.f32 %v5147, 0.0
  %v5861 = vmax.f32 %v5316, 0.0
  %v5862 = vmax.f32 %v5485, 0.0
  %v5863 = vmax.f32 %v5654, 0.0
  %v5864 = vmax.f32 %v5150, 0.0
  %v5865 = vmax.f32 %v5319, 0.0
  %v5866 = vmax.f32 %v5488, 0.0
  %v5867 = vmax.f32 %v5657, 0.0
  %v5868 = vmax.f32 %v5152, 0.0
  %v5869 = vmax.f32 %v5321, 0.0
  %v5870 = vmax.f32 %v5490, 0.0
  %v5871 = vmax.f32 %v5659, 0.0
  %v5872 = vmax.f32 %v5155, 0.0
  %v5873 = vmax.f32 %v5324, 0.0
  %v5874 = vmax.f32 %v5493, 0.0
  %v5875 = vmax.f32 %v5662, 0.0
  %v5876 = vmax.f32 %v5157, 0.0
  %v5877 = vmax.f32 %v5326, 0.0
  %v5878 = vmax.f32 %v5495, 0.0
  %v5879 = vmax.f32 %v5664, 0.0
  %v5880 = vmax.f32 %v5160, 0.0
  %v5881 = vmax.f32 %v5329, 0.0
  %v5882 = vmax.f32 %v5498, 0.0
  %v5883 = vmax.f32 %v5667, 0.0
  %v5884 = vmax.f32 %v5162, 0.0
  %v5885 = vmax.f32 %v5331, 0.0
  %v5886 = vmax.f32 %v5500, 0.0
  %v5887 = vmax.f32 %v5669, 0.0
  %v5888 = vmax.f32 %v5165, 0.0
  %v5889 = vmax.f32 %v5334, 0.0
  %v5890 = vmax.f32 %v5503, 0.0
  %v5891 = vmax.f32 %v5672, 0.0
  %v5892 = vmax.f32 %v5167, 0.0
  %v5893 = vmax.f32 %v5336, 0.0
  %v5894 = vmax.f32 %v5505, 0.0
  %v5895 = vmax.f32 %v5674, 0.0
  %v5896 = vmax.f32 %v5170, 0.0
  %v5897 = vmax.f32 %v5339, 0.0
  %v5898 = vmax.f32 %v5508, 0.0
  %v5899 = vmax.f32 %v5677, 0.0
  %v5900 = vmax.f32 %v5172, 0.0
  %v5901 = vmax.f32 %v5341, 0.0
  %v5902 = vmax.f32 %v5510, 0.0
  %v5903 = vmax.f32 %v5679, 0.0
  %v5904 = vmax.f32 %v5175, 0.0
  %v5905 = vmax.f32 %v5344, 0.0
  %v5906 = vmax.f32 %v5513, 0.0
  %v5907 = vmax.f32 %v5682, 0.0
  %v5908 = vmax.f32 %v5177, 0.0
  %v5909 = vmax.f32 %v5346, 0.0
  %v5910 = vmax.f32 %v5515, 0.0
  %v5911 = vmax.f32 %v5684, 0.0
  %v5912 = vmax.f32 %v5180, 0.0
  %v5913 = vmax.f32 %v5349, 0.0
  %v5914 = vmax.f32 %v5518, 0.0
  %v5915 = vmax.f32 %v5687, 0.0
  %v5916 = vmax.f32 %v5182, 0.0
  %v5917 = vmax.f32 %v5351, 0.0
  %v5918 = vmax.f32 %v5520, 0.0
  %v5919 = vmax.f32 %v5689, 0.0
  %v5920 = vmax.f32 %v5185, 0.0
  %v5921 = vmax.f32 %v5354, 0.0
  %v5922 = vmax.f32 %v5523, 0.0
  %v5923 = vmax.f32 %v5692, 0.0
  %v5924 = vmax.f32 %v5187, 0.0
  %v5925 = vmax.f32 %v5356, 0.0
  %v5926 = vmax.f32 %v5525, 0.0
  %v5927 = vmax.f32 %v5694, 0.0
  %v5928 = vmax.f32 %v5190, 0.0
  %v5929 = vmax.f32 %v5359, 0.0
  %v5930 = vmax.f32 %v5528, 0.0
  %v5931 = vmax.f32 %v5697, 0.0
  %v5932 = vmax.f32 %v5192, 0.0
  %v5933 = vmax.f32 %v5361, 0.0
  %v5934 = vmax.f32 %v5530, 0.0
  %v5935 = vmax.f32 %v5699, 0.0
  %v5936 = vmax.f32 %v5195, 0.0
  %v5937 = vmax.f32 %v5364, 0.0
  %v5938 = vmax.f32 %v5533, 0.0
  %v5939 = vmax.f32 %v5702, 0.0
  %v5940 = vmax.f32 %v5197, 0.0
  %v5941 = vmax.f32 %v5366, 0.0
  %v5942 = vmax.f32 %v5535, 0.0
  %v5943 = vmax.f32 %v5704, 0.0
  %v5944 = vmax.f32 %v5200, 0.0
  %v5945 = vmax.f32 %v5369, 0.0
  %v5946 = vmax.f32 %v5538, 0.0
  %v5947 = vmax.f32 %v5707, 0.0
  %v5948 = vmax.f32 %v5202, 0.0
  %v5949 = vmax.f32 %v5371, 0.0
  %v5950 = vmax.f32 %v5540, 0.0
  %v5951 = vmax.f32 %v5709, 0.0
  %v5952 = vmax.f32 %v5205, 0.0
  %v5953 = vmax.f32 %v5374, 0.0
  %v5954 = vmax.f32 %v5543, 0.0
  %v5955 = vmax.f32 %v5712, 0.0
  %v5956 = vmax.f32 %v5207, 0.0
  %v5957 = vmax.f32 %v5376, 0.0
  %v5958 = vmax.f32 %v5545, 0.0
  %v5959 = vmax.f32 %v5714, 0.0
  %v5960 = vmax.f32 %v5210, 0.0
  %v5961 = vmax.f32 %v5379, 0.0
  %v5962 = vmax.f32 %v5548, 0.0
  %v5963 = vmax.f32 %v5717, 0.0
  %v5964 = vmax.f32 %v5212, 0.0
  %v5965 = vmax.f32 %v5381, 0.0
  %v5966 = vmax.f32 %v5550, 0.0
  %v5967 = vmax.f32 %v5719, 0.0
  %v5968 = vmax.f32 %v5215, 0.0
  %v5969 = vmax.f32 %v5384, 0.0
  %v5970 = vmax.f32 %v5553, 0.0
  %v5971 = vmax.f32 %v5722, 0.0
  %v5972 = vmax.f32 %v5217, 0.0
  %v5973 = vmax.f32 %v5386, 0.0
  %v5974 = vmax.f32 %v5555, 0.0
  %v5975 = vmax.f32 %v5724, 0.0
  %v5976 = vmax.f32 %v5220, 0.0
  %v5977 = vmax.f32 %v5389, 0.0
  %v5978 = vmax.f32 %v5558, 0.0
  %v5979 = vmax.f32 %v5727, 0.0
  %v5980 = vmax.f32 %v5222, 0.0
  %v5981 = vmax.f32 %v5391, 0.0
  %v5982 = vmax.f32 %v5560, 0.0
  %v5983 = vmax.f32 %v5729, 0.0
  %v5984 = vmax.f32 %v5225, 0.0
  %v5985 = vmax.f32 %v5394, 0.0
  %v5986 = vmax.f32 %v5563, 0.0
  %v5987 = vmax.f32 %v5732, 0.0
  %v5988 = vmax.f32 %v5227, 0.0
  %v5989 = vmax.f32 %v5396, 0.0
  %v5990 = vmax.f32 %v5565, 0.0
  %v5991 = vmax.f32 %v5734, 0.0
  %v5992 = vld [vmem:[%s6] sm:$0xff]
  %v5993 = vld [vmem:[%s6 + $0x8] sm:$0xff]
  %v5994 = vpack.c.bf16 %v5740, %v5736
  %v5995 = vpack.c.bf16 %v5741, %v5737
  %v5996 = vpack.c.bf16 %v5742, %v5738
  %v5997 = vpack.c.bf16 %v5743, %v5739
  %v5998 = vpack.c.bf16 %v5748, %v5744
  %v5999 = vpack.c.bf16 %v5749, %v5745
  %v6000 = vpack.c.bf16 %v5750, %v5746
  %v6001 = vpack.c.bf16 %v5751, %v5747
  %v6002 = vpack.c.bf16 %v5756, %v5752
  %v6003 = vpack.c.bf16 %v5757, %v5753
  %v6004 = vpack.c.bf16 %v5758, %v5754
  %v6005 = vpack.c.bf16 %v5759, %v5755
  %v6006 = vpack.c.bf16 %v5764, %v5760
  %v6007 = vpack.c.bf16 %v5765, %v5761
  %v6008 = vpack.c.bf16 %v5766, %v5762
  %v6009 = vpack.c.bf16 %v5767, %v5763
  %v6010 = vpack.c.bf16 %v5772, %v5768
  %v6011 = vpack.c.bf16 %v5773, %v5769
  %v6012 = vpack.c.bf16 %v5774, %v5770
  %v6013 = vpack.c.bf16 %v5775, %v5771
  %v6014 = vpack.c.bf16 %v5780, %v5776
  %v6015 = vpack.c.bf16 %v5781, %v5777
  %v6016 = vpack.c.bf16 %v5782, %v5778
  %v6017 = vpack.c.bf16 %v5783, %v5779
  %v6018 = vpack.c.bf16 %v5788, %v5784
  %v6019 = vpack.c.bf16 %v5789, %v5785
  %v6020 = vpack.c.bf16 %v5790, %v5786
  %v6021 = vpack.c.bf16 %v5791, %v5787
  %v6022 = vpack.c.bf16 %v5796, %v5792
  %v6023 = vpack.c.bf16 %v5797, %v5793
  %v6024 = vpack.c.bf16 %v5798, %v5794
  %v6025 = vpack.c.bf16 %v5799, %v5795
  %v6026 = vpack.c.bf16 %v5804, %v5800
  %v6027 = vpack.c.bf16 %v5805, %v5801
  %v6028 = vpack.c.bf16 %v5806, %v5802
  %v6029 = vpack.c.bf16 %v5807, %v5803
  %v6030 = vpack.c.bf16 %v5812, %v5808
  %v6031 = vpack.c.bf16 %v5813, %v5809
  %v6032 = vpack.c.bf16 %v5814, %v5810
  %v6033 = vpack.c.bf16 %v5815, %v5811
  %v6034 = vpack.c.bf16 %v5820, %v5816
  %v6035 = vpack.c.bf16 %v5821, %v5817
  %v6036 = vpack.c.bf16 %v5822, %v5818
  %v6037 = vpack.c.bf16 %v5823, %v5819
  %v6038 = vpack.c.bf16 %v5828, %v5824
  %v6039 = vpack.c.bf16 %v5829, %v5825
  %v6040 = vpack.c.bf16 %v5830, %v5826
  %v6041 = vpack.c.bf16 %v5831, %v5827
  %v6042 = vpack.c.bf16 %v5836, %v5832
  %v6043 = vpack.c.bf16 %v5837, %v5833
  %v6044 = vpack.c.bf16 %v5838, %v5834
  %v6045 = vpack.c.bf16 %v5839, %v5835
  %v6046 = vpack.c.bf16 %v5844, %v5840
  %v6047 = vpack.c.bf16 %v5845, %v5841
  %v6048 = vpack.c.bf16 %v5846, %v5842
  %v6049 = vpack.c.bf16 %v5847, %v5843
  %v6050 = vpack.c.bf16 %v5852, %v5848
  %v6051 = vpack.c.bf16 %v5853, %v5849
  %v6052 = vpack.c.bf16 %v5854, %v5850
  %v6053 = vpack.c.bf16 %v5855, %v5851
  %v6054 = vpack.c.bf16 %v5860, %v5856
  %v6055 = vpack.c.bf16 %v5861, %v5857
  %v6056 = vpack.c.bf16 %v5862, %v5858
  %v6057 = vpack.c.bf16 %v5863, %v5859
  %v6058 = vpack.c.bf16 %v5868, %v5864
  %v6059 = vpack.c.bf16 %v5869, %v5865
  %v6060 = vpack.c.bf16 %v5870, %v5866
  %v6061 = vpack.c.bf16 %v5871, %v5867
  %v6062 = vpack.c.bf16 %v5876, %v5872
  %v6063 = vpack.c.bf16 %v5877, %v5873
  %v6064 = vpack.c.bf16 %v5878, %v5874
  %v6065 = vpack.c.bf16 %v5879, %v5875
  %v6066 = vpack.c.bf16 %v5884, %v5880
  %v6067 = vpack.c.bf16 %v5885, %v5881
  %v6068 = vpack.c.bf16 %v5886, %v5882
  %v6069 = vpack.c.bf16 %v5887, %v5883
  %v6070 = vpack.c.bf16 %v5892, %v5888
  %v6071 = vpack.c.bf16 %v5893, %v5889
  %v6072 = vpack.c.bf16 %v5894, %v5890
  %v6073 = vpack.c.bf16 %v5895, %v5891
  %v6074 = vpack.c.bf16 %v5900, %v5896
  %v6075 = vpack.c.bf16 %v5901, %v5897
  %v6076 = vpack.c.bf16 %v5902, %v5898
  %v6077 = vpack.c.bf16 %v5903, %v5899
  %v6078 = vpack.c.bf16 %v5908, %v5904
  %v6079 = vpack.c.bf16 %v5909, %v5905
  %v6080 = vpack.c.bf16 %v5910, %v5906
  %v6081 = vpack.c.bf16 %v5911, %v5907
  %v6082 = vpack.c.bf16 %v5916, %v5912
  %v6083 = vpack.c.bf16 %v5917, %v5913
  %v6084 = vpack.c.bf16 %v5918, %v5914
  %v6085 = vpack.c.bf16 %v5919, %v5915
  %v6086 = vpack.c.bf16 %v5924, %v5920
  %v6087 = vpack.c.bf16 %v5925, %v5921
  %v6088 = vpack.c.bf16 %v5926, %v5922
  %v6089 = vpack.c.bf16 %v5927, %v5923
  %v6090 = vpack.c.bf16 %v5932, %v5928
  %v6091 = vpack.c.bf16 %v5933, %v5929
  %v6092 = vpack.c.bf16 %v5934, %v5930
  %v6093 = vpack.c.bf16 %v5935, %v5931
  %v6094 = vpack.c.bf16 %v5940, %v5936
  %v6095 = vpack.c.bf16 %v5941, %v5937
  %v6096 = vpack.c.bf16 %v5942, %v5938
  %v6097 = vpack.c.bf16 %v5943, %v5939
  %v6098 = vpack.c.bf16 %v5948, %v5944
  %v6099 = vpack.c.bf16 %v5949, %v5945
  %v6100 = vpack.c.bf16 %v5950, %v5946
  %v6101 = vpack.c.bf16 %v5951, %v5947
  %v6102 = vpack.c.bf16 %v5956, %v5952
  %v6103 = vpack.c.bf16 %v5957, %v5953
  %v6104 = vpack.c.bf16 %v5958, %v5954
  %v6105 = vpack.c.bf16 %v5959, %v5955
  %v6106 = vpack.c.bf16 %v5964, %v5960
  %v6107 = vpack.c.bf16 %v5965, %v5961
  %v6108 = vpack.c.bf16 %v5966, %v5962
  %v6109 = vpack.c.bf16 %v5967, %v5963
  %v6110 = vpack.c.bf16 %v5972, %v5968
  %v6111 = vpack.c.bf16 %v5973, %v5969
  %v6112 = vpack.c.bf16 %v5974, %v5970
  %v6113 = vpack.c.bf16 %v5975, %v5971
  %v6114 = vpack.c.bf16 %v5980, %v5976
  %v6115 = vpack.c.bf16 %v5981, %v5977
  %v6116 = vpack.c.bf16 %v5982, %v5978
  %v6117 = vpack.c.bf16 %v5983, %v5979
  %v6118 = vpack.c.bf16 %v5988, %v5984
  %v6119 = vpack.c.bf16 %v5989, %v5985
  %v6120 = vpack.c.bf16 %v5990, %v5986
  %v6121 = vpack.c.bf16 %v5991, %v5987
  %v6122 = vld [vmem:[%s7] sm:$0xff]
  %6124 = vset.pattern.permute.xlu0 0
  %6125 = vperm.xlu0 %6124, %v6122
  %v6126 = vpop.permute.xlu0 %6125
  %v6130 = vunpack.c.l.b16 %v5992
  %v6131 = vunpack.c.h.b16 %v5992
  %v6132 = vunpack.c.l.b16 %v5993
  %v6133 = vunpack.c.h.b16 %v5993
  %v6134 = vpack.c.b16 %v6130, %v6130
  %v6135 = vpack.c.b16 %v6131, %v6131
  %v6136 = vpack.c.b16 %v6132, %v6132
  %v6137 = vpack.c.b16 %v6133, %v6133
  %6142 = vmatpush.bf16.msra.mxu0 %v6022
  %6143 = vmatpush.bf16.msra.mxu0 %v6018
  %6144 = vmatpush.bf16.msra.mxu0 %v6014
  %6145 = vmatpush.bf16.msra.mxu0 %v6010
  %6146 = vmatpush.bf16.msra.mxu0 %v6006
  %6147 = vmatpush.bf16.msra.mxu0 %v6002
  %6148 = vmatpush.bf16.msra.mxu0 %v5998
  %6149 = vmatpush.bf16.msra.mxu0 %v5994
  %6150 = vmatmul.bf16.gmra.mxu0 %v6134
  %v6151 = vpop.f32.mrf.mxu0
  %v6152 = vadd.f32 %v6126, %v6151
  %v6153 = vpop.f32.mrf.mxu0
  %6154 = vdwg.mxu0
  %6155 = vmatpush.bf16.msra.mxu0 %v6054
  %6156 = vmatpush.bf16.msra.mxu0 %v6050
  %6157 = vmatpush.bf16.msra.mxu0 %v6046
  %6158 = vmatpush.bf16.msra.mxu0 %v6042
  %6159 = vmatpush.bf16.msra.mxu0 %v6038
  %6160 = vmatpush.bf16.msra.mxu0 %v6034
  %6161 = vmatpush.bf16.msra.mxu0 %v6030
  %6162 = vmatpush.bf16.msra.mxu0 %v6026
  %6163 = vmatmul.bf16.gmra.mxu0 %v6135
  %v6164 = vpop.f32.mrf.mxu0
  %v6165 = vadd.f32 %v6152, %v6164
  %v6166 = vpop.f32.mrf.mxu0
  %6167 = vdwg.mxu0
  %6168 = vmatpush.bf16.msra.mxu0 %v6086
  %6169 = vmatpush.bf16.msra.mxu0 %v6082
  %6170 = vmatpush.bf16.msra.mxu0 %v6078
  %6171 = vmatpush.bf16.msra.mxu0 %v6074
  %6172 = vmatpush.bf16.msra.mxu0 %v6070
  %6173 = vmatpush.bf16.msra.mxu0 %v6066
  %6174 = vmatpush.bf16.msra.mxu0 %v6062
  %6175 = vmatpush.bf16.msra.mxu0 %v6058
  %6176 = vmatmul.bf16.gmra.mxu0 %v6136
  %v6177 = vpop.f32.mrf.mxu0
  %v6178 = vadd.f32 %v6165, %v6177
  %v6179 = vpop.f32.mrf.mxu0
  %6180 = vdwg.mxu0
  %6181 = vmatpush.bf16.msra.mxu0 %v6118
  %6182 = vmatpush.bf16.msra.mxu0 %v6114
  %6183 = vmatpush.bf16.msra.mxu0 %v6110
  %6184 = vmatpush.bf16.msra.mxu0 %v6106
  %6185 = vmatpush.bf16.msra.mxu0 %v6102
  %6186 = vmatpush.bf16.msra.mxu0 %v6098
  %6187 = vmatpush.bf16.msra.mxu0 %v6094
  %6188 = vmatpush.bf16.msra.mxu0 %v6090
  %6189 = vmatmul.bf16.gmra.mxu0 %v6137
  %v6190 = vpop.f32.mrf.mxu0
  %v6191 = vadd.f32 %v6178, %v6190
  %v6192 = vpop.f32.mrf.mxu0
  %6193 = vdwg.mxu0
  %6194 = vmatpush.bf16.msra.mxu0 %v6023
  %6195 = vmatpush.bf16.msra.mxu0 %v6019
  %6196 = vmatpush.bf16.msra.mxu0 %v6015
  %6197 = vmatpush.bf16.msra.mxu0 %v6011
  %6198 = vmatpush.bf16.msra.mxu0 %v6007
  %6199 = vmatpush.bf16.msra.mxu0 %v6003
  %6200 = vmatpush.bf16.msra.mxu0 %v5999
  %6201 = vmatpush.bf16.msra.mxu0 %v5995
  %6202 = vmatmul.bf16.gmra.mxu0 %v6134
  %v6203 = vpop.f32.mrf.mxu0
  %v6204 = vadd.f32 %v6126, %v6203
  %v6205 = vpop.f32.mrf.mxu0
  %6206 = vdwg.mxu0
  %6207 = vmatpush.bf16.msra.mxu0 %v6055
  %6208 = vmatpush.bf16.msra.mxu0 %v6051
  %6209 = vmatpush.bf16.msra.mxu0 %v6047
  %6210 = vmatpush.bf16.msra.mxu0 %v6043
  %6211 = vmatpush.bf16.msra.mxu0 %v6039
  %6212 = vmatpush.bf16.msra.mxu0 %v6035
  %6213 = vmatpush.bf16.msra.mxu0 %v6031
  %6214 = vmatpush.bf16.msra.mxu0 %v6027
  %6215 = vmatmul.bf16.gmra.mxu0 %v6135
  %v6216 = vpop.f32.mrf.mxu0
  %v6217 = vadd.f32 %v6204, %v6216
  %v6218 = vpop.f32.mrf.mxu0
  %6219 = vdwg.mxu0
  %6220 = vmatpush.bf16.msra.mxu0 %v6087
  %6221 = vmatpush.bf16.msra.mxu0 %v6083
  %6222 = vmatpush.bf16.msra.mxu0 %v6079
  %6223 = vmatpush.bf16.msra.mxu0 %v6075
  %6224 = vmatpush.bf16.msra.mxu0 %v6071
  %6225 = vmatpush.bf16.msra.mxu0 %v6067
  %6226 = vmatpush.bf16.msra.mxu0 %v6063
  %6227 = vmatpush.bf16.msra.mxu0 %v6059
  %6228 = vmatmul.bf16.gmra.mxu0 %v6136
  %v6229 = vpop.f32.mrf.mxu0
  %v6230 = vadd.f32 %v6217, %v6229
  %v6231 = vpop.f32.mrf.mxu0
  %6232 = vdwg.mxu0
  %6233 = vmatpush.bf16.msra.mxu0 %v6119
  %6234 = vmatpush.bf16.msra.mxu0 %v6115
  %6235 = vmatpush.bf16.msra.mxu0 %v6111
  %6236 = vmatpush.bf16.msra.mxu0 %v6107
  %6237 = vmatpush.bf16.msra.mxu0 %v6103
  %6238 = vmatpush.bf16.msra.mxu0 %v6099
  %6239 = vmatpush.bf16.msra.mxu0 %v6095
  %6240 = vmatpush.bf16.msra.mxu0 %v6091
  %6241 = vmatmul.bf16.gmra.mxu0 %v6137
  %v6242 = vpop.f32.mrf.mxu0
  %v6243 = vadd.f32 %v6230, %v6242
  %v6244 = vpop.f32.mrf.mxu0
  %6245 = vdwg.mxu0
  %6246 = vmatpush.bf16.msra.mxu0 %v6024
  %6247 = vmatpush.bf16.msra.mxu0 %v6020
  %6248 = vmatpush.bf16.msra.mxu0 %v6016
  %6249 = vmatpush.bf16.msra.mxu0 %v6012
  %6250 = vmatpush.bf16.msra.mxu0 %v6008
  %6251 = vmatpush.bf16.msra.mxu0 %v6004
  %6252 = vmatpush.bf16.msra.mxu0 %v6000
  %6253 = vmatpush.bf16.msra.mxu0 %v5996
  %6254 = vmatmul.bf16.gmra.mxu0 %v6134
  %v6255 = vpop.f32.mrf.mxu0
  %v6256 = vadd.f32 %v6126, %v6255
  %v6257 = vpop.f32.mrf.mxu0
  %6258 = vdwg.mxu0
  %6259 = vmatpush.bf16.msra.mxu0 %v6056
  %6260 = vmatpush.bf16.msra.mxu0 %v6052
  %6261 = vmatpush.bf16.msra.mxu0 %v6048
  %6262 = vmatpush.bf16.msra.mxu0 %v6044
  %6263 = vmatpush.bf16.msra.mxu0 %v6040
  %6264 = vmatpush.bf16.msra.mxu0 %v6036
  %6265 = vmatpush.bf16.msra.mxu0 %v6032
  %6266 = vmatpush.bf16.msra.mxu0 %v6028
  %6267 = vmatmul.bf16.gmra.mxu0 %v6135
  %v6268 = vpop.f32.mrf.mxu0
  %v6269 = vadd.f32 %v6256, %v6268
  %v6270 = vpop.f32.mrf.mxu0
  %6271 = vdwg.mxu0
  %6272 = vmatpush.bf16.msra.mxu0 %v6088
  %6273 = vmatpush.bf16.msra.mxu0 %v6084
  %6274 = vmatpush.bf16.msra.mxu0 %v6080
  %6275 = vmatpush.bf16.msra.mxu0 %v6076
  %6276 = vmatpush.bf16.msra.mxu0 %v6072
  %6277 = vmatpush.bf16.msra.mxu0 %v6068
  %6278 = vmatpush.bf16.msra.mxu0 %v6064
  %6279 = vmatpush.bf16.msra.mxu0 %v6060
  %6280 = vmatmul.bf16.gmra.mxu0 %v6136
  %v6281 = vpop.f32.mrf.mxu0
  %v6282 = vadd.f32 %v6269, %v6281
  %v6283 = vpop.f32.mrf.mxu0
  %6284 = vdwg.mxu0
  %6285 = vmatpush.bf16.msra.mxu0 %v6120
  %6286 = vmatpush.bf16.msra.mxu0 %v6116
  %6287 = vmatpush.bf16.msra.mxu0 %v6112
  %6288 = vmatpush.bf16.msra.mxu0 %v6108
  %6289 = vmatpush.bf16.msra.mxu0 %v6104
  %6290 = vmatpush.bf16.msra.mxu0 %v6100
  %6291 = vmatpush.bf16.msra.mxu0 %v6096
  %6292 = vmatpush.bf16.msra.mxu0 %v6092
  %6293 = vmatmul.bf16.gmra.mxu0 %v6137
  %v6294 = vpop.f32.mrf.mxu0
  %v6295 = vadd.f32 %v6282, %v6294
  %v6296 = vpop.f32.mrf.mxu0
  %6297 = vdwg.mxu0
  %6298 = vmatpush.bf16.msra.mxu0 %v6025
  %6299 = vmatpush.bf16.msra.mxu0 %v6021
  %6300 = vmatpush.bf16.msra.mxu0 %v6017
  %6301 = vmatpush.bf16.msra.mxu0 %v6013
  %6302 = vmatpush.bf16.msra.mxu0 %v6009
  %6303 = vmatpush.bf16.msra.mxu0 %v6005
  %6304 = vmatpush.bf16.msra.mxu0 %v6001
  %6305 = vmatpush.bf16.msra.mxu0 %v5997
  %6306 = vmatmul.bf16.gmra.mxu0 %v6134
  %v6307 = vpop.f32.mrf.mxu0
  %v6308 = vadd.f32 %v6126, %v6307
  %v6309 = vpop.f32.mrf.mxu0
  %6310 = vdwg.mxu0
  %6311 = vmatpush.bf16.msra.mxu0 %v6057
  %6312 = vmatpush.bf16.msra.mxu0 %v6053
  %6313 = vmatpush.bf16.msra.mxu0 %v6049
  %6314 = vmatpush.bf16.msra.mxu0 %v6045
  %6315 = vmatpush.bf16.msra.mxu0 %v6041
  %6316 = vmatpush.bf16.msra.mxu0 %v6037
  %6317 = vmatpush.bf16.msra.mxu0 %v6033
  %6318 = vmatpush.bf16.msra.mxu0 %v6029
  %6319 = vmatmul.bf16.gmra.mxu0 %v6135
  %v6320 = vpop.f32.mrf.mxu0
  %v6321 = vadd.f32 %v6308, %v6320
  %v6322 = vpop.f32.mrf.mxu0
  %6323 = vdwg.mxu0
  %6324 = vmatpush.bf16.msra.mxu0 %v6089
  %6325 = vmatpush.bf16.msra.mxu0 %v6085
  %6326 = vmatpush.bf16.msra.mxu0 %v6081
  %6327 = vmatpush.bf16.msra.mxu0 %v6077
  %6328 = vmatpush.bf16.msra.mxu0 %v6073
  %6329 = vmatpush.bf16.msra.mxu0 %v6069
  %6330 = vmatpush.bf16.msra.mxu0 %v6065
  %6331 = vmatpush.bf16.msra.mxu0 %v6061
  %6332 = vmatmul.bf16.gmra.mxu0 %v6136
  %v6333 = vpop.f32.mrf.mxu0
  %v6334 = vadd.f32 %v6321, %v6333
  %v6335 = vpop.f32.mrf.mxu0
  %6336 = vdwg.mxu0
  %6337 = vmatpush.bf16.msra.mxu0 %v6121
  %6338 = vmatpush.bf16.msra.mxu0 %v6117
  %6339 = vmatpush.bf16.msra.mxu0 %v6113
  %6340 = vmatpush.bf16.msra.mxu0 %v6109
  %6341 = vmatpush.bf16.msra.mxu0 %v6105
  %6342 = vmatpush.bf16.msra.mxu0 %v6101
  %6343 = vmatpush.bf16.msra.mxu0 %v6097
  %6344 = vmatpush.bf16.msra.mxu0 %v6093
  %6345 = vmatmul.bf16.gmra.mxu0 %v6137
  %v6346 = vpop.f32.mrf.mxu0
  %v6347 = vadd.f32 %v6334, %v6346
  %v6348 = vpop.f32.mrf.mxu0
  %6349 = vdwg.mxu0
  %6350 = vst [vmem:[%s8] sm:$0xff] %v6191
  %6351 = vst [vmem:[%s8 + $0x8] sm:$0xff] %v6243
  %6352 = vst [vmem:[%s8 + $0x10] sm:$0xff] %v6295
  %6353 = vst [vmem:[%s8 + $0x18] sm:$0xff] %v6347
  // Predicated region
  $region34: #{_lambda_.1} parent=0 // pred_check
    _
  $region35: #{_lambda_.1} parent=0 // pred_check_branch
    %6355 = sbr.rel (0) target = $region37
  $region36: #{_lambda_.1} parent=0 // pred_region
    _
  $region37: #{_lambda_.1} parent=0 // pred_fallthru
    _
  // Predicated region
  $region38: #{_lambda_.1} parent=0 // pred_check
    _
  $region39: #{_lambda_.1} parent=0 // pred_check_branch
    %6357 = sbr.rel (0) target = $region41
  $region40: #{_lambda_.1} parent=0 // pred_region
    _
  $region41: #{_lambda_.1} parent=0 // pred_fallthru
    _

</llo_original>
